<compile_context>
chip_gen: v6e
topology: v6e:2x2x1
jax: 0.10.0
libtpu: 0.0.40
codegen_flags: <defaults>
</compile_context>

<pallas_src>
import math

import jax
import jax.numpy as jnp
import numpy as np
from jax.experimental import pallas as pl
from jax.experimental.pallas import tpu as pltpu


def _make_kernel(S, S_enc, H, n_heads, d_k, eps):
    def kernel(x_ref, enc_ref, sbias_ref, ebias_ref,
               g1_ref, be1_ref, wqkv_ref, bqkv_ref, wo1_ref, bo1_ref,
               g2_ref, be2_ref, wq2_ref, bq2_ref, wkv2_ref, bkv2_ref,
               wo2_ref, bo2_ref,
               g3_ref, be3_ref, wf1_ref, bf1_ref, wf2_ref, bf2_ref,
               out_ref):
        f32 = jnp.float32
        x = x_ref[...]          # (S, H)      one batch element per grid step
        enc = enc_ref[...]      # (S_enc, H)

        def layer_norm(v, g, b):
            # gamma * (v - mean) / (std + eps) + beta   (population std, eps on std)
            mean = jnp.mean(v, axis=-1, keepdims=True)
            var = jnp.mean((v - mean) ** 2, axis=-1, keepdims=True)
            inv = pl.reciprocal(jnp.sqrt(var) + eps, approx=True)   # EUP, not VALU
            return g * (v - mean) * inv + b

        def split_heads(m):
            # (R, H) -> (n_heads, R, d_k): static lane slices + leading-dim concat
            # (no minor-dim reshape of activations).
            return jnp.concatenate(
                [m[None, :, h * d_k:(h + 1) * d_k] for h in range(n_heads)],
                axis=0)

        def attention(q, k, v, bias, wo, bo):
            # q: (Sq, H); k, v: (Sk, H); bias: (Sq, Sk) additive (-1e9 at masked).
            qh = split_heads(q)                                   # (h, Sq, d_k)
            kh = split_heads(k)                                   # (h, Sk, d_k)
            vh = split_heads(v)
            # scores already scaled (1/sqrt(d_k) folded into Wq); bias broadcasts over h
            s = jnp.einsum("hqd,hkd->hqk", qh, kh,
                           preferred_element_type=f32) + bias
            m = jnp.max(s, axis=-1, keepdims=True)
            e = jnp.exp(s - m)
            p = e * pl.reciprocal(jnp.sum(e, axis=-1, keepdims=True), approx=True)
            o = jnp.einsum("hqk,hkd->hqd", p, vh,
                           preferred_element_type=f32)            # (h, Sq, d_k)
            # head concat (lane dim) + single output-projection matmul
            o = jnp.concatenate([o[h] for h in range(n_heads)], axis=-1)  # (Sq, H)
            return jnp.dot(o, wo, preferred_element_type=f32) + bo

        # ---- sublayer 0: x + self_attention(LN1(x), LN1(x), LN1(x)) ----
        y1 = layer_norm(x, g1_ref[...], be1_ref[...])
        qkv = jnp.dot(y1, wqkv_ref[...], preferred_element_type=f32) + bqkv_ref[...]
        x1 = x + attention(qkv[:, :H], qkv[:, H:2 * H], qkv[:, 2 * H:],
                           sbias_ref[...], wo1_ref[...], bo1_ref[...])

        # ---- sublayer 1: x1 + cross_attention(LN2(x1), enc, enc) ----
        y2 = layer_norm(x1, g2_ref[...], be2_ref[...])
        q2 = jnp.dot(y2, wq2_ref[...], preferred_element_type=f32) + bq2_ref[...]
        kv2 = jnp.dot(enc, wkv2_ref[...], preferred_element_type=f32) + bkv2_ref[...]
        x2 = x1 + attention(q2, kv2[:, :H], kv2[:, H:],
                            ebias_ref[...], wo2_ref[...], bo2_ref[...])

        # ---- sublayer 2: x2 + FFN(LN3(x2)) ----
        y3 = layer_norm(x2, g3_ref[...], be3_ref[...])
        hmid = jnp.dot(y3, wf1_ref[...], preferred_element_type=f32) + bf1_ref[...]
        hmid = jnp.maximum(hmid, 0.0)                              # ReLU (clamp min=0)
        ff = jnp.dot(hmid, wf2_ref[...], preferred_element_type=f32) + bf2_ref[...]

        out_ref[...] = x2 + ff                                     # (S, H) lane-dense slab

    return kernel


def decoder_block_pallas(x, self_mask, enc_output, enc_mask, params, *,
                         n_heads, eps=1e-6):
    (g1, be1, wq, bq, wk, bk, wv, bv, wo, bo,
     g2, be2, wq2, bq2, wk2, bk2, wv2, bv2, wo2, bo2,
     g3, be3, w1, bf1, w2, bf2) = params

    B, S, H = x.shape
    S_enc = enc_output.shape[1]
    d_ff = w1.shape[1]
    d_k = H // n_heads
    scale = 1.0 / math.sqrt(d_k)
    f32 = jnp.float32

    # Fused projection weights (2-D, lane-dense); 1/sqrt(d_k) folded into Q weights.
    wqkv = jnp.concatenate([wq * scale, wk, wv], axis=1).astype(f32)      # (H, 3H)
    bqkv = jnp.concatenate([bq * scale, bk, bv]).reshape(1, 3 * H).astype(f32)
    wq2s = (wq2 * scale).astype(f32)                                      # (H, H)
    bq2s = (bq2 * scale).reshape(1, H).astype(f32)
    wkv2 = jnp.concatenate([wk2, wv2], axis=1).astype(f32)                # (H, 2H)
    bkv2 = jnp.concatenate([bk2, bv2]).reshape(1, 2 * H).astype(f32)

    # Additive mask biases hoisted out of the kernel (masked_fill(mask==0, -1e9)).
    sbias = jnp.where(self_mask == 0, f32(-1e9), f32(0.0)).astype(f32)    # (B, S, S)
    ebias = jnp.where(enc_mask == 0, f32(-1e9), f32(0.0)).astype(f32)     # (B, S, S_enc)

    kparams = (
        g1.reshape(1, H).astype(f32), be1.reshape(1, H).astype(f32),
        wqkv, bqkv, wo.astype(f32), bo.reshape(1, H).astype(f32),
        g2.reshape(1, H).astype(f32), be2.reshape(1, H).astype(f32),
        wq2s, bq2s, wkv2, bkv2, wo2.astype(f32), bo2.reshape(1, H).astype(f32),
        g3.reshape(1, H).astype(f32), be3.reshape(1, H).astype(f32),
        w1.astype(f32), bf1.reshape(1, d_ff).astype(f32),
        w2.astype(f32), bf2.reshape(1, H).astype(f32),
    )

    kernel = _make_kernel(S, S_enc, H, n_heads, d_k, eps)

    # Per-batch inputs: grid=(B,), squeeze the batch dim out of the kernel view.
    def batch_spec(shape):
        nd = len(shape)
        return pl.BlockSpec((None,) + tuple(shape),
                            lambda b, nd=nd: (b,) + (0,) * nd)

    # Weights: full block, constant index_map -> stays resident across grid steps.
    def weight_spec(a):
        nd = a.ndim
        return pl.BlockSpec(a.shape, lambda b, nd=nd: (0,) * nd)

    in_specs = ([batch_spec((S, H)), batch_spec((S_enc, H)),
                 batch_spec((S, S)), batch_spec((S, S_enc))]
                + [weight_spec(a) for a in kparams])
    out_specs = pl.BlockSpec((S, H), lambda b: (b, 0))   # lane-dense (B*S, H) slab

    # Advisory cost estimate for the XLA scheduler.
    flops_per_b = (
        2 * S * H * (3 * H)                      # fused QKV projection
        + 2 * n_heads * S * S * d_k * 2          # self-attn scores + PV
        + 2 * S * H * H                          # self-attn output projection
        + 2 * S * H * H                          # cross Q projection
        + 2 * S_enc * H * (2 * H)                # cross KV projection
        + 2 * n_heads * S * S_enc * d_k * 2      # cross-attn scores + PV
        + 2 * S * H * H                          # cross-attn output projection
        + 2 * S * H * d_ff + 2 * S * d_ff * H    # FFN
    )
    trans_per_b = n_heads * S * (S + S_enc) + 6 * S   # exp + LN rsqrt/recip approx
    inputs = (x.astype(f32), enc_output.astype(f32), sbias, ebias) + kparams
    bytes_accessed = sum(int(np.prod(a.shape)) * 4 for a in inputs) + B * S * H * 4
    cost = pl.CostEstimate(flops=B * flops_per_b,
                           transcendentals=B * trans_per_b,
                           bytes_accessed=bytes_accessed)

    out_flat = pl.pallas_call(
        kernel,
        out_shape=jax.ShapeDtypeStruct((B * S, H), f32),
        grid_spec=pltpu.PrefetchScalarGridSpec(
            num_scalar_prefetch=0,
            grid=(B,),                       # one batch per step; megacore on v7x
            in_specs=in_specs,
            out_specs=out_specs,
        ),
        compiler_params=pltpu.CompilerParams(
            dimension_semantics=("parallel",)),
        cost_estimate=cost,
    )(*inputs)

    return out_flat.reshape(B, S, H)


def decoder_block_ref(x, self_mask, enc_output, enc_mask, params, *,
                      n_heads, eps=1e-6):
    """Pure-JAX reference identical to the PyTorch DecoderBlock forward (eval mode)."""
    (g1, be1, wq, bq, wk, bk, wv, bv, wo, bo,
     g2, be2, wq2, bq2, wk2, bk2, wv2, bv2, wo2, bo2,
     g3, be3, w1, bf1, w2, bf2) = params
    H = x.shape[-1]
    d_k = H // n_heads

    def ln(v, g, b):
        mean = jnp.mean(v, axis=-1, keepdims=True)
        std = jnp.sqrt(jnp.mean((v - mean) ** 2, axis=-1, keepdims=True))
        return g * (v - mean) / (std + eps) + b

    def mha(q_in, kv_in, mask, wq_, bq_, wk_, bk_, wv_, bv_, wo_, bo_):
        Bq, Sq, _ = q_in.shape
        Sk = kv_in.shape[1]
        q = (q_in @ wq_ + bq_).reshape(Bq, Sq, n_heads, d_k).transpose(0, 2, 1, 3)
        k = (kv_in @ wk_ + bk_).reshape(Bq, Sk, n_heads, d_k).transpose(0, 2, 1, 3)
        v = (kv_in @ wv_ + bv_).reshape(Bq, Sk, n_heads, d_k).transpose(0, 2, 1, 3)
        s = jnp.einsum("bhqd,bhkd->bhqk", q, k) / math.sqrt(d_k)
        s = jnp.where(mask[:, None, :, :] == 0, -1e9, s)
        p = jax.nn.softmax(s, axis=-1)
        a = jnp.einsum("bhqk,bhkd->bhqd", p, v).transpose(0, 2, 1, 3).reshape(Bq, Sq, H)
        return a @ wo_ + bo_

    y1 = ln(x, g1, be1)
    x1 = x + mha(y1, y1, self_mask, wq, bq, wk, bk, wv, bv, wo, bo)
    y2 = ln(x1, g2, be2)
    x2 = x1 + mha(y2, enc_output, enc_mask, wq2, bq2, wk2, bk2, wv2, bv2, wo2, bo2)
    y3 = ln(x2, g3, be3)
    ff = jnp.maximum(y3 @ w1 + bf1, 0.0) @ w2 + bf2
    return x2 + ff


if __name__ == "__main__":
    B, S, S_ENC, H = 2, 8, 16, 32
    N_HEADS, D_FF = 4, 64

    key = jax.random.PRNGKey(0)
    ks = jax.random.split(key, 24)

    def w(k, shape, scale=0.05):
        return (scale * jax.random.normal(k, shape)).astype(jnp.float32)

    g1, be1 = jnp.ones((H,), jnp.float32), jnp.zeros((H,), jnp.float32)
    wq, bq = w(ks[0], (H, H)), w(ks[1], (H,))
    wk, bk = w(ks[2], (H, H)), w(ks[3], (H,))
    wv, bv = w(ks[4], (H, H)), w(ks[5], (H,))
    wo, bo = w(ks[6], (H, H)), w(ks[7], (H,))
    g2, be2 = jnp.ones((H,), jnp.float32), jnp.zeros((H,), jnp.float32)
    wq2, bq2 = w(ks[8], (H, H)), w(ks[9], (H,))
    wk2, bk2 = w(ks[10], (H, H)), w(ks[11], (H,))
    wv2, bv2 = w(ks[12], (H, H)), w(ks[13], (H,))
    wo2, bo2 = w(ks[14], (H, H)), w(ks[15], (H,))
    g3, be3 = jnp.ones((H,), jnp.float32), jnp.zeros((H,), jnp.float32)
    w1, bf1 = w(ks[16], (H, D_FF)), w(ks[17], (D_FF,))
    w2, bf2 = w(ks[18], (D_FF, H)), w(ks[19], (H,))

    params = (g1, be1, wq, bq, wk, bk, wv, bv, wo, bo,
              g2, be2, wq2, bq2, wk2, bk2, wv2, bv2, wo2, bo2,
              g3, be3, w1, bf1, w2, bf2)

    x = jax.random.normal(ks[20], (B, S, H), jnp.float32)
    enc = jax.random.normal(ks[21], (B, S_ENC, H), jnp.float32)

    # Decoder self-attention mask: causal, shared across batch -> (B, S, S)
    causal = (jnp.arange(S)[:, None] >= jnp.arange(S)[None, :]).astype(jnp.float32)
    self_mask = jnp.broadcast_to(causal[None], (B, S, S))
    # Encoder padding mask: batch 1 has the last 4 encoder positions masked -> (B, S, S_ENC)
    enc_lens = jnp.array([S_ENC, S_ENC - 4])
    enc_key_mask = (jnp.arange(S_ENC)[None, :] < enc_lens[:, None]).astype(jnp.float32)
    enc_mask = jnp.broadcast_to(enc_key_mask[:, None, :], (B, S, S_ENC))

    out = decoder_block_pallas(x, self_mask, enc, enc_mask, params, n_heads=N_HEADS)
    out = jax.block_until_ready(out)

    ref = decoder_block_ref(x, self_mask, enc, enc_mask, params, n_heads=N_HEADS)
    # Tolerance looser than pure f32 because the kernel uses the EUP approximate
    # reciprocal (pl.reciprocal(approx=True)) for LayerNorm / softmax denominators.
    np.testing.assert_allclose(np.asarray(out), np.asarray(ref), rtol=5e-3, atol=5e-3)

    print("KERNEL_OK")
</pallas_src>

<mosaic_0001>
module attributes {stable_mosaic.version = 11 : i64} {
  func.func @kernel(%arg0: i32, %arg1: memref<1x8x32xf32, #tpu.memory_space<vmem>>, %arg2: memref<1x16x32xf32, #tpu.memory_space<vmem>>, %arg3: memref<1x8x8xf32, #tpu.memory_space<vmem>>, %arg4: memref<1x8x16xf32, #tpu.memory_space<vmem>>, %arg5: memref<1x32xf32, #tpu.memory_space<vmem>>, %arg6: memref<1x32xf32, #tpu.memory_space<vmem>>, %arg7: memref<32x96xf32, #tpu.memory_space<vmem>>, %arg8: memref<1x96xf32, #tpu.memory_space<vmem>>, %arg9: memref<32x32xf32, #tpu.memory_space<vmem>>, %arg10: memref<1x32xf32, #tpu.memory_space<vmem>>, %arg11: memref<1x32xf32, #tpu.memory_space<vmem>>, %arg12: memref<1x32xf32, #tpu.memory_space<vmem>>, %arg13: memref<32x32xf32, #tpu.memory_space<vmem>>, %arg14: memref<1x32xf32, #tpu.memory_space<vmem>>, %arg15: memref<32x64xf32, #tpu.memory_space<vmem>>, %arg16: memref<1x64xf32, #tpu.memory_space<vmem>>, %arg17: memref<32x32xf32, #tpu.memory_space<vmem>>, %arg18: memref<1x32xf32, #tpu.memory_space<vmem>>, %arg19: memref<1x32xf32, #tpu.memory_space<vmem>>, %arg20: memref<1x32xf32, #tpu.memory_space<vmem>>, %arg21: memref<32x64xf32, #tpu.memory_space<vmem>>, %arg22: memref<1x64xf32, #tpu.memory_space<vmem>>, %arg23: memref<64x32xf32, #tpu.memory_space<vmem>>, %arg24: memref<1x32xf32, #tpu.memory_space<vmem>>, %arg25: memref<8x32xf32, #tpu.memory_space<vmem>>) attributes {dimension_semantics = [#tpu.dimension_semantics<parallel>], iteration_bounds = array<i64: 2>, scalar_prefetch = 0 : i64, scratch_operands = 0 : i64, tpu.core_type = #tpu.core_type<tc>, window_params = [{transform_indices = @transform_0, window_bounds = array<i64: 1, 8, 32>}, {transform_indices = @transform_1, window_bounds = array<i64: 1, 16, 32>}, {transform_indices = @transform_2, window_bounds = array<i64: 1, 8, 8>}, {transform_indices = @transform_3, window_bounds = array<i64: 1, 8, 16>}, {pipeline_mode = #tpu.pipeline_mode<synchronous>, transform_indices = @transform_4, window_bounds = array<i64: 1, 32>}, {pipeline_mode = #tpu.pipeline_mode<synchronous>, transform_indices = @transform_5, window_bounds = array<i64: 1, 32>}, {pipeline_mode = #tpu.pipeline_mode<synchronous>, transform_indices = @transform_6, window_bounds = array<i64: 32, 96>}, {pipeline_mode = #tpu.pipeline_mode<synchronous>, transform_indices = @transform_7, window_bounds = array<i64: 1, 96>}, {pipeline_mode = #tpu.pipeline_mode<synchronous>, transform_indices = @transform_8, window_bounds = array<i64: 32, 32>}, {pipeline_mode = #tpu.pipeline_mode<synchronous>, transform_indices = @transform_9, window_bounds = array<i64: 1, 32>}, {pipeline_mode = #tpu.pipeline_mode<synchronous>, transform_indices = @transform_10, window_bounds = array<i64: 1, 32>}, {pipeline_mode = #tpu.pipeline_mode<synchronous>, transform_indices = @transform_11, window_bounds = array<i64: 1, 32>}, {pipeline_mode = #tpu.pipeline_mode<synchronous>, transform_indices = @transform_12, window_bounds = array<i64: 32, 32>}, {pipeline_mode = #tpu.pipeline_mode<synchronous>, transform_indices = @transform_13, window_bounds = array<i64: 1, 32>}, {pipeline_mode = #tpu.pipeline_mode<synchronous>, transform_indices = @transform_14, window_bounds = array<i64: 32, 64>}, {pipeline_mode = #tpu.pipeline_mode<synchronous>, transform_indices = @transform_15, window_bounds = array<i64: 1, 64>}, {pipeline_mode = #tpu.pipeline_mode<synchronous>, transform_indices = @transform_16, window_bounds = array<i64: 32, 32>}, {pipeline_mode = #tpu.pipeline_mode<synchronous>, transform_indices = @transform_17, window_bounds = array<i64: 1, 32>}, {pipeline_mode = #tpu.pipeline_mode<synchronous>, transform_indices = @transform_18, window_bounds = array<i64: 1, 32>}, {pipeline_mode = #tpu.pipeline_mode<synchronous>, transform_indices = @transform_19, window_bounds = array<i64: 1, 32>}, {pipeline_mode = #tpu.pipeline_mode<synchronous>, transform_indices = @transform_20, window_bounds = array<i64: 32, 64>}, {pipeline_mode = #tpu.pipeline_mode<synchronous>, transform_indices = @transform_21, window_bounds = array<i64: 1, 64>}, {pipeline_mode = #tpu.pipeline_mode<synchronous>, transform_indices = @transform_22, window_bounds = array<i64: 64, 32>}, {pipeline_mode = #tpu.pipeline_mode<synchronous>, transform_indices = @transform_23, window_bounds = array<i64: 1, 32>}, {transform_indices = @transform_24, window_bounds = array<i64: 8, 32>}]} {
    %c0 = arith.constant 0 : index
    %c0_0 = arith.constant 0 : index
    %c0_1 = arith.constant 0 : index
    %0 = vector.load %arg1[%c0, %c0_0, %c0_1] : memref<1x8x32xf32, #tpu.memory_space<vmem>>, vector<1x8x32xf32>
    %1 = vector.shape_cast %0 : vector<1x8x32xf32> to vector<8x32xf32>
    %c0_2 = arith.constant 0 : index
    %c0_3 = arith.constant 0 : index
    %c0_4 = arith.constant 0 : index
    %2 = vector.load %arg2[%c0_2, %c0_3, %c0_4] : memref<1x16x32xf32, #tpu.memory_space<vmem>>, vector<1x16x32xf32>
    %3 = vector.shape_cast %2 : vector<1x16x32xf32> to vector<16x32xf32>
    %c0_5 = arith.constant 0 : index
    %c0_6 = arith.constant 0 : index
    %4 = vector.load %arg5[%c0_5, %c0_6] : memref<1x32xf32, #tpu.memory_space<vmem>>, vector<1x32xf32>
    %c0_7 = arith.constant 0 : index
    %c0_8 = arith.constant 0 : index
    %5 = vector.load %arg6[%c0_7, %c0_8] : memref<1x32xf32, #tpu.memory_space<vmem>>, vector<1x32xf32>
    %cst = arith.constant dense<0.000000e+00> : vector<8xf32>
    %6 = vector.multi_reduction <add>, %1, %cst [1] : vector<8x32xf32> to vector<8xf32>
    %7 = vector.shape_cast %6 : vector<8xf32> to vector<8x1xf32>
    %cst_9 = arith.constant 3.200000e+01 : f32
    %8 = vector.broadcast %cst_9 : f32 to vector<8x1xf32>
    %9 = arith.divf %7, %8 : vector<8x1xf32>
    %10 = vector.broadcast %9 : vector<8x1xf32> to vector<8x32xf32>
    %11 = arith.subf %1, %10 : vector<8x32xf32>
    %12 = arith.mulf %11, %11 : vector<8x32xf32>
    %cst_10 = arith.constant dense<0.000000e+00> : vector<8xf32>
    %13 = vector.multi_reduction <add>, %12, %cst_10 [1] : vector<8x32xf32> to vector<8xf32>
    %14 = vector.shape_cast %13 : vector<8xf32> to vector<8x1xf32>
    %cst_11 = arith.constant 3.200000e+01 : f32
    %15 = vector.broadcast %cst_11 : f32 to vector<8x1xf32>
    %16 = arith.divf %14, %15 : vector<8x1xf32>
    %17 = math.sqrt %16 : vector<8x1xf32>
    %cst_12 = arith.constant 9.99999997E-7 : f32
    %18 = vector.broadcast %cst_12 : f32 to vector<8x1xf32>
    %19 = arith.addf %17, %18 : vector<8x1xf32>
    %20 = tpu.reciprocal %19 {approx = true} : vector<8x1xf32> -> vector<8x1xf32>
    %21 = vector.broadcast %9 : vector<8x1xf32> to vector<8x32xf32>
    %22 = arith.subf %1, %21 : vector<8x32xf32>
    %23 = vector.broadcast %4 : vector<1x32xf32> to vector<8x32xf32>
    %24 = arith.mulf %23, %22 : vector<8x32xf32>
    %25 = vector.broadcast %20 : vector<8x1xf32> to vector<8x32xf32>
    %26 = arith.mulf %24, %25 : vector<8x32xf32>
    %27 = vector.broadcast %5 : vector<1x32xf32> to vector<8x32xf32>
    %28 = arith.addf %26, %27 : vector<8x32xf32>
    %c0_13 = arith.constant 0 : index
    %c0_14 = arith.constant 0 : index
    %29 = vector.load %arg7[%c0_13, %c0_14] : memref<32x96xf32, #tpu.memory_space<vmem>>, vector<32x96xf32>
    %cst_15 = arith.constant dense<0.000000e+00> : vector<8x96xf32>
    %30 = tpu.matmul %28, %29, %cst_15 {dimension_numbers = #tpu.dot_dimension_numbers<[1], [0], [0], [1], [0, 0, 1, 1], [], []>} : vector<8x32xf32>, vector<32x96xf32>, vector<8x96xf32> -> vector<8x96xf32>
    %c0_16 = arith.constant 0 : index
    %c0_17 = arith.constant 0 : index
    %31 = vector.load %arg8[%c0_16, %c0_17] : memref<1x96xf32, #tpu.memory_space<vmem>>, vector<1x96xf32>
    %32 = vector.broadcast %31 : vector<1x96xf32> to vector<8x96xf32>
    %33 = arith.addf %30, %32 : vector<8x96xf32>
    %34 = vector.extract_strided_slice %33 {offsets = [0, 0], sizes = [8, 32], strides = [1, 1]} : vector<8x96xf32> to vector<8x32xf32>
    %35 = vector.extract_strided_slice %33 {offsets = [0, 32], sizes = [8, 32], strides = [1, 1]} : vector<8x96xf32> to vector<8x32xf32>
    %36 = vector.extract_strided_slice %33 {offsets = [0, 64], sizes = [8, 32], strides = [1, 1]} : vector<8x96xf32> to vector<8x32xf32>
    %c0_18 = arith.constant 0 : index
    %c0_19 = arith.constant 0 : index
    %c0_20 = arith.constant 0 : index
    %37 = vector.load %arg3[%c0_18, %c0_19, %c0_20] : memref<1x8x8xf32, #tpu.memory_space<vmem>>, vector<1x8x8xf32>
    %38 = vector.shape_cast %37 : vector<1x8x8xf32> to vector<8x8xf32>
    %c0_21 = arith.constant 0 : index
    %c0_22 = arith.constant 0 : index
    %39 = vector.load %arg9[%c0_21, %c0_22] : memref<32x32xf32, #tpu.memory_space<vmem>>, vector<32x32xf32>
    %c0_23 = arith.constant 0 : index
    %c0_24 = arith.constant 0 : index
    %40 = vector.load %arg10[%c0_23, %c0_24] : memref<1x32xf32, #tpu.memory_space<vmem>>, vector<1x32xf32>
    %41 = vector.extract_strided_slice %34 {offsets = [0, 0], sizes = [8, 8], strides = [1, 1]} : vector<8x32xf32> to vector<8x8xf32>
    %42 = vector.shape_cast %41 : vector<8x8xf32> to vector<1x8x8xf32>
    %43 = vector.extract_strided_slice %34 {offsets = [0, 8], sizes = [8, 8], strides = [1, 1]} : vector<8x32xf32> to vector<8x8xf32>
    %44 = vector.shape_cast %43 : vector<8x8xf32> to vector<1x8x8xf32>
    %45 = vector.extract_strided_slice %34 {offsets = [0, 16], sizes = [8, 8], strides = [1, 1]} : vector<8x32xf32> to vector<8x8xf32>
    %46 = vector.shape_cast %45 : vector<8x8xf32> to vector<1x8x8xf32>
    %47 = vector.extract_strided_slice %34 {offsets = [0, 24], sizes = [8, 8], strides = [1, 1]} : vector<8x32xf32> to vector<8x8xf32>
    %48 = vector.shape_cast %47 : vector<8x8xf32> to vector<1x8x8xf32>
    %49 = tpu.concatenate %42, %44, %46, %48 in 0 : vector<1x8x8xf32>, vector<1x8x8xf32>, vector<1x8x8xf32>, vector<1x8x8xf32> -> vector<4x8x8xf32>
    %50 = vector.extract_strided_slice %35 {offsets = [0, 0], sizes = [8, 8], strides = [1, 1]} : vector<8x32xf32> to vector<8x8xf32>
    %51 = vector.shape_cast %50 : vector<8x8xf32> to vector<1x8x8xf32>
    %52 = vector.extract_strided_slice %35 {offsets = [0, 8], sizes = [8, 8], strides = [1, 1]} : vector<8x32xf32> to vector<8x8xf32>
    %53 = vector.shape_cast %52 : vector<8x8xf32> to vector<1x8x8xf32>
    %54 = vector.extract_strided_slice %35 {offsets = [0, 16], sizes = [8, 8], strides = [1, 1]} : vector<8x32xf32> to vector<8x8xf32>
    %55 = vector.shape_cast %54 : vector<8x8xf32> to vector<1x8x8xf32>
    %56 = vector.extract_strided_slice %35 {offsets = [0, 24], sizes = [8, 8], strides = [1, 1]} : vector<8x32xf32> to vector<8x8xf32>
    %57 = vector.shape_cast %56 : vector<8x8xf32> to vector<1x8x8xf32>
    %58 = tpu.concatenate %51, %53, %55, %57 in 0 : vector<1x8x8xf32>, vector<1x8x8xf32>, vector<1x8x8xf32>, vector<1x8x8xf32> -> vector<4x8x8xf32>
    %59 = vector.extract_strided_slice %36 {offsets = [0, 0], sizes = [8, 8], strides = [1, 1]} : vector<8x32xf32> to vector<8x8xf32>
    %60 = vector.shape_cast %59 : vector<8x8xf32> to vector<1x8x8xf32>
    %61 = vector.extract_strided_slice %36 {offsets = [0, 8], sizes = [8, 8], strides = [1, 1]} : vector<8x32xf32> to vector<8x8xf32>
    %62 = vector.shape_cast %61 : vector<8x8xf32> to vector<1x8x8xf32>
    %63 = vector.extract_strided_slice %36 {offsets = [0, 16], sizes = [8, 8], strides = [1, 1]} : vector<8x32xf32> to vector<8x8xf32>
    %64 = vector.shape_cast %63 : vector<8x8xf32> to vector<1x8x8xf32>
    %65 = vector.extract_strided_slice %36 {offsets = [0, 24], sizes = [8, 8], strides = [1, 1]} : vector<8x32xf32> to vector<8x8xf32>
    %66 = vector.shape_cast %65 : vector<8x8xf32> to vector<1x8x8xf32>
    %67 = tpu.concatenate %60, %62, %64, %66 in 0 : vector<1x8x8xf32>, vector<1x8x8xf32>, vector<1x8x8xf32>, vector<1x8x8xf32> -> vector<4x8x8xf32>
    "tpu.trace_start"() <{level = 10 : i32, message = "hqd,hkd->hqk"}> : () -> ()
    %cst_25 = arith.constant dense<0.000000e+00> : vector<4x8x8xf32>
    %68 = tpu.matmul %49, %58, %cst_25 {dimension_numbers = #tpu.dot_dimension_numbers<[2], [2], [1], [1], [0, 0, 0, 1, 1, 1], [0], [0]>} : vector<4x8x8xf32>, vector<4x8x8xf32>, vector<4x8x8xf32> -> vector<4x8x8xf32>
    "tpu.trace_stop"() : () -> ()
    %69 = vector.shape_cast %38 : vector<8x8xf32> to vector<1x8x8xf32>
    %70 = vector.broadcast %69 : vector<1x8x8xf32> to vector<4x8x8xf32>
    %71 = arith.addf %68, %70 : vector<4x8x8xf32>
    %cst_26 = arith.constant dense<0xFF800000> : vector<4x8xf32>
    %72 = vector.multi_reduction <maximumf>, %71, %cst_26 [2] : vector<4x8x8xf32> to vector<4x8xf32>
    %73 = vector.shape_cast %72 : vector<4x8xf32> to vector<4x8x1xf32>
    %74 = vector.broadcast %73 : vector<4x8x1xf32> to vector<4x8x8xf32>
    %75 = arith.subf %71, %74 : vector<4x8x8xf32>
    %76 = math.exp %75 : vector<4x8x8xf32>
    %cst_27 = arith.constant dense<0.000000e+00> : vector<4x8xf32>
    %77 = vector.multi_reduction <add>, %76, %cst_27 [2] : vector<4x8x8xf32> to vector<4x8xf32>
    %78 = vector.shape_cast %77 : vector<4x8xf32> to vector<4x8x1xf32>
    %79 = tpu.reciprocal %78 {approx = true} : vector<4x8x1xf32> -> vector<4x8x1xf32>
    %80 = vector.broadcast %79 : vector<4x8x1xf32> to vector<4x8x8xf32>
    %81 = arith.mulf %76, %80 : vector<4x8x8xf32>
    "tpu.trace_start"() <{level = 10 : i32, message = "hqk,hkd->hqd"}> : () -> ()
    %cst_28 = arith.constant dense<0.000000e+00> : vector<4x8x8xf32>
    %82 = tpu.matmul %81, %67, %cst_28 {dimension_numbers = #tpu.dot_dimension_numbers<[2], [1], [1], [2], [0, 0, 0, 1, 1, 2], [0], [0]>} : vector<4x8x8xf32>, vector<4x8x8xf32>, vector<4x8x8xf32> -> vector<4x8x8xf32>
    "tpu.trace_stop"() : () -> ()
    %83 = vector.extract_strided_slice %82 {offsets = [0, 0, 0], sizes = [1, 8, 8], strides = [1, 1, 1]} : vector<4x8x8xf32> to vector<1x8x8xf32>
    %84 = vector.shape_cast %83 : vector<1x8x8xf32> to vector<8x8xf32>
    %85 = vector.extract_strided_slice %82 {offsets = [1, 0, 0], sizes = [1, 8, 8], strides = [1, 1, 1]} : vector<4x8x8xf32> to vector<1x8x8xf32>
    %86 = vector.shape_cast %85 : vector<1x8x8xf32> to vector<8x8xf32>
    %87 = vector.extract_strided_slice %82 {offsets = [2, 0, 0], sizes = [1, 8, 8], strides = [1, 1, 1]} : vector<4x8x8xf32> to vector<1x8x8xf32>
    %88 = vector.shape_cast %87 : vector<1x8x8xf32> to vector<8x8xf32>
    %89 = vector.extract_strided_slice %82 {offsets = [3, 0, 0], sizes = [1, 8, 8], strides = [1, 1, 1]} : vector<4x8x8xf32> to vector<1x8x8xf32>
    %90 = vector.shape_cast %89 : vector<1x8x8xf32> to vector<8x8xf32>
    %91 = tpu.concatenate %84, %86, %88, %90 in 1 : vector<8x8xf32>, vector<8x8xf32>, vector<8x8xf32>, vector<8x8xf32> -> vector<8x32xf32>
    %cst_29 = arith.constant dense<0.000000e+00> : vector<8x32xf32>
    %92 = tpu.matmul %91, %39, %cst_29 {dimension_numbers = #tpu.dot_dimension_numbers<[1], [0], [0], [1], [0, 0, 1, 1], [], []>} : vector<8x32xf32>, vector<32x32xf32>, vector<8x32xf32> -> vector<8x32xf32>
    %93 = vector.broadcast %40 : vector<1x32xf32> to vector<8x32xf32>
    %94 = arith.addf %92, %93 : vector<8x32xf32>
    %95 = arith.addf %1, %94 : vector<8x32xf32>
    %c0_30 = arith.constant 0 : index
    %c0_31 = arith.constant 0 : index
    %96 = vector.load %arg11[%c0_30, %c0_31] : memref<1x32xf32, #tpu.memory_space<vmem>>, vector<1x32xf32>
    %c0_32 = arith.constant 0 : index
    %c0_33 = arith.constant 0 : index
    %97 = vector.load %arg12[%c0_32, %c0_33] : memref<1x32xf32, #tpu.memory_space<vmem>>, vector<1x32xf32>
    %cst_34 = arith.constant dense<0.000000e+00> : vector<8xf32>
    %98 = vector.multi_reduction <add>, %95, %cst_34 [1] : vector<8x32xf32> to vector<8xf32>
    %99 = vector.shape_cast %98 : vector<8xf32> to vector<8x1xf32>
    %cst_35 = arith.constant 3.200000e+01 : f32
    %100 = vector.broadcast %cst_35 : f32 to vector<8x1xf32>
    %101 = arith.divf %99, %100 : vector<8x1xf32>
    %102 = vector.broadcast %101 : vector<8x1xf32> to vector<8x32xf32>
    %103 = arith.subf %95, %102 : vector<8x32xf32>
    %104 = arith.mulf %103, %103 : vector<8x32xf32>
    %cst_36 = arith.constant dense<0.000000e+00> : vector<8xf32>
    %105 = vector.multi_reduction <add>, %104, %cst_36 [1] : vector<8x32xf32> to vector<8xf32>
    %106 = vector.shape_cast %105 : vector<8xf32> to vector<8x1xf32>
    %cst_37 = arith.constant 3.200000e+01 : f32
    %107 = vector.broadcast %cst_37 : f32 to vector<8x1xf32>
    %108 = arith.divf %106, %107 : vector<8x1xf32>
    %109 = math.sqrt %108 : vector<8x1xf32>
    %cst_38 = arith.constant 9.99999997E-7 : f32
    %110 = vector.broadcast %cst_38 : f32 to vector<8x1xf32>
    %111 = arith.addf %109, %110 : vector<8x1xf32>
    %112 = tpu.reciprocal %111 {approx = true} : vector<8x1xf32> -> vector<8x1xf32>
    %113 = vector.broadcast %101 : vector<8x1xf32> to vector<8x32xf32>
    %114 = arith.subf %95, %113 : vector<8x32xf32>
    %115 = vector.broadcast %96 : vector<1x32xf32> to vector<8x32xf32>
    %116 = arith.mulf %115, %114 : vector<8x32xf32>
    %117 = vector.broadcast %112 : vector<8x1xf32> to vector<8x32xf32>
    %118 = arith.mulf %116, %117 : vector<8x32xf32>
    %119 = vector.broadcast %97 : vector<1x32xf32> to vector<8x32xf32>
    %120 = arith.addf %118, %119 : vector<8x32xf32>
    %c0_39 = arith.constant 0 : index
    %c0_40 = arith.constant 0 : index
    %121 = vector.load %arg13[%c0_39, %c0_40] : memref<32x32xf32, #tpu.memory_space<vmem>>, vector<32x32xf32>
    %cst_41 = arith.constant dense<0.000000e+00> : vector<8x32xf32>
    %122 = tpu.matmul %120, %121, %cst_41 {dimension_numbers = #tpu.dot_dimension_numbers<[1], [0], [0], [1], [0, 0, 1, 1], [], []>} : vector<8x32xf32>, vector<32x32xf32>, vector<8x32xf32> -> vector<8x32xf32>
    %c0_42 = arith.constant 0 : index
    %c0_43 = arith.constant 0 : index
    %123 = vector.load %arg14[%c0_42, %c0_43] : memref<1x32xf32, #tpu.memory_space<vmem>>, vector<1x32xf32>
    %124 = vector.broadcast %123 : vector<1x32xf32> to vector<8x32xf32>
    %125 = arith.addf %122, %124 : vector<8x32xf32>
    %c0_44 = arith.constant 0 : index
    %c0_45 = arith.constant 0 : index
    %126 = vector.load %arg15[%c0_44, %c0_45] : memref<32x64xf32, #tpu.memory_space<vmem>>, vector<32x64xf32>
    %cst_46 = arith.constant dense<0.000000e+00> : vector<16x64xf32>
    %127 = tpu.matmul %3, %126, %cst_46 {dimension_numbers = #tpu.dot_dimension_numbers<[1], [0], [0], [1], [0, 0, 1, 1], [], []>} : vector<16x32xf32>, vector<32x64xf32>, vector<16x64xf32> -> vector<16x64xf32>
    %c0_47 = arith.constant 0 : index
    %c0_48 = arith.constant 0 : index
    %128 = vector.load %arg16[%c0_47, %c0_48] : memref<1x64xf32, #tpu.memory_space<vmem>>, vector<1x64xf32>
    %129 = vector.broadcast %128 : vector<1x64xf32> to vector<16x64xf32>
    %130 = arith.addf %127, %129 : vector<16x64xf32>
    %131 = vector.extract_strided_slice %130 {offsets = [0, 0], sizes = [16, 32], strides = [1, 1]} : vector<16x64xf32> to vector<16x32xf32>
    %132 = vector.extract_strided_slice %130 {offsets = [0, 32], sizes = [16, 32], strides = [1, 1]} : vector<16x64xf32> to vector<16x32xf32>
    %c0_49 = arith.constant 0 : index
    %c0_50 = arith.constant 0 : index
    %c0_51 = arith.constant 0 : index
    %133 = vector.load %arg4[%c0_49, %c0_50, %c0_51] : memref<1x8x16xf32, #tpu.memory_space<vmem>>, vector<1x8x16xf32>
    %134 = vector.shape_cast %133 : vector<1x8x16xf32> to vector<8x16xf32>
    %c0_52 = arith.constant 0 : index
    %c0_53 = arith.constant 0 : index
    %135 = vector.load %arg17[%c0_52, %c0_53] : memref<32x32xf32, #tpu.memory_space<vmem>>, vector<32x32xf32>
    %c0_54 = arith.constant 0 : index
    %c0_55 = arith.constant 0 : index
    %136 = vector.load %arg18[%c0_54, %c0_55] : memref<1x32xf32, #tpu.memory_space<vmem>>, vector<1x32xf32>
    %137 = vector.extract_strided_slice %125 {offsets = [0, 0], sizes = [8, 8], strides = [1, 1]} : vector<8x32xf32> to vector<8x8xf32>
    %138 = vector.shape_cast %137 : vector<8x8xf32> to vector<1x8x8xf32>
    %139 = vector.extract_strided_slice %125 {offsets = [0, 8], sizes = [8, 8], strides = [1, 1]} : vector<8x32xf32> to vector<8x8xf32>
    %140 = vector.shape_cast %139 : vector<8x8xf32> to vector<1x8x8xf32>
    %141 = vector.extract_strided_slice %125 {offsets = [0, 16], sizes = [8, 8], strides = [1, 1]} : vector<8x32xf32> to vector<8x8xf32>
    %142 = vector.shape_cast %141 : vector<8x8xf32> to vector<1x8x8xf32>
    %143 = vector.extract_strided_slice %125 {offsets = [0, 24], sizes = [8, 8], strides = [1, 1]} : vector<8x32xf32> to vector<8x8xf32>
    %144 = vector.shape_cast %143 : vector<8x8xf32> to vector<1x8x8xf32>
    %145 = tpu.concatenate %138, %140, %142, %144 in 0 : vector<1x8x8xf32>, vector<1x8x8xf32>, vector<1x8x8xf32>, vector<1x8x8xf32> -> vector<4x8x8xf32>
    %146 = vector.extract_strided_slice %131 {offsets = [0, 0], sizes = [16, 8], strides = [1, 1]} : vector<16x32xf32> to vector<16x8xf32>
    %147 = vector.shape_cast %146 : vector<16x8xf32> to vector<1x16x8xf32>
    %148 = vector.extract_strided_slice %131 {offsets = [0, 8], sizes = [16, 8], strides = [1, 1]} : vector<16x32xf32> to vector<16x8xf32>
    %149 = vector.shape_cast %148 : vector<16x8xf32> to vector<1x16x8xf32>
    %150 = vector.extract_strided_slice %131 {offsets = [0, 16], sizes = [16, 8], strides = [1, 1]} : vector<16x32xf32> to vector<16x8xf32>
    %151 = vector.shape_cast %150 : vector<16x8xf32> to vector<1x16x8xf32>
    %152 = vector.extract_strided_slice %131 {offsets = [0, 24], sizes = [16, 8], strides = [1, 1]} : vector<16x32xf32> to vector<16x8xf32>
    %153 = vector.shape_cast %152 : vector<16x8xf32> to vector<1x16x8xf32>
    %154 = tpu.concatenate %147, %149, %151, %153 in 0 : vector<1x16x8xf32>, vector<1x16x8xf32>, vector<1x16x8xf32>, vector<1x16x8xf32> -> vector<4x16x8xf32>
    %155 = vector.extract_strided_slice %132 {offsets = [0, 0], sizes = [16, 8], strides = [1, 1]} : vector<16x32xf32> to vector<16x8xf32>
    %156 = vector.shape_cast %155 : vector<16x8xf32> to vector<1x16x8xf32>
    %157 = vector.extract_strided_slice %132 {offsets = [0, 8], sizes = [16, 8], strides = [1, 1]} : vector<16x32xf32> to vector<16x8xf32>
    %158 = vector.shape_cast %157 : vector<16x8xf32> to vector<1x16x8xf32>
    %159 = vector.extract_strided_slice %132 {offsets = [0, 16], sizes = [16, 8], strides = [1, 1]} : vector<16x32xf32> to vector<16x8xf32>
    %160 = vector.shape_cast %159 : vector<16x8xf32> to vector<1x16x8xf32>
    %161 = vector.extract_strided_slice %132 {offsets = [0, 24], sizes = [16, 8], strides = [1, 1]} : vector<16x32xf32> to vector<16x8xf32>
    %162 = vector.shape_cast %161 : vector<16x8xf32> to vector<1x16x8xf32>
    %163 = tpu.concatenate %156, %158, %160, %162 in 0 : vector<1x16x8xf32>, vector<1x16x8xf32>, vector<1x16x8xf32>, vector<1x16x8xf32> -> vector<4x16x8xf32>
    "tpu.trace_start"() <{level = 10 : i32, message = "hqd,hkd->hqk"}> : () -> ()
    %cst_56 = arith.constant dense<0.000000e+00> : vector<4x8x16xf32>
    %164 = tpu.matmul %145, %154, %cst_56 {dimension_numbers = #tpu.dot_dimension_numbers<[2], [2], [1], [1], [0, 0, 0, 1, 1, 1], [0], [0]>} : vector<4x8x8xf32>, vector<4x16x8xf32>, vector<4x8x16xf32> -> vector<4x8x16xf32>
    "tpu.trace_stop"() : () -> ()
    %165 = vector.shape_cast %134 : vector<8x16xf32> to vector<1x8x16xf32>
    %166 = vector.broadcast %165 : vector<1x8x16xf32> to vector<4x8x16xf32>
    %167 = arith.addf %164, %166 : vector<4x8x16xf32>
    %cst_57 = arith.constant dense<0xFF800000> : vector<4x8xf32>
    %168 = vector.multi_reduction <maximumf>, %167, %cst_57 [2] : vector<4x8x16xf32> to vector<4x8xf32>
    %169 = vector.shape_cast %168 : vector<4x8xf32> to vector<4x8x1xf32>
    %170 = vector.broadcast %169 : vector<4x8x1xf32> to vector<4x8x16xf32>
    %171 = arith.subf %167, %170 : vector<4x8x16xf32>
    %172 = math.exp %171 : vector<4x8x16xf32>
    %cst_58 = arith.constant dense<0.000000e+00> : vector<4x8xf32>
    %173 = vector.multi_reduction <add>, %172, %cst_58 [2] : vector<4x8x16xf32> to vector<4x8xf32>
    %174 = vector.shape_cast %173 : vector<4x8xf32> to vector<4x8x1xf32>
    %175 = tpu.reciprocal %174 {approx = true} : vector<4x8x1xf32> -> vector<4x8x1xf32>
    %176 = vector.broadcast %175 : vector<4x8x1xf32> to vector<4x8x16xf32>
    %177 = arith.mulf %172, %176 : vector<4x8x16xf32>
    "tpu.trace_start"() <{level = 10 : i32, message = "hqk,hkd->hqd"}> : () -> ()
    %cst_59 = arith.constant dense<0.000000e+00> : vector<4x8x8xf32>
    %178 = tpu.matmul %177, %163, %cst_59 {dimension_numbers = #tpu.dot_dimension_numbers<[2], [1], [1], [2], [0, 0, 0, 1, 1, 2], [0], [0]>} : vector<4x8x16xf32>, vector<4x16x8xf32>, vector<4x8x8xf32> -> vector<4x8x8xf32>
    "tpu.trace_stop"() : () -> ()
    %179 = vector.extract_strided_slice %178 {offsets = [0, 0, 0], sizes = [1, 8, 8], strides = [1, 1, 1]} : vector<4x8x8xf32> to vector<1x8x8xf32>
    %180 = vector.shape_cast %179 : vector<1x8x8xf32> to vector<8x8xf32>
    %181 = vector.extract_strided_slice %178 {offsets = [1, 0, 0], sizes = [1, 8, 8], strides = [1, 1, 1]} : vector<4x8x8xf32> to vector<1x8x8xf32>
    %182 = vector.shape_cast %181 : vector<1x8x8xf32> to vector<8x8xf32>
    %183 = vector.extract_strided_slice %178 {offsets = [2, 0, 0], sizes = [1, 8, 8], strides = [1, 1, 1]} : vector<4x8x8xf32> to vector<1x8x8xf32>
    %184 = vector.shape_cast %183 : vector<1x8x8xf32> to vector<8x8xf32>
    %185 = vector.extract_strided_slice %178 {offsets = [3, 0, 0], sizes = [1, 8, 8], strides = [1, 1, 1]} : vector<4x8x8xf32> to vector<1x8x8xf32>
    %186 = vector.shape_cast %185 : vector<1x8x8xf32> to vector<8x8xf32>
    %187 = tpu.concatenate %180, %182, %184, %186 in 1 : vector<8x8xf32>, vector<8x8xf32>, vector<8x8xf32>, vector<8x8xf32> -> vector<8x32xf32>
    %cst_60 = arith.constant dense<0.000000e+00> : vector<8x32xf32>
    %188 = tpu.matmul %187, %135, %cst_60 {dimension_numbers = #tpu.dot_dimension_numbers<[1], [0], [0], [1], [0, 0, 1, 1], [], []>} : vector<8x32xf32>, vector<32x32xf32>, vector<8x32xf32> -> vector<8x32xf32>
    %189 = vector.broadcast %136 : vector<1x32xf32> to vector<8x32xf32>
    %190 = arith.addf %188, %189 : vector<8x32xf32>
    %191 = arith.addf %95, %190 : vector<8x32xf32>
    %c0_61 = arith.constant 0 : index
    %c0_62 = arith.constant 0 : index
    %192 = vector.load %arg19[%c0_61, %c0_62] : memref<1x32xf32, #tpu.memory_space<vmem>>, vector<1x32xf32>
    %c0_63 = arith.constant 0 : index
    %c0_64 = arith.constant 0 : index
    %193 = vector.load %arg20[%c0_63, %c0_64] : memref<1x32xf32, #tpu.memory_space<vmem>>, vector<1x32xf32>
    %cst_65 = arith.constant dense<0.000000e+00> : vector<8xf32>
    %194 = vector.multi_reduction <add>, %191, %cst_65 [1] : vector<8x32xf32> to vector<8xf32>
    %195 = vector.shape_cast %194 : vector<8xf32> to vector<8x1xf32>
    %cst_66 = arith.constant 3.200000e+01 : f32
    %196 = vector.broadcast %cst_66 : f32 to vector<8x1xf32>
    %197 = arith.divf %195, %196 : vector<8x1xf32>
    %198 = vector.broadcast %197 : vector<8x1xf32> to vector<8x32xf32>
    %199 = arith.subf %191, %198 : vector<8x32xf32>
    %200 = arith.mulf %199, %199 : vector<8x32xf32>
    %cst_67 = arith.constant dense<0.000000e+00> : vector<8xf32>
    %201 = vector.multi_reduction <add>, %200, %cst_67 [1] : vector<8x32xf32> to vector<8xf32>
    %202 = vector.shape_cast %201 : vector<8xf32> to vector<8x1xf32>
    %cst_68 = arith.constant 3.200000e+01 : f32
    %203 = vector.broadcast %cst_68 : f32 to vector<8x1xf32>
    %204 = arith.divf %202, %203 : vector<8x1xf32>
    %205 = math.sqrt %204 : vector<8x1xf32>
    %cst_69 = arith.constant 9.99999997E-7 : f32
    %206 = vector.broadcast %cst_69 : f32 to vector<8x1xf32>
    %207 = arith.addf %205, %206 : vector<8x1xf32>
    %208 = tpu.reciprocal %207 {approx = true} : vector<8x1xf32> -> vector<8x1xf32>
    %209 = vector.broadcast %197 : vector<8x1xf32> to vector<8x32xf32>
    %210 = arith.subf %191, %209 : vector<8x32xf32>
    %211 = vector.broadcast %192 : vector<1x32xf32> to vector<8x32xf32>
    %212 = arith.mulf %211, %210 : vector<8x32xf32>
    %213 = vector.broadcast %208 : vector<8x1xf32> to vector<8x32xf32>
    %214 = arith.mulf %212, %213 : vector<8x32xf32>
    %215 = vector.broadcast %193 : vector<1x32xf32> to vector<8x32xf32>
    %216 = arith.addf %214, %215 : vector<8x32xf32>
    %c0_70 = arith.constant 0 : index
    %c0_71 = arith.constant 0 : index
    %217 = vector.load %arg21[%c0_70, %c0_71] : memref<32x64xf32, #tpu.memory_space<vmem>>, vector<32x64xf32>
    %cst_72 = arith.constant dense<0.000000e+00> : vector<8x64xf32>
    %218 = tpu.matmul %216, %217, %cst_72 {dimension_numbers = #tpu.dot_dimension_numbers<[1], [0], [0], [1], [0, 0, 1, 1], [], []>} : vector<8x32xf32>, vector<32x64xf32>, vector<8x64xf32> -> vector<8x64xf32>
    %c0_73 = arith.constant 0 : index
    %c0_74 = arith.constant 0 : index
    %219 = vector.load %arg22[%c0_73, %c0_74] : memref<1x64xf32, #tpu.memory_space<vmem>>, vector<1x64xf32>
    %220 = vector.broadcast %219 : vector<1x64xf32> to vector<8x64xf32>
    %221 = arith.addf %218, %220 : vector<8x64xf32>
    %cst_75 = arith.constant 0.000000e+00 : f32
    %222 = vector.broadcast %cst_75 : f32 to vector<8x64xf32>
    %223 = arith.maximumf %221, %222 : vector<8x64xf32>
    %c0_76 = arith.constant 0 : index
    %c0_77 = arith.constant 0 : index
    %224 = vector.load %arg23[%c0_76, %c0_77] : memref<64x32xf32, #tpu.memory_space<vmem>>, vector<64x32xf32>
    %cst_78 = arith.constant dense<0.000000e+00> : vector<8x32xf32>
    %225 = tpu.matmul %223, %224, %cst_78 {dimension_numbers = #tpu.dot_dimension_numbers<[1], [0], [0], [1], [0, 0, 1, 1], [], []>} : vector<8x64xf32>, vector<64x32xf32>, vector<8x32xf32> -> vector<8x32xf32>
    %c0_79 = arith.constant 0 : index
    %c0_80 = arith.constant 0 : index
    %226 = vector.load %arg24[%c0_79, %c0_80] : memref<1x32xf32, #tpu.memory_space<vmem>>, vector<1x32xf32>
    %227 = vector.broadcast %226 : vector<1x32xf32> to vector<8x32xf32>
    %228 = arith.addf %225, %227 : vector<8x32xf32>
    %229 = arith.addf %191, %228 : vector<8x32xf32>
    %c0_81 = arith.constant 0 : index
    %c0_82 = arith.constant 0 : index
    %230 = vector.load %arg25[%c0_81, %c0_82] : memref<8x32xf32, #tpu.memory_space<vmem>>, vector<8x32xf32>
    tpu.vector_store %arg25[%c0_81, %c0_82], %229 {strides = array<i32>} : memref<8x32xf32, #tpu.memory_space<vmem>>, vector<8x32xf32>,
    return
  }
  func.func @transform_0(%arg0: i32) -> (i32, i32, i32) {
    %c0_i32 = arith.constant 0 : i32
    %c0_i32_0 = arith.constant 0 : i32
    %c0_i32_1 = arith.constant 0 : i32
    return %arg0, %c0_i32, %c0_i32_0 : i32, i32, i32
  }
  func.func @transform_1(%arg0: i32) -> (i32, i32, i32) {
    %c0_i32 = arith.constant 0 : i32
    %c0_i32_0 = arith.constant 0 : i32
    %c0_i32_1 = arith.constant 0 : i32
    return %arg0, %c0_i32, %c0_i32_0 : i32, i32, i32
  }
  func.func @transform_2(%arg0: i32) -> (i32, i32, i32) {
    %c0_i32 = arith.constant 0 : i32
    %c0_i32_0 = arith.constant 0 : i32
    %c0_i32_1 = arith.constant 0 : i32
    return %arg0, %c0_i32, %c0_i32_0 : i32, i32, i32
  }
  func.func @transform_3(%arg0: i32) -> (i32, i32, i32) {
    %c0_i32 = arith.constant 0 : i32
    %c0_i32_0 = arith.constant 0 : i32
    %c0_i32_1 = arith.constant 0 : i32
    return %arg0, %c0_i32, %c0_i32_0 : i32, i32, i32
  }
  func.func @transform_4(%arg0: i32) -> (i32, i32) {
    %c0_i32 = arith.constant 0 : i32
    %c0_i32_0 = arith.constant 0 : i32
    %c0_i32_1 = arith.constant 0 : i32
    return %c0_i32, %c0_i32_0 : i32, i32
  }
  func.func @transform_5(%arg0: i32) -> (i32, i32) {
    %c0_i32 = arith.constant 0 : i32
    %c0_i32_0 = arith.constant 0 : i32
    %c0_i32_1 = arith.constant 0 : i32
    return %c0_i32, %c0_i32_0 : i32, i32
  }
  func.func @transform_6(%arg0: i32) -> (i32, i32) {
    %c0_i32 = arith.constant 0 : i32
    %c0_i32_0 = arith.constant 0 : i32
    %c0_i32_1 = arith.constant 0 : i32
    return %c0_i32, %c0_i32_0 : i32, i32
  }
  func.func @transform_7(%arg0: i32) -> (i32, i32) {
    %c0_i32 = arith.constant 0 : i32
    %c0_i32_0 = arith.constant 0 : i32
    %c0_i32_1 = arith.constant 0 : i32
    return %c0_i32, %c0_i32_0 : i32, i32
  }
  func.func @transform_8(%arg0: i32) -> (i32, i32) {
    %c0_i32 = arith.constant 0 : i32
    %c0_i32_0 = arith.constant 0 : i32
    %c0_i32_1 = arith.constant 0 : i32
    return %c0_i32, %c0_i32_0 : i32, i32
  }
  func.func @transform_9(%arg0: i32) -> (i32, i32) {
    %c0_i32 = arith.constant 0 : i32
    %c0_i32_0 = arith.constant 0 : i32
    %c0_i32_1 = arith.constant 0 : i32
    return %c0_i32, %c0_i32_0 : i32, i32
  }
  func.func @transform_10(%arg0: i32) -> (i32, i32) {
    %c0_i32 = arith.constant 0 : i32
    %c0_i32_0 = arith.constant 0 : i32
    %c0_i32_1 = arith.constant 0 : i32
    return %c0_i32, %c0_i32_0 : i32, i32
  }
  func.func @transform_11(%arg0: i32) -> (i32, i32) {
    %c0_i32 = arith.constant 0 : i32
    %c0_i32_0 = arith.constant 0 : i32
    %c0_i32_1 = arith.constant 0 : i32
    return %c0_i32, %c0_i32_0 : i32, i32
  }
  func.func @transform_12(%arg0: i32) -> (i32, i32) {
    %c0_i32 = arith.constant 0 : i32
    %c0_i32_0 = arith.constant 0 : i32
    %c0_i32_1 = arith.constant 0 : i32
    return %c0_i32, %c0_i32_0 : i32, i32
  }
  func.func @transform_13(%arg0: i32) -> (i32, i32) {
    %c0_i32 = arith.constant 0 : i32
    %c0_i32_0 = arith.constant 0 : i32
    %c0_i32_1 = arith.constant 0 : i32
    return %c0_i32, %c0_i32_0 : i32, i32
  }
  func.func @transform_14(%arg0: i32) -> (i32, i32) {
    %c0_i32 = arith.constant 0 : i32
    %c0_i32_0 = arith.constant 0 : i32
    %c0_i32_1 = arith.constant 0 : i32
    return %c0_i32, %c0_i32_0 : i32, i32
  }
  func.func @transform_15(%arg0: i32) -> (i32, i32) {
    %c0_i32 = arith.constant 0 : i32
    %c0_i32_0 = arith.constant 0 : i32
    %c0_i32_1 = arith.constant 0 : i32
    return %c0_i32, %c0_i32_0 : i32, i32
  }
  func.func @transform_16(%arg0: i32) -> (i32, i32) {
    %c0_i32 = arith.constant 0 : i32
    %c0_i32_0 = arith.constant 0 : i32
    %c0_i32_1 = arith.constant 0 : i32
    return %c0_i32, %c0_i32_0 : i32, i32
  }
  func.func @transform_17(%arg0: i32) -> (i32, i32) {
    %c0_i32 = arith.constant 0 : i32
    %c0_i32_0 = arith.constant 0 : i32
    %c0_i32_1 = arith.constant 0 : i32
    return %c0_i32, %c0_i32_0 : i32, i32
  }
  func.func @transform_18(%arg0: i32) -> (i32, i32) {
    %c0_i32 = arith.constant 0 : i32
    %c0_i32_0 = arith.constant 0 : i32
    %c0_i32_1 = arith.constant 0 : i32
    return %c0_i32, %c0_i32_0 : i32, i32
  }
  func.func @transform_19(%arg0: i32) -> (i32, i32) {
    %c0_i32 = arith.constant 0 : i32
    %c0_i32_0 = arith.constant 0 : i32
    %c0_i32_1 = arith.constant 0 : i32
    return %c0_i32, %c0_i32_0 : i32, i32
  }
  func.func @transform_20(%arg0: i32) -> (i32, i32) {
    %c0_i32 = arith.constant 0 : i32
    %c0_i32_0 = arith.constant 0 : i32
    %c0_i32_1 = arith.constant 0 : i32
    return %c0_i32, %c0_i32_0 : i32, i32
  }
  func.func @transform_21(%arg0: i32) -> (i32, i32) {
    %c0_i32 = arith.constant 0 : i32
    %c0_i32_0 = arith.constant 0 : i32
    %c0_i32_1 = arith.constant 0 : i32
    return %c0_i32, %c0_i32_0 : i32, i32
  }
  func.func @transform_22(%arg0: i32) -> (i32, i32) {
    %c0_i32 = arith.constant 0 : i32
    %c0_i32_0 = arith.constant 0 : i32
    %c0_i32_1 = arith.constant 0 : i32
    return %c0_i32, %c0_i32_0 : i32, i32
  }
  func.func @transform_23(%arg0: i32) -> (i32, i32) {
    %c0_i32 = arith.constant 0 : i32
    %c0_i32_0 = arith.constant 0 : i32
    %c0_i32_1 = arith.constant 0 : i32
    return %c0_i32, %c0_i32_0 : i32, i32
  }
  func.func @transform_24(%arg0: i32) -> (i32, i32) {
    %c0_i32 = arith.constant 0 : i32
    %c0_i32_0 = arith.constant 0 : i32
    return %arg0, %c0_i32 : i32, i32
  }
}

</mosaic_0001>

<llo_original>
// kernel: tpu_custom_call.1
$region0: #{tpu_custom_call.1}
  #allocation0 [shape = 'u32[]', space=smem, size = 0x4, offset = 0x4, fixed_abs, tag = 'smem constant byte address 0x4 - core index']
  #allocation1 [shape = 'u32[144,128]{1,0:T(1,128)}', space=vmem, size = 0x12000, scoped, tag = 'internal scratch']
  %s0 = inlined_call_operand.hbm [shape: f32[2,8,32], index: 0, kind: input, shape index: {}]
  %s1 = inlined_call_operand.vmem [shape: f32[2,16,32], index: 1, kind: input, shape index: {}]
  %s2 = inlined_call_operand.hbm [shape: f32[2,8,8], index: 2, kind: input, shape index: {}]
  %s3 = inlined_call_operand.hbm [shape: f32[2,8,16], index: 3, kind: input, shape index: {}]
  %s4 = inlined_call_operand.hbm [shape: f32[1,32], index: 4, kind: input, shape index: {}]
  %s5 = inlined_call_operand.hbm [shape: f32[1,32], index: 5, kind: input, shape index: {}]
  %s6 = inlined_call_operand.vmem [shape: f32[32,96], index: 6, kind: input, shape index: {}]
  %s7 = inlined_call_operand.hbm [shape: f32[1,96], index: 7, kind: input, shape index: {}]
  %s8 = inlined_call_operand.vmem [shape: f32[32,32], index: 8, kind: input, shape index: {}]
  %s9 = inlined_call_operand.hbm [shape: f32[1,32], index: 9, kind: input, shape index: {}]
  %s10 = inlined_call_operand.hbm [shape: f32[1,32], index: 10, kind: input, shape index: {}]
  %s11 = inlined_call_operand.hbm [shape: f32[1,32], index: 11, kind: input, shape index: {}]
  %s12 = inlined_call_operand.hbm [shape: f32[32,32], index: 12, kind: input, shape index: {}]
  %s13 = inlined_call_operand.hbm [shape: f32[1,32], index: 13, kind: input, shape index: {}]
  %s14 = inlined_call_operand.hbm [shape: f32[32,64], index: 14, kind: input, shape index: {}]
  %s15 = inlined_call_operand.hbm [shape: f32[1,64], index: 15, kind: input, shape index: {}]
  %s16 = inlined_call_operand.hbm [shape: f32[32,32], index: 16, kind: input, shape index: {}]
  %s17 = inlined_call_operand.hbm [shape: f32[1,32], index: 17, kind: input, shape index: {}]
  %s18 = inlined_call_operand.hbm [shape: f32[1,32], index: 18, kind: input, shape index: {}]
  %s19 = inlined_call_operand.vmem [shape: f32[1,32], index: 19, kind: input, shape index: {}]
  %s20 = inlined_call_operand.vmem [shape: f32[32,64], index: 20, kind: input, shape index: {}]
  %s21 = inlined_call_operand.vmem [shape: f32[1,64], index: 21, kind: input, shape index: {}]
  %s22 = inlined_call_operand.vmem [shape: f32[64,32], index: 22, kind: input, shape index: {}]
  %s23 = inlined_call_operand.vmem [shape: f32[1,32], index: 23, kind: input, shape index: {}]
  %s24 = inlined_call_operand.hbm [shape: f32[16,32], index: 24, kind: output, shape index: {}]
  %s25 = sld [smem:[#allocation0]]
  $region193: #{tpu_custom_call.1} parent=0
    _
  %s27 = ssub.s32 1, %s25
  %s28 = scalar_select 0, %s27, %s25
  $region1: #{tpu_custom_call.1} parent=0
    #allocation2 [shape = 'u8[8192]{0}', space=vmem, size = 0x2000, scoped, tag = 'input window, operand 0']
    #allocation3 [shape = 's32[2]{0}', space=sflag, size = 0x8, scoped, tag = 'scoped memory for tpu_custom_call.1']
    #allocation4 [shape = 's32[2]{0}', space=sflag, size = 0x8, scoped, tag = 'scoped memory for tpu_custom_call.1']
    #allocation5 [shape = 'u8[8192]{0}', space=vmem, size = 0x2000, scoped, tag = 'input window, operand 2']
    #allocation6 [shape = 's32[2]{0}', space=sflag, size = 0x8, scoped, tag = 'scoped memory for tpu_custom_call.1']
    #allocation7 [shape = 'u8[8192]{0}', space=vmem, size = 0x2000, scoped, tag = 'input window, operand 3']
    #allocation8 [shape = 'u8[512]{0}', space=vmem, size = 0x400, scoped, tag = 'input window, operand 4, single buffered']
    #allocation9 [shape = 's32[1]{0}', space=sflag, size = 0x4, scoped, tag = 'scoped memory for tpu_custom_call.1']
    #allocation10 [shape = 'u8[512]{0}', space=vmem, size = 0x400, scoped, tag = 'input window, operand 5, single buffered']
    #allocation11 [shape = 'u8[512]{0}', space=vmem, size = 0x400, scoped, tag = 'input window, operand 7, single buffered']
    #allocation12 [shape = 's32[1]{0}', space=sflag, size = 0x4, scoped, tag = 'scoped memory for tpu_custom_call.1']
    #allocation13 [shape = 'u8[512]{0}', space=vmem, size = 0x400, scoped, tag = 'input window, operand 9, single buffered']
    #allocation14 [shape = 'u8[512]{0}', space=vmem, size = 0x400, scoped, tag = 'input window, operand 10, single buffered']
    #allocation15 [shape = 's32[1]{0}', space=sflag, size = 0x4, scoped, tag = 'scoped memory for tpu_custom_call.1']
    #allocation16 [shape = 'u8[512]{0}', space=vmem, size = 0x400, scoped, tag = 'input window, operand 11, single buffered']
    #allocation17 [shape = 'u8[16384]{0}', space=vmem, size = 0x4000, scoped, tag = 'input window, operand 12, single buffered']
    #allocation18 [shape = 's32[1]{0}', space=sflag, size = 0x4, scoped, tag = 'scoped memory for tpu_custom_call.1']
    #allocation19 [shape = 'u8[512]{0}', space=vmem, size = 0x400, scoped, tag = 'input window, operand 13, single buffered']
    #allocation20 [shape = 'u8[16384]{0}', space=vmem, size = 0x4000, scoped, tag = 'input window, operand 14, single buffered']
    #allocation21 [shape = 's32[1]{0}', space=sflag, size = 0x4, scoped, tag = 'scoped memory for tpu_custom_call.1']
    #allocation22 [shape = 'u8[512]{0}', space=vmem, size = 0x400, scoped, tag = 'input window, operand 15, single buffered']
    #allocation23 [shape = 'u8[16384]{0}', space=vmem, size = 0x4000, scoped, tag = 'input window, operand 16, single buffered']
    #allocation24 [shape = 's32[1]{0}', space=sflag, size = 0x4, scoped, tag = 'scoped memory for tpu_custom_call.1']
    #allocation25 [shape = 'u8[512]{0}', space=vmem, size = 0x400, scoped, tag = 'input window, operand 17, single buffered']
    #allocation26 [shape = 'u8[512]{0}', space=vmem, size = 0x400, scoped, tag = 'input window, operand 18, single buffered']
    #allocation27 [shape = 's32[1]{0}', space=sflag, size = 0x4, scoped, tag = 'scoped memory for tpu_custom_call.1']
    #allocation28 [shape = 'u8[8192]{0}', space=vmem, size = 0x2000, scoped, tag = 'output window, operand 0']
    %29 = vsyncpa [#allocation3], 0
    %s30 = scalar_lea.sflag [#allocation3], 1
    %31 = vsyncpa %s30, 0
    %32 = vsyncpa [#allocation6], 0
    %s33 = scalar_lea.sflag [#allocation6], 1
    %34 = vsyncpa %s33, 0
    %35 = vsyncpa [#allocation9], 0
    %36 = vsyncpa [#allocation12], 0
    %37 = vsyncpa [#allocation15], 0
    %38 = vsyncpa [#allocation18], 0
    %39 = vsyncpa [#allocation21], 0
    %40 = vsyncpa [#allocation24], 0
    %41 = vsyncpa [#allocation27], 0
    %42 = vsyncpa [#allocation4], 0
    %s43 = scalar_lea.sflag [#allocation4], 1
    %44 = vsyncpa %s43, 0
    loop: start=0, step=1, limit=4
    $region2: #{tpu_custom_call.1} parent=1 // loop_pre_header
      _
    $region3: #{tpu_custom_call.1} parent=1 // loop_header
      %s46 = sphi 0, %s50
      %p47 = scmp.ge.s32.totalorder %s46, 4
      %s56 = sphi 0, %s58
      %s59 = sphi 0, %s56
      %s60 = sphi 0, %s59
      %s76 = sphi 0, %s60
      %s82 = sphi 0, %s84
      %s85 = sphi 0, %s82
      %s86 = sphi 0, %s85
      %s102 = sphi 0, %s86
      %s108 = sphi 0, %s110
      %s111 = sphi 0, %s108
      %s112 = sphi 0, %s111
      %s128 = sphi 0, %s112
      %s134 = sphi 0, %s136
      %s137 = sphi 0, %s134
      %s138 = sphi 0, %s137
      %s154 = sphi 0, %s138
      %s158 = sphi 0, %s158
      %s160 = sphi 0, %s158
      %s161 = sphi 0, %s160
      %s175 = sphi 0, %s161
      %s179 = sphi 0, %s179
      %s181 = sphi 0, %s179
      %s182 = sphi 0, %s181
      %s196 = sphi 0, %s182
      %s200 = sphi 0, %s200
      %s202 = sphi 0, %s200
      %s203 = sphi 0, %s202
      %s217 = sphi 0, %s203
      %s221 = sphi 0, %s221
      %s223 = sphi 0, %s221
      %s224 = sphi 0, %s223
      %s238 = sphi 0, %s224
      %s242 = sphi 0, %s242
      %s244 = sphi 0, %s242
      %s245 = sphi 0, %s244
      %s259 = sphi 0, %s245
      %s263 = sphi 0, %s263
      %s265 = sphi 0, %s263
      %s266 = sphi 0, %s265
      %s280 = sphi 0, %s266
      %s284 = sphi 0, %s284
      %s286 = sphi 0, %s284
      %s287 = sphi 0, %s286
      %s301 = sphi 0, %s287
      %s305 = sphi 0, %s305
      %s307 = sphi 0, %s305
      %s308 = sphi 0, %s307
      %s322 = sphi 0, %s308
      %s326 = sphi 0, %s326
      %s328 = sphi 0, %s326
      %s329 = sphi 0, %s328
      %s343 = sphi 0, %s329
      %s347 = sphi 0, %s347
      %s349 = sphi 0, %s347
      %s350 = sphi 0, %s349
      %s364 = sphi 0, %s350
      %s368 = sphi 0, %s368
      %s370 = sphi 0, %s368
      %s371 = sphi 0, %s370
      %s385 = sphi 0, %s371
      %s389 = sphi 0, %s389
      %s391 = sphi 0, %s389
      %s392 = sphi 0, %s391
      %s406 = sphi 0, %s392
      %s410 = sphi 0, %s410
      %s412 = sphi 0, %s410
      %s413 = sphi 0, %s412
      %s427 = sphi 0, %s413
      %s431 = sphi 0, %s431
      %s433 = sphi 0, %s431
      %s434 = sphi 0, %s433
      %s448 = sphi 0, %s434
      %s452 = sphi 0, %s452
      %s454 = sphi 0, %s452
      %s455 = sphi 0, %s454
      %s469 = sphi 0, %s455
      %s473 = sphi 0, %s473
      %s475 = sphi 0, %s473
      %s476 = sphi 0, %s475
      %s490 = sphi 0, %s476
      %s494 = sphi 0, %s494
      %s496 = sphi 0, %s494
      %s497 = sphi 0, %s496
      %s511 = sphi 0, %s497
      %s515 = sphi 0, %s515
      %s517 = sphi 0, %s515
      %s518 = sphi 0, %s517
      %s532 = sphi 0, %s518
      %s536 = sphi 0, %s536
      %s538 = sphi 0, %s536
      %s539 = sphi 0, %s538
      %s553 = sphi 0, %s539
      %s557 = sphi 0, %s557
      %s559 = sphi 0, %s557
      %s560 = sphi 0, %s559
      %s574 = sphi 0, %s560
      %s580 = sphi 0, %s582
      %s583 = sphi 0, %s580
      %s584 = sphi 0, %s583
      %s600 = sphi 0, %s584
    $region4: #{tpu_custom_call.1} parent=1 // loop_header_branch
      %49 = sbr.rel (%p47) target = $region8
    $region5: #{tpu_custom_call.1} parent=1 // loop_body
      %s51 = ssub.s32 %s46, 1
      %s52 = ssub.s32 %s46, 2
      %s53 = sadd.s32 %s46, 1
      %s54 = ssub.s32 %s46, %s53
      %p55 = scmp.eq.s32.totalorder %s54, 0
      %s57 = sadd.s32 %s56, 1
      %s58 = scalar_select %p55, %s56, %s57
      %p61 = pneg %p55
      %p62 = scmp.eq.s32.totalorder %s46, 1
      %p63 = por %p61, %p62
      %p64 = scmp.ne.s32.totalorder %s56, %s59
      %p65 = scmp.eq.s32.totalorder %s46, 0
      %p66 = por %p64, %p65
      %p67 = scmp.ne.s32.totalorder %s56, %s59
      %p68 = scmp.eq.s32.totalorder %s51, 1
      %p69 = por %p67, %p68
      %p70 = scmp.ne.s32.totalorder %s59, %s60
      %p71 = scmp.eq.s32.totalorder %s51, 0
      %p72 = por %p70, %p71
      %p73 = scmp.ne.s32.totalorder %s59, %s60
      %p74 = scmp.eq.s32.totalorder %s52, 1
      %p75 = por %p73, %p74
      %p77 = scmp.ne.s32.totalorder %s60, %s76
      %p78 = scmp.eq.s32.totalorder %s52, 0
      %p79 = por %p77, %p78
      %s80 = ssub.s32 %s46, %s53
      %p81 = scmp.eq.s32.totalorder %s80, 0
      %s83 = sadd.s32 %s82, 1
      %s84 = scalar_select %p81, %s82, %s83
      %p87 = pneg %p81
      %p88 = scmp.eq.s32.totalorder %s46, 1
      %p89 = por %p87, %p88
      %p90 = scmp.ne.s32.totalorder %s82, %s85
      %p91 = scmp.eq.s32.totalorder %s46, 0
      %p92 = por %p90, %p91
      %p93 = scmp.ne.s32.totalorder %s82, %s85
      %p94 = scmp.eq.s32.totalorder %s51, 1
      %p95 = por %p93, %p94
      %p96 = scmp.ne.s32.totalorder %s85, %s86
      %p97 = scmp.eq.s32.totalorder %s51, 0
      %p98 = por %p96, %p97
      %p99 = scmp.ne.s32.totalorder %s85, %s86
      %p100 = scmp.eq.s32.totalorder %s52, 1
      %p101 = por %p99, %p100
      %p103 = scmp.ne.s32.totalorder %s86, %s102
      %p104 = scmp.eq.s32.totalorder %s52, 0
      %p105 = por %p103, %p104
      %s106 = ssub.s32 %s46, %s53
      %p107 = scmp.eq.s32.totalorder %s106, 0
      %s109 = sadd.s32 %s108, 1
      %s110 = scalar_select %p107, %s108, %s109
      %p113 = pneg %p107
      %p114 = scmp.eq.s32.totalorder %s46, 1
      %p115 = por %p113, %p114
      %p116 = scmp.ne.s32.totalorder %s108, %s111
      %p117 = scmp.eq.s32.totalorder %s46, 0
      %p118 = por %p116, %p117
      %p119 = scmp.ne.s32.totalorder %s108, %s111
      %p120 = scmp.eq.s32.totalorder %s51, 1
      %p121 = por %p119, %p120
      %p122 = scmp.ne.s32.totalorder %s111, %s112
      %p123 = scmp.eq.s32.totalorder %s51, 0
      %p124 = por %p122, %p123
      %p125 = scmp.ne.s32.totalorder %s111, %s112
      %p126 = scmp.eq.s32.totalorder %s52, 1
      %p127 = por %p125, %p126
      %p129 = scmp.ne.s32.totalorder %s112, %s128
      %p130 = scmp.eq.s32.totalorder %s52, 0
      %p131 = por %p129, %p130
      %s132 = ssub.s32 %s46, %s53
      %p133 = scmp.eq.s32.totalorder %s132, 0
      %s135 = sadd.s32 %s134, 1
      %s136 = scalar_select %p133, %s134, %s135
      %p139 = pneg %p133
      %p140 = scmp.eq.s32.totalorder %s46, 1
      %p141 = por %p139, %p140
      %p142 = scmp.ne.s32.totalorder %s134, %s137
      %p143 = scmp.eq.s32.totalorder %s46, 0
      %p144 = por %p142, %p143
      %p145 = scmp.ne.s32.totalorder %s134, %s137
      %p146 = scmp.eq.s32.totalorder %s51, 1
      %p147 = por %p145, %p146
      %p148 = scmp.ne.s32.totalorder %s137, %s138
      %p149 = scmp.eq.s32.totalorder %s51, 0
      %p150 = por %p148, %p149
      %p151 = scmp.ne.s32.totalorder %s137, %s138
      %p152 = scmp.eq.s32.totalorder %s52, 1
      %p153 = por %p151, %p152
      %p155 = scmp.ne.s32.totalorder %s138, %s154
      %p156 = scmp.eq.s32.totalorder %s52, 0
      %p157 = por %p155, %p156
      %s159 = sadd.s32 %s158, 1
      %p162 = scmp.eq.s32.totalorder %s46, 1
      %p163 = scmp.ne.s32.totalorder %s158, %s160
      %p164 = scmp.eq.s32.totalorder %s46, 0
      %p165 = por %p163, %p164
      %p166 = scmp.ne.s32.totalorder %s158, %s160
      %p167 = scmp.eq.s32.totalorder %s51, 1
      %p168 = por %p166, %p167
      %p169 = scmp.ne.s32.totalorder %s160, %s161
      %p170 = scmp.eq.s32.totalorder %s51, 0
      %p171 = por %p169, %p170
      %p172 = scmp.ne.s32.totalorder %s160, %s161
      %p173 = scmp.eq.s32.totalorder %s52, 1
      %p174 = por %p172, %p173
      %p176 = scmp.ne.s32.totalorder %s161, %s175
      %p177 = scmp.eq.s32.totalorder %s52, 0
      %p178 = por %p176, %p177
      %s180 = sadd.s32 %s179, 1
      %p183 = scmp.eq.s32.totalorder %s46, 1
      %p184 = scmp.ne.s32.totalorder %s179, %s181
      %p185 = scmp.eq.s32.totalorder %s46, 0
      %p186 = por %p184, %p185
      %p187 = scmp.ne.s32.totalorder %s179, %s181
      %p188 = scmp.eq.s32.totalorder %s51, 1
      %p189 = por %p187, %p188
      %p190 = scmp.ne.s32.totalorder %s181, %s182
      %p191 = scmp.eq.s32.totalorder %s51, 0
      %p192 = por %p190, %p191
      %p193 = scmp.ne.s32.totalorder %s181, %s182
      %p194 = scmp.eq.s32.totalorder %s52, 1
      %p195 = por %p193, %p194
      %p197 = scmp.ne.s32.totalorder %s182, %s196
      %p198 = scmp.eq.s32.totalorder %s52, 0
      %p199 = por %p197, %p198
      %s201 = sadd.s32 %s200, 1
      %p204 = scmp.eq.s32.totalorder %s46, 1
      %p205 = scmp.ne.s32.totalorder %s200, %s202
      %p206 = scmp.eq.s32.totalorder %s46, 0
      %p207 = por %p205, %p206
      %p208 = scmp.ne.s32.totalorder %s200, %s202
      %p209 = scmp.eq.s32.totalorder %s51, 1
      %p210 = por %p208, %p209
      %p211 = scmp.ne.s32.totalorder %s202, %s203
      %p212 = scmp.eq.s32.totalorder %s51, 0
      %p213 = por %p211, %p212
      %p214 = scmp.ne.s32.totalorder %s202, %s203
      %p215 = scmp.eq.s32.totalorder %s52, 1
      %p216 = por %p214, %p215
      %p218 = scmp.ne.s32.totalorder %s203, %s217
      %p219 = scmp.eq.s32.totalorder %s52, 0
      %p220 = por %p218, %p219
      %s222 = sadd.s32 %s221, 1
      %p225 = scmp.eq.s32.totalorder %s46, 1
      %p226 = scmp.ne.s32.totalorder %s221, %s223
      %p227 = scmp.eq.s32.totalorder %s46, 0
      %p228 = por %p226, %p227
      %p229 = scmp.ne.s32.totalorder %s221, %s223
      %p230 = scmp.eq.s32.totalorder %s51, 1
      %p231 = por %p229, %p230
      %p232 = scmp.ne.s32.totalorder %s223, %s224
      %p233 = scmp.eq.s32.totalorder %s51, 0
      %p234 = por %p232, %p233
      %p235 = scmp.ne.s32.totalorder %s223, %s224
      %p236 = scmp.eq.s32.totalorder %s52, 1
      %p237 = por %p235, %p236
      %p239 = scmp.ne.s32.totalorder %s224, %s238
      %p240 = scmp.eq.s32.totalorder %s52, 0
      %p241 = por %p239, %p240
      %s243 = sadd.s32 %s242, 1
      %p246 = scmp.eq.s32.totalorder %s46, 1
      %p247 = scmp.ne.s32.totalorder %s242, %s244
      %p248 = scmp.eq.s32.totalorder %s46, 0
      %p249 = por %p247, %p248
      %p250 = scmp.ne.s32.totalorder %s242, %s244
      %p251 = scmp.eq.s32.totalorder %s51, 1
      %p252 = por %p250, %p251
      %p253 = scmp.ne.s32.totalorder %s244, %s245
      %p254 = scmp.eq.s32.totalorder %s51, 0
      %p255 = por %p253, %p254
      %p256 = scmp.ne.s32.totalorder %s244, %s245
      %p257 = scmp.eq.s32.totalorder %s52, 1
      %p258 = por %p256, %p257
      %p260 = scmp.ne.s32.totalorder %s245, %s259
      %p261 = scmp.eq.s32.totalorder %s52, 0
      %p262 = por %p260, %p261
      %s264 = sadd.s32 %s263, 1
      %p267 = scmp.eq.s32.totalorder %s46, 1
      %p268 = scmp.ne.s32.totalorder %s263, %s265
      %p269 = scmp.eq.s32.totalorder %s46, 0
      %p270 = por %p268, %p269
      %p271 = scmp.ne.s32.totalorder %s263, %s265
      %p272 = scmp.eq.s32.totalorder %s51, 1
      %p273 = por %p271, %p272
      %p274 = scmp.ne.s32.totalorder %s265, %s266
      %p275 = scmp.eq.s32.totalorder %s51, 0
      %p276 = por %p274, %p275
      %p277 = scmp.ne.s32.totalorder %s265, %s266
      %p278 = scmp.eq.s32.totalorder %s52, 1
      %p279 = por %p277, %p278
      %p281 = scmp.ne.s32.totalorder %s266, %s280
      %p282 = scmp.eq.s32.totalorder %s52, 0
      %p283 = por %p281, %p282
      %s285 = sadd.s32 %s284, 1
      %p288 = scmp.eq.s32.totalorder %s46, 1
      %p289 = scmp.ne.s32.totalorder %s284, %s286
      %p290 = scmp.eq.s32.totalorder %s46, 0
      %p291 = por %p289, %p290
      %p292 = scmp.ne.s32.totalorder %s284, %s286
      %p293 = scmp.eq.s32.totalorder %s51, 1
      %p294 = por %p292, %p293
      %p295 = scmp.ne.s32.totalorder %s286, %s287
      %p296 = scmp.eq.s32.totalorder %s51, 0
      %p297 = por %p295, %p296
      %p298 = scmp.ne.s32.totalorder %s286, %s287
      %p299 = scmp.eq.s32.totalorder %s52, 1
      %p300 = por %p298, %p299
      %p302 = scmp.ne.s32.totalorder %s287, %s301
      %p303 = scmp.eq.s32.totalorder %s52, 0
      %p304 = por %p302, %p303
      %s306 = sadd.s32 %s305, 1
      %p309 = scmp.eq.s32.totalorder %s46, 1
      %p310 = scmp.ne.s32.totalorder %s305, %s307
      %p311 = scmp.eq.s32.totalorder %s46, 0
      %p312 = por %p310, %p311
      %p313 = scmp.ne.s32.totalorder %s305, %s307
      %p314 = scmp.eq.s32.totalorder %s51, 1
      %p315 = por %p313, %p314
      %p316 = scmp.ne.s32.totalorder %s307, %s308
      %p317 = scmp.eq.s32.totalorder %s51, 0
      %p318 = por %p316, %p317
      %p319 = scmp.ne.s32.totalorder %s307, %s308
      %p320 = scmp.eq.s32.totalorder %s52, 1
      %p321 = por %p319, %p320
      %p323 = scmp.ne.s32.totalorder %s308, %s322
      %p324 = scmp.eq.s32.totalorder %s52, 0
      %p325 = por %p323, %p324
      %s327 = sadd.s32 %s326, 1
      %p330 = scmp.eq.s32.totalorder %s46, 1
      %p331 = scmp.ne.s32.totalorder %s326, %s328
      %p332 = scmp.eq.s32.totalorder %s46, 0
      %p333 = por %p331, %p332
      %p334 = scmp.ne.s32.totalorder %s326, %s328
      %p335 = scmp.eq.s32.totalorder %s51, 1
      %p336 = por %p334, %p335
      %p337 = scmp.ne.s32.totalorder %s328, %s329
      %p338 = scmp.eq.s32.totalorder %s51, 0
      %p339 = por %p337, %p338
      %p340 = scmp.ne.s32.totalorder %s328, %s329
      %p341 = scmp.eq.s32.totalorder %s52, 1
      %p342 = por %p340, %p341
      %p344 = scmp.ne.s32.totalorder %s329, %s343
      %p345 = scmp.eq.s32.totalorder %s52, 0
      %p346 = por %p344, %p345
      %s348 = sadd.s32 %s347, 1
      %p351 = scmp.eq.s32.totalorder %s46, 1
      %p352 = scmp.ne.s32.totalorder %s347, %s349
      %p353 = scmp.eq.s32.totalorder %s46, 0
      %p354 = por %p352, %p353
      %p355 = scmp.ne.s32.totalorder %s347, %s349
      %p356 = scmp.eq.s32.totalorder %s51, 1
      %p357 = por %p355, %p356
      %p358 = scmp.ne.s32.totalorder %s349, %s350
      %p359 = scmp.eq.s32.totalorder %s51, 0
      %p360 = por %p358, %p359
      %p361 = scmp.ne.s32.totalorder %s349, %s350
      %p362 = scmp.eq.s32.totalorder %s52, 1
      %p363 = por %p361, %p362
      %p365 = scmp.ne.s32.totalorder %s350, %s364
      %p366 = scmp.eq.s32.totalorder %s52, 0
      %p367 = por %p365, %p366
      %s369 = sadd.s32 %s368, 1
      %p372 = scmp.eq.s32.totalorder %s46, 1
      %p373 = scmp.ne.s32.totalorder %s368, %s370
      %p374 = scmp.eq.s32.totalorder %s46, 0
      %p375 = por %p373, %p374
      %p376 = scmp.ne.s32.totalorder %s368, %s370
      %p377 = scmp.eq.s32.totalorder %s51, 1
      %p378 = por %p376, %p377
      %p379 = scmp.ne.s32.totalorder %s370, %s371
      %p380 = scmp.eq.s32.totalorder %s51, 0
      %p381 = por %p379, %p380
      %p382 = scmp.ne.s32.totalorder %s370, %s371
      %p383 = scmp.eq.s32.totalorder %s52, 1
      %p384 = por %p382, %p383
      %p386 = scmp.ne.s32.totalorder %s371, %s385
      %p387 = scmp.eq.s32.totalorder %s52, 0
      %p388 = por %p386, %p387
      %s390 = sadd.s32 %s389, 1
      %p393 = scmp.eq.s32.totalorder %s46, 1
      %p394 = scmp.ne.s32.totalorder %s389, %s391
      %p395 = scmp.eq.s32.totalorder %s46, 0
      %p396 = por %p394, %p395
      %p397 = scmp.ne.s32.totalorder %s389, %s391
      %p398 = scmp.eq.s32.totalorder %s51, 1
      %p399 = por %p397, %p398
      %p400 = scmp.ne.s32.totalorder %s391, %s392
      %p401 = scmp.eq.s32.totalorder %s51, 0
      %p402 = por %p400, %p401
      %p403 = scmp.ne.s32.totalorder %s391, %s392
      %p404 = scmp.eq.s32.totalorder %s52, 1
      %p405 = por %p403, %p404
      %p407 = scmp.ne.s32.totalorder %s392, %s406
      %p408 = scmp.eq.s32.totalorder %s52, 0
      %p409 = por %p407, %p408
      %s411 = sadd.s32 %s410, 1
      %p414 = scmp.eq.s32.totalorder %s46, 1
      %p415 = scmp.ne.s32.totalorder %s410, %s412
      %p416 = scmp.eq.s32.totalorder %s46, 0
      %p417 = por %p415, %p416
      %p418 = scmp.ne.s32.totalorder %s410, %s412
      %p419 = scmp.eq.s32.totalorder %s51, 1
      %p420 = por %p418, %p419
      %p421 = scmp.ne.s32.totalorder %s412, %s413
      %p422 = scmp.eq.s32.totalorder %s51, 0
      %p423 = por %p421, %p422
      %p424 = scmp.ne.s32.totalorder %s412, %s413
      %p425 = scmp.eq.s32.totalorder %s52, 1
      %p426 = por %p424, %p425
      %p428 = scmp.ne.s32.totalorder %s413, %s427
      %p429 = scmp.eq.s32.totalorder %s52, 0
      %p430 = por %p428, %p429
      %s432 = sadd.s32 %s431, 1
      %p435 = scmp.eq.s32.totalorder %s46, 1
      %p436 = scmp.ne.s32.totalorder %s431, %s433
      %p437 = scmp.eq.s32.totalorder %s46, 0
      %p438 = por %p436, %p437
      %p439 = scmp.ne.s32.totalorder %s431, %s433
      %p440 = scmp.eq.s32.totalorder %s51, 1
      %p441 = por %p439, %p440
      %p442 = scmp.ne.s32.totalorder %s433, %s434
      %p443 = scmp.eq.s32.totalorder %s51, 0
      %p444 = por %p442, %p443
      %p445 = scmp.ne.s32.totalorder %s433, %s434
      %p446 = scmp.eq.s32.totalorder %s52, 1
      %p447 = por %p445, %p446
      %p449 = scmp.ne.s32.totalorder %s434, %s448
      %p450 = scmp.eq.s32.totalorder %s52, 0
      %p451 = por %p449, %p450
      %s453 = sadd.s32 %s452, 1
      %p456 = scmp.eq.s32.totalorder %s46, 1
      %p457 = scmp.ne.s32.totalorder %s452, %s454
      %p458 = scmp.eq.s32.totalorder %s46, 0
      %p459 = por %p457, %p458
      %p460 = scmp.ne.s32.totalorder %s452, %s454
      %p461 = scmp.eq.s32.totalorder %s51, 1
      %p462 = por %p460, %p461
      %p463 = scmp.ne.s32.totalorder %s454, %s455
      %p464 = scmp.eq.s32.totalorder %s51, 0
      %p465 = por %p463, %p464
      %p466 = scmp.ne.s32.totalorder %s454, %s455
      %p467 = scmp.eq.s32.totalorder %s52, 1
      %p468 = por %p466, %p467
      %p470 = scmp.ne.s32.totalorder %s455, %s469
      %p471 = scmp.eq.s32.totalorder %s52, 0
      %p472 = por %p470, %p471
      %s474 = sadd.s32 %s473, 1
      %p477 = scmp.eq.s32.totalorder %s46, 1
      %p478 = scmp.ne.s32.totalorder %s473, %s475
      %p479 = scmp.eq.s32.totalorder %s46, 0
      %p480 = por %p478, %p479
      %p481 = scmp.ne.s32.totalorder %s473, %s475
      %p482 = scmp.eq.s32.totalorder %s51, 1
      %p483 = por %p481, %p482
      %p484 = scmp.ne.s32.totalorder %s475, %s476
      %p485 = scmp.eq.s32.totalorder %s51, 0
      %p486 = por %p484, %p485
      %p487 = scmp.ne.s32.totalorder %s475, %s476
      %p488 = scmp.eq.s32.totalorder %s52, 1
      %p489 = por %p487, %p488
      %p491 = scmp.ne.s32.totalorder %s476, %s490
      %p492 = scmp.eq.s32.totalorder %s52, 0
      %p493 = por %p491, %p492
      %s495 = sadd.s32 %s494, 1
      %p498 = scmp.eq.s32.totalorder %s46, 1
      %p499 = scmp.ne.s32.totalorder %s494, %s496
      %p500 = scmp.eq.s32.totalorder %s46, 0
      %p501 = por %p499, %p500
      %p502 = scmp.ne.s32.totalorder %s494, %s496
      %p503 = scmp.eq.s32.totalorder %s51, 1
      %p504 = por %p502, %p503
      %p505 = scmp.ne.s32.totalorder %s496, %s497
      %p506 = scmp.eq.s32.totalorder %s51, 0
      %p507 = por %p505, %p506
      %p508 = scmp.ne.s32.totalorder %s496, %s497
      %p509 = scmp.eq.s32.totalorder %s52, 1
      %p510 = por %p508, %p509
      %p512 = scmp.ne.s32.totalorder %s497, %s511
      %p513 = scmp.eq.s32.totalorder %s52, 0
      %p514 = por %p512, %p513
      %s516 = sadd.s32 %s515, 1
      %p519 = scmp.eq.s32.totalorder %s46, 1
      %p520 = scmp.ne.s32.totalorder %s515, %s517
      %p521 = scmp.eq.s32.totalorder %s46, 0
      %p522 = por %p520, %p521
      %p523 = scmp.ne.s32.totalorder %s515, %s517
      %p524 = scmp.eq.s32.totalorder %s51, 1
      %p525 = por %p523, %p524
      %p526 = scmp.ne.s32.totalorder %s517, %s518
      %p527 = scmp.eq.s32.totalorder %s51, 0
      %p528 = por %p526, %p527
      %p529 = scmp.ne.s32.totalorder %s517, %s518
      %p530 = scmp.eq.s32.totalorder %s52, 1
      %p531 = por %p529, %p530
      %p533 = scmp.ne.s32.totalorder %s518, %s532
      %p534 = scmp.eq.s32.totalorder %s52, 0
      %p535 = por %p533, %p534
      %s537 = sadd.s32 %s536, 1
      %p540 = scmp.eq.s32.totalorder %s46, 1
      %p541 = scmp.ne.s32.totalorder %s536, %s538
      %p542 = scmp.eq.s32.totalorder %s46, 0
      %p543 = por %p541, %p542
      %p544 = scmp.ne.s32.totalorder %s536, %s538
      %p545 = scmp.eq.s32.totalorder %s51, 1
      %p546 = por %p544, %p545
      %p547 = scmp.ne.s32.totalorder %s538, %s539
      %p548 = scmp.eq.s32.totalorder %s51, 0
      %p549 = por %p547, %p548
      %p550 = scmp.ne.s32.totalorder %s538, %s539
      %p551 = scmp.eq.s32.totalorder %s52, 1
      %p552 = por %p550, %p551
      %p554 = scmp.ne.s32.totalorder %s539, %s553
      %p555 = scmp.eq.s32.totalorder %s52, 0
      %p556 = por %p554, %p555
      %s558 = sadd.s32 %s557, 1
      %p561 = scmp.eq.s32.totalorder %s46, 1
      %p562 = scmp.ne.s32.totalorder %s557, %s559
      %p563 = scmp.eq.s32.totalorder %s46, 0
      %p564 = por %p562, %p563
      %p565 = scmp.ne.s32.totalorder %s557, %s559
      %p566 = scmp.eq.s32.totalorder %s51, 1
      %p567 = por %p565, %p566
      %p568 = scmp.ne.s32.totalorder %s559, %s560
      %p569 = scmp.eq.s32.totalorder %s51, 0
      %p570 = por %p568, %p569
      %p571 = scmp.ne.s32.totalorder %s559, %s560
      %p572 = scmp.eq.s32.totalorder %s52, 1
      %p573 = por %p571, %p572
      %p575 = scmp.ne.s32.totalorder %s560, %s574
      %p576 = scmp.eq.s32.totalorder %s52, 0
      %p577 = por %p575, %p576
      %s578 = ssub.s32 %s46, %s53
      %p579 = scmp.eq.s32.totalorder %s578, 0
      %s581 = sadd.s32 %s580, 1
      %s582 = scalar_select %p579, %s580, %s581
      %p585 = pneg %p579
      %p586 = scmp.eq.s32.totalorder %s46, 1
      %p587 = por %p585, %p586
      %p588 = scmp.ne.s32.totalorder %s580, %s583
      %p589 = scmp.eq.s32.totalorder %s46, 0
      %p590 = por %p588, %p589
      %p591 = scmp.ne.s32.totalorder %s580, %s583
      %p592 = scmp.eq.s32.totalorder %s51, 1
      %p593 = por %p591, %p592
      %p594 = scmp.ne.s32.totalorder %s583, %s584
      %p595 = scmp.eq.s32.totalorder %s51, 0
      %p596 = por %p594, %p595
      %p597 = scmp.ne.s32.totalorder %s583, %s584
      %p598 = scmp.eq.s32.totalorder %s52, 1
      %p599 = por %p597, %p598
      %p601 = scmp.ne.s32.totalorder %s584, %s600
      %p602 = scmp.eq.s32.totalorder %s52, 0
      %p603 = por %p601, %p602
      %p604 = scmp.le.s32.totalorder 1, %s46
      %p605 = scmp.lt.s32.totalorder %s46, 3
      %p606 = pnand %p604, %p605
      %p607 = pneg %p606
      // Predicated region
      $region9: #{tpu_custom_call.1} parent=5 // pred_check
        _
      $region10: #{tpu_custom_call.1} parent=5 // pred_check_branch
        %609 = sbr.rel (%p606) target = $region12
      $region11: #{tpu_custom_call.1} parent=5 // pred_region
        %s610 = ssub.s32 %s46, 1
        // Predicated region
        $region13: #{tpu_custom_call.1} parent=11 // pred_check
          %p611 = pneg %p171
        $region14: #{tpu_custom_call.1} parent=11 // pred_check_branch
          %613 = sbr.rel (%p611) target = $region16
        $region15: #{tpu_custom_call.1} parent=11 // pred_region
          %s615 = ssub.s32 16, 16
          %616 = vsyncadd [#allocation9], %s615
          %s618 = sshll.u32 [#allocation8], 4
          %s619 = int_to_ptr.vmem [resolvable:$true] %s618
          %621 = dma.hbm_to_vmem [thread:$0]  %s4, 16, %s619, [#allocation9]
        $region16: #{tpu_custom_call.1} parent=11 // pred_fallthru
          _
        // Predicated region
        $region17: #{tpu_custom_call.1} parent=11 // pred_check
          %p622 = pneg %p192
        $region18: #{tpu_custom_call.1} parent=11 // pred_check_branch
          %624 = sbr.rel (%p622) target = $region20
        $region19: #{tpu_custom_call.1} parent=11 // pred_region
          %s626 = ssub.s32 16, 16
          %627 = vsyncadd [#allocation9], %s626
          %s629 = sshll.u32 [#allocation10], 4
          %s630 = int_to_ptr.vmem [resolvable:$true] %s629
          %632 = dma.hbm_to_vmem [thread:$0]  %s5, 16, %s630, [#allocation9]
        $region20: #{tpu_custom_call.1} parent=11 // pred_fallthru
          _
        // Predicated region
        $region21: #{tpu_custom_call.1} parent=11 // pred_check
          %p633 = pneg %p213
        $region22: #{tpu_custom_call.1} parent=11 // pred_check_branch
          %635 = sbr.rel (%p633) target = $region24
        $region23: #{tpu_custom_call.1} parent=11 // pred_region
          _
        $region24: #{tpu_custom_call.1} parent=11 // pred_fallthru
          _
        // Predicated region
        $region25: #{tpu_custom_call.1} parent=11 // pred_check
          %p636 = pneg %p234
        $region26: #{tpu_custom_call.1} parent=11 // pred_check_branch
          %638 = sbr.rel (%p636) target = $region28
        $region27: #{tpu_custom_call.1} parent=11 // pred_region
          %s640 = ssub.s32 16, 16
          %641 = vsyncadd [#allocation12], %s640
          %s643 = sshll.u32 [#allocation11], 4
          %s644 = int_to_ptr.vmem [resolvable:$true] %s643
          %646 = dma.hbm_to_vmem [thread:$0]  %s7, 16, %s644, [#allocation12]
        $region28: #{tpu_custom_call.1} parent=11 // pred_fallthru
          _
        // Predicated region
        $region29: #{tpu_custom_call.1} parent=11 // pred_check
          %p647 = pneg %p255
        $region30: #{tpu_custom_call.1} parent=11 // pred_check_branch
          %649 = sbr.rel (%p647) target = $region32
        $region31: #{tpu_custom_call.1} parent=11 // pred_region
          _
        $region32: #{tpu_custom_call.1} parent=11 // pred_fallthru
          _
        // Predicated region
        $region33: #{tpu_custom_call.1} parent=11 // pred_check
          %p650 = pneg %p276
        $region34: #{tpu_custom_call.1} parent=11 // pred_check_branch
          %652 = sbr.rel (%p650) target = $region36
        $region35: #{tpu_custom_call.1} parent=11 // pred_region
          %s654 = ssub.s32 16, 16
          %655 = vsyncadd [#allocation12], %s654
          %s657 = sshll.u32 [#allocation13], 4
          %s658 = int_to_ptr.vmem [resolvable:$true] %s657
          %660 = dma.hbm_to_vmem [thread:$0]  %s9, 16, %s658, [#allocation12]
        $region36: #{tpu_custom_call.1} parent=11 // pred_fallthru
          _
        // Predicated region
        $region37: #{tpu_custom_call.1} parent=11 // pred_check
          %p661 = pneg %p297
        $region38: #{tpu_custom_call.1} parent=11 // pred_check_branch
          %663 = sbr.rel (%p661) target = $region40
        $region39: #{tpu_custom_call.1} parent=11 // pred_region
          %s665 = ssub.s32 16, 16
          %666 = vsyncadd [#allocation15], %s665
          %s668 = sshll.u32 [#allocation14], 4
          %s669 = int_to_ptr.vmem [resolvable:$true] %s668
          %671 = dma.hbm_to_vmem [thread:$0]  %s10, 16, %s669, [#allocation15]
        $region40: #{tpu_custom_call.1} parent=11 // pred_fallthru
          _
        // Predicated region
        $region41: #{tpu_custom_call.1} parent=11 // pred_check
          %p672 = pneg %p318
        $region42: #{tpu_custom_call.1} parent=11 // pred_check_branch
          %674 = sbr.rel (%p672) target = $region44
        $region43: #{tpu_custom_call.1} parent=11 // pred_region
          %s676 = ssub.s32 16, 16
          %677 = vsyncadd [#allocation15], %s676
          %s679 = sshll.u32 [#allocation16], 4
          %s680 = int_to_ptr.vmem [resolvable:$true] %s679
          %682 = dma.hbm_to_vmem [thread:$0]  %s11, 16, %s680, [#allocation15]
        $region44: #{tpu_custom_call.1} parent=11 // pred_fallthru
          _
        // Predicated region
        $region45: #{tpu_custom_call.1} parent=11 // pred_check
          %p683 = pneg %p339
        $region46: #{tpu_custom_call.1} parent=11 // pred_check_branch
          %685 = sbr.rel (%p683) target = $region48
        $region47: #{tpu_custom_call.1} parent=11 // pred_region
          %s687 = ssub.s32 512, 512
          %688 = vsyncadd [#allocation18], %s687
          %s689 = sshll.u32 [#allocation17], 4
          %s690 = int_to_ptr.vmem [resolvable:$true] %s689
          %695 = dma.hbm_to_vmem [thread:$0]  %s12, 512, %s690, [#allocation18], 128, 128, 8
        $region48: #{tpu_custom_call.1} parent=11 // pred_fallthru
          _
        // Predicated region
        $region49: #{tpu_custom_call.1} parent=11 // pred_check
          %p696 = pneg %p360
        $region50: #{tpu_custom_call.1} parent=11 // pred_check_branch
          %698 = sbr.rel (%p696) target = $region52
        $region51: #{tpu_custom_call.1} parent=11 // pred_region
          %s700 = ssub.s32 16, 16
          %701 = vsyncadd [#allocation18], %s700
          %s703 = sshll.u32 [#allocation19], 4
          %s704 = int_to_ptr.vmem [resolvable:$true] %s703
          %706 = dma.hbm_to_vmem [thread:$0]  %s13, 16, %s704, [#allocation18]
        $region52: #{tpu_custom_call.1} parent=11 // pred_fallthru
          _
        // Predicated region
        $region53: #{tpu_custom_call.1} parent=11 // pred_check
          %p707 = pneg %p381
        $region54: #{tpu_custom_call.1} parent=11 // pred_check_branch
          %709 = sbr.rel (%p707) target = $region56
        $region55: #{tpu_custom_call.1} parent=11 // pred_region
          %s711 = ssub.s32 512, 512
          %712 = vsyncadd [#allocation21], %s711
          %s713 = sshll.u32 [#allocation20], 4
          %s714 = int_to_ptr.vmem [resolvable:$true] %s713
          %719 = dma.hbm_to_vmem [thread:$0]  %s14, 512, %s714, [#allocation21], 128, 128, 8
        $region56: #{tpu_custom_call.1} parent=11 // pred_fallthru
          _
        // Predicated region
        $region57: #{tpu_custom_call.1} parent=11 // pred_check
          %p720 = pneg %p402
        $region58: #{tpu_custom_call.1} parent=11 // pred_check_branch
          %722 = sbr.rel (%p720) target = $region60
        $region59: #{tpu_custom_call.1} parent=11 // pred_region
          %s724 = ssub.s32 16, 16
          %725 = vsyncadd [#allocation21], %s724
          %s727 = sshll.u32 [#allocation22], 4
          %s728 = int_to_ptr.vmem [resolvable:$true] %s727
          %730 = dma.hbm_to_vmem [thread:$0]  %s15, 16, %s728, [#allocation21]
        $region60: #{tpu_custom_call.1} parent=11 // pred_fallthru
          _
        // Predicated region
        $region61: #{tpu_custom_call.1} parent=11 // pred_check
          %p731 = pneg %p423
        $region62: #{tpu_custom_call.1} parent=11 // pred_check_branch
          %733 = sbr.rel (%p731) target = $region64
        $region63: #{tpu_custom_call.1} parent=11 // pred_region
          %s735 = ssub.s32 512, 512
          %736 = vsyncadd [#allocation24], %s735
          %s737 = sshll.u32 [#allocation23], 4
          %s738 = int_to_ptr.vmem [resolvable:$true] %s737
          %743 = dma.hbm_to_vmem [thread:$0]  %s16, 512, %s738, [#allocation24], 128, 128, 8
        $region64: #{tpu_custom_call.1} parent=11 // pred_fallthru
          _
        // Predicated region
        $region65: #{tpu_custom_call.1} parent=11 // pred_check
          %p744 = pneg %p444
        $region66: #{tpu_custom_call.1} parent=11 // pred_check_branch
          %746 = sbr.rel (%p744) target = $region68
        $region67: #{tpu_custom_call.1} parent=11 // pred_region
          %s748 = ssub.s32 16, 16
          %749 = vsyncadd [#allocation24], %s748
          %s751 = sshll.u32 [#allocation25], 4
          %s752 = int_to_ptr.vmem [resolvable:$true] %s751
          %754 = dma.hbm_to_vmem [thread:$0]  %s17, 16, %s752, [#allocation24]
        $region68: #{tpu_custom_call.1} parent=11 // pred_fallthru
          _
        // Predicated region
        $region69: #{tpu_custom_call.1} parent=11 // pred_check
          %p755 = pneg %p465
        $region70: #{tpu_custom_call.1} parent=11 // pred_check_branch
          %757 = sbr.rel (%p755) target = $region72
        $region71: #{tpu_custom_call.1} parent=11 // pred_region
          %s759 = ssub.s32 16, 16
          %760 = vsyncadd [#allocation27], %s759
          %s762 = sshll.u32 [#allocation26], 4
          %s763 = int_to_ptr.vmem [resolvable:$true] %s762
          %765 = dma.hbm_to_vmem [thread:$0]  %s18, 16, %s763, [#allocation27]
        $region72: #{tpu_custom_call.1} parent=11 // pred_fallthru
          _
        // Predicated region
        $region73: #{tpu_custom_call.1} parent=11 // pred_check
          %p766 = pneg %p486
        $region74: #{tpu_custom_call.1} parent=11 // pred_check_branch
          %768 = sbr.rel (%p766) target = $region76
        $region75: #{tpu_custom_call.1} parent=11 // pred_region
          _
        $region76: #{tpu_custom_call.1} parent=11 // pred_fallthru
          _
        // Predicated region
        $region77: #{tpu_custom_call.1} parent=11 // pred_check
          %p769 = pneg %p507
        $region78: #{tpu_custom_call.1} parent=11 // pred_check_branch
          %771 = sbr.rel (%p769) target = $region80
        $region79: #{tpu_custom_call.1} parent=11 // pred_region
          _
        $region80: #{tpu_custom_call.1} parent=11 // pred_fallthru
          _
        // Predicated region
        $region81: #{tpu_custom_call.1} parent=11 // pred_check
          %p772 = pneg %p528
        $region82: #{tpu_custom_call.1} parent=11 // pred_check_branch
          %774 = sbr.rel (%p772) target = $region84
        $region83: #{tpu_custom_call.1} parent=11 // pred_region
          _
        $region84: #{tpu_custom_call.1} parent=11 // pred_fallthru
          _
        // Predicated region
        $region85: #{tpu_custom_call.1} parent=11 // pred_check
          %p775 = pneg %p549
        $region86: #{tpu_custom_call.1} parent=11 // pred_check_branch
          %777 = sbr.rel (%p775) target = $region88
        $region87: #{tpu_custom_call.1} parent=11 // pred_region
          _
        $region88: #{tpu_custom_call.1} parent=11 // pred_fallthru
          _
        // Predicated region
        $region89: #{tpu_custom_call.1} parent=11 // pred_check
          %p778 = pneg %p570
        $region90: #{tpu_custom_call.1} parent=11 // pred_check_branch
          %780 = sbr.rel (%p778) target = $region92
        $region91: #{tpu_custom_call.1} parent=11 // pred_region
          _
        $region92: #{tpu_custom_call.1} parent=11 // pred_fallthru
          _
      $region12: #{tpu_custom_call.1} parent=5 // pred_fallthru
        _
      %p781 = scmp.lt.s32.totalorder %s46, 2
      // Predicated region
      $region93: #{tpu_custom_call.1} parent=5 // pred_check
        %p782 = pneg %p781
      $region94: #{tpu_custom_call.1} parent=5 // pred_check_branch
        %784 = sbr.rel (%p782) target = $region96
      $region95: #{tpu_custom_call.1} parent=5 // pred_region
        // Predicated region
        $region97: #{tpu_custom_call.1} parent=95 // pred_check
          %p785 = pneg %p66
        $region98: #{tpu_custom_call.1} parent=95 // pred_check_branch
          %787 = sbr.rel (%p785) target = $region100
        $region99: #{tpu_custom_call.1} parent=95 // pred_region
          %s788 = sand.u32 %s56, 1
          %s789 = scalar_lea.sflag [#allocation3], %s788
          %s790 = sand.u32 %s56, 1
          %s791 = smul.addr %s790, 8
          %s792 = scalar_lea.vmem [#allocation2], %s791
          %s794 = ssub.s32 128, 128
          %795 = vsyncadd %s789, %s794
          %s796 = smul.addr %s46, 128
          %s797 = scalar_lea.hbm %s0, %s796
          %s799 = sshll.u32 %s792, 4
          %s800 = int_to_ptr.vmem [resolvable:$true] %s799
          %802 = dma.hbm_to_vmem [thread:$0]  %s797, 128, %s800, %s789
        $region100: #{tpu_custom_call.1} parent=95 // pred_fallthru
          _
        // Predicated region
        $region101: #{tpu_custom_call.1} parent=95 // pred_check
          %p803 = pneg %p92
        $region102: #{tpu_custom_call.1} parent=95 // pred_check_branch
          %805 = sbr.rel (%p803) target = $region104
        $region103: #{tpu_custom_call.1} parent=95 // pred_region
          %p806 = scmp.lt.s32.totalorder %s46, 1
          %s807 = scalar_select %p806, %s46, 1
          %s808 = smul.addr %s807, 2
          %s809 = smul.addr %s808, 8
          %s810 = scalar_lea.vmem %s1, %s809
        $region104: #{tpu_custom_call.1} parent=95 // pred_fallthru
          _
        // Predicated region
        $region105: #{tpu_custom_call.1} parent=95 // pred_check
          %p811 = pneg %p118
        $region106: #{tpu_custom_call.1} parent=95 // pred_check_branch
          %813 = sbr.rel (%p811) target = $region108
        $region107: #{tpu_custom_call.1} parent=95 // pred_region
          %s814 = sand.u32 %s46, 1
          %s815 = scalar_lea.sflag [#allocation6], %s814
          %s816 = sand.u32 %s108, 1
          %s817 = smul.addr %s816, 8
          %s818 = scalar_lea.vmem [#allocation5], %s817
          %s820 = ssub.s32 128, 128
          %821 = vsyncadd %s815, %s820
          %s822 = smul.addr %s46, 128
          %s823 = scalar_lea.hbm %s2, %s822
          %s825 = sshll.u32 %s818, 4
          %s826 = int_to_ptr.vmem [resolvable:$true] %s825
          %828 = dma.hbm_to_vmem [thread:$0]  %s823, 128, %s826, %s815
        $region108: #{tpu_custom_call.1} parent=95 // pred_fallthru
          _
        // Predicated region
        $region109: #{tpu_custom_call.1} parent=95 // pred_check
          %p829 = pneg %p144
        $region110: #{tpu_custom_call.1} parent=95 // pred_check_branch
          %831 = sbr.rel (%p829) target = $region112
        $region111: #{tpu_custom_call.1} parent=95 // pred_region
          %s832 = sand.u32 %s46, 1
          %s833 = scalar_lea.sflag [#allocation6], %s832
          %s834 = sand.u32 %s134, 1
          %s835 = smul.addr %s834, 8
          %s836 = scalar_lea.vmem [#allocation7], %s835
          %s838 = ssub.s32 128, 128
          %839 = vsyncadd %s833, %s838
          %s840 = smul.addr %s46, 128
          %s841 = scalar_lea.hbm %s3, %s840
          %s843 = sshll.u32 %s836, 4
          %s844 = int_to_ptr.vmem [resolvable:$true] %s843
          %846 = dma.hbm_to_vmem [thread:$0]  %s841, 128, %s844, %s833
        $region112: #{tpu_custom_call.1} parent=95 // pred_fallthru
          _
      $region96: #{tpu_custom_call.1} parent=5 // pred_fallthru
        _
      %p847 = scmp.le.s32.totalorder 1, %s46
      %p848 = scmp.lt.s32.totalorder %s46, 3
      %p849 = pnand %p847, %p848
      %p850 = pneg %p849
      // Predicated region
      $region113: #{tpu_custom_call.1} parent=5 // pred_check
        _
      $region114: #{tpu_custom_call.1} parent=5 // pred_check_branch
        %852 = sbr.rel (%p849) target = $region116
      $region115: #{tpu_custom_call.1} parent=5 // pred_region
        %s853 = ssub.s32 %s46, 1
        %s854 = sand.u32 %s59, 1
        %s855 = scalar_lea.sflag [#allocation3], %s854
        %s856 = sand.u32 %s59, 1
        %s857 = smul.addr %s856, 8
        %s858 = scalar_lea.vmem [#allocation2], %s857
        // Predicated region
        $region117: #{tpu_custom_call.1} parent=115 // pred_check
          %p859 = pneg %p72
        $region118: #{tpu_custom_call.1} parent=115 // pred_check_branch
          %861 = sbr.rel (%p859) target = $region120
        $region119: #{tpu_custom_call.1} parent=115 // pred_region
          %862 = dma.done %s855, 128
        $region120: #{tpu_custom_call.1} parent=115 // pred_fallthru
          _
        %s863 = sand.u32 %s51, 1
        %s864 = scalar_lea.sflag [#allocation6], %s863
        %s865 = sand.u32 %s111, 1
        %s866 = smul.addr %s865, 8
        %s867 = scalar_lea.vmem [#allocation5], %s866
        // Predicated region
        $region121: #{tpu_custom_call.1} parent=115 // pred_check
          %p868 = pneg %p124
        $region122: #{tpu_custom_call.1} parent=115 // pred_check_branch
          %870 = sbr.rel (%p868) target = $region124
        $region123: #{tpu_custom_call.1} parent=115 // pred_region
          %871 = dma.done %s864, 128
        $region124: #{tpu_custom_call.1} parent=115 // pred_fallthru
          _
        %s872 = sand.u32 %s51, 1
        %s873 = scalar_lea.sflag [#allocation6], %s872
        %s874 = sand.u32 %s137, 1
        %s875 = smul.addr %s874, 8
        %s876 = scalar_lea.vmem [#allocation7], %s875
        // Predicated region
        $region125: #{tpu_custom_call.1} parent=115 // pred_check
          %p877 = pneg %p150
        $region126: #{tpu_custom_call.1} parent=115 // pred_check_branch
          %879 = sbr.rel (%p877) target = $region128
        $region127: #{tpu_custom_call.1} parent=115 // pred_region
          %880 = dma.done %s873, 128
        $region128: #{tpu_custom_call.1} parent=115 // pred_fallthru
          _
        // Predicated region
        $region129: #{tpu_custom_call.1} parent=115 // pred_check
          %p881 = pneg %p171
        $region130: #{tpu_custom_call.1} parent=115 // pred_check_branch
          %883 = sbr.rel (%p881) target = $region132
        $region131: #{tpu_custom_call.1} parent=115 // pred_region
          %884 = dma.done [#allocation9], 16
        $region132: #{tpu_custom_call.1} parent=115 // pred_fallthru
          _
        // Predicated region
        $region133: #{tpu_custom_call.1} parent=115 // pred_check
          %p885 = pneg %p192
        $region134: #{tpu_custom_call.1} parent=115 // pred_check_branch
          %887 = sbr.rel (%p885) target = $region136
        $region135: #{tpu_custom_call.1} parent=115 // pred_region
          %888 = dma.done [#allocation9], 16
        $region136: #{tpu_custom_call.1} parent=115 // pred_fallthru
          _
        // Predicated region
        $region137: #{tpu_custom_call.1} parent=115 // pred_check
          %p889 = pneg %p234
        $region138: #{tpu_custom_call.1} parent=115 // pred_check_branch
          %891 = sbr.rel (%p889) target = $region140
        $region139: #{tpu_custom_call.1} parent=115 // pred_region
          %892 = dma.done [#allocation12], 16
        $region140: #{tpu_custom_call.1} parent=115 // pred_fallthru
          _
        // Predicated region
        $region141: #{tpu_custom_call.1} parent=115 // pred_check
          %p893 = pneg %p276
        $region142: #{tpu_custom_call.1} parent=115 // pred_check_branch
          %895 = sbr.rel (%p893) target = $region144
        $region143: #{tpu_custom_call.1} parent=115 // pred_region
          %896 = dma.done [#allocation12], 16
        $region144: #{tpu_custom_call.1} parent=115 // pred_fallthru
          _
        // Predicated region
        $region145: #{tpu_custom_call.1} parent=115 // pred_check
          %p897 = pneg %p297
        $region146: #{tpu_custom_call.1} parent=115 // pred_check_branch
          %899 = sbr.rel (%p897) target = $region148
        $region147: #{tpu_custom_call.1} parent=115 // pred_region
          %900 = dma.done [#allocation15], 16
        $region148: #{tpu_custom_call.1} parent=115 // pred_fallthru
          _
        // Predicated region
        $region149: #{tpu_custom_call.1} parent=115 // pred_check
          %p901 = pneg %p318
        $region150: #{tpu_custom_call.1} parent=115 // pred_check_branch
          %903 = sbr.rel (%p901) target = $region152
        $region151: #{tpu_custom_call.1} parent=115 // pred_region
          %904 = dma.done [#allocation15], 16
        $region152: #{tpu_custom_call.1} parent=115 // pred_fallthru
          _
        // Predicated region
        $region153: #{tpu_custom_call.1} parent=115 // pred_check
          %p905 = pneg %p339
        $region154: #{tpu_custom_call.1} parent=115 // pred_check_branch
          %907 = sbr.rel (%p905) target = $region156
        $region155: #{tpu_custom_call.1} parent=115 // pred_region
          %908 = dma.done [#allocation18], 512
        $region156: #{tpu_custom_call.1} parent=115 // pred_fallthru
          _
        // Predicated region
        $region157: #{tpu_custom_call.1} parent=115 // pred_check
          %p909 = pneg %p360
        $region158: #{tpu_custom_call.1} parent=115 // pred_check_branch
          %911 = sbr.rel (%p909) target = $region160
        $region159: #{tpu_custom_call.1} parent=115 // pred_region
          %912 = dma.done [#allocation18], 16
        $region160: #{tpu_custom_call.1} parent=115 // pred_fallthru
          _
        // Predicated region
        $region161: #{tpu_custom_call.1} parent=115 // pred_check
          %p913 = pneg %p381
        $region162: #{tpu_custom_call.1} parent=115 // pred_check_branch
          %915 = sbr.rel (%p913) target = $region164
        $region163: #{tpu_custom_call.1} parent=115 // pred_region
          %916 = dma.done [#allocation21], 512
        $region164: #{tpu_custom_call.1} parent=115 // pred_fallthru
          _
        // Predicated region
        $region165: #{tpu_custom_call.1} parent=115 // pred_check
          %p917 = pneg %p402
        $region166: #{tpu_custom_call.1} parent=115 // pred_check_branch
          %919 = sbr.rel (%p917) target = $region168
        $region167: #{tpu_custom_call.1} parent=115 // pred_region
          %920 = dma.done [#allocation21], 16
        $region168: #{tpu_custom_call.1} parent=115 // pred_fallthru
          _
        // Predicated region
        $region169: #{tpu_custom_call.1} parent=115 // pred_check
          %p921 = pneg %p423
        $region170: #{tpu_custom_call.1} parent=115 // pred_check_branch
          %923 = sbr.rel (%p921) target = $region172
        $region171: #{tpu_custom_call.1} parent=115 // pred_region
          %924 = dma.done [#allocation24], 512
        $region172: #{tpu_custom_call.1} parent=115 // pred_fallthru
          _
        // Predicated region
        $region173: #{tpu_custom_call.1} parent=115 // pred_check
          %p925 = pneg %p444
        $region174: #{tpu_custom_call.1} parent=115 // pred_check_branch
          %927 = sbr.rel (%p925) target = $region176
        $region175: #{tpu_custom_call.1} parent=115 // pred_region
          %928 = dma.done [#allocation24], 16
        $region176: #{tpu_custom_call.1} parent=115 // pred_fallthru
          _
        // Predicated region
        $region177: #{tpu_custom_call.1} parent=115 // pred_check
          %p929 = pneg %p465
        $region178: #{tpu_custom_call.1} parent=115 // pred_check_branch
          %931 = sbr.rel (%p929) target = $region180
        $region179: #{tpu_custom_call.1} parent=115 // pred_region
          %932 = dma.done [#allocation27], 16
        $region180: #{tpu_custom_call.1} parent=115 // pred_fallthru
          _
        %s933 = sand.u32 %s59, 1
        %s934 = scalar_lea.sflag [#allocation3], %s933
        %s935 = sand.u32 %s59, 1
        %s936 = smul.addr %s935, 8
        %s937 = scalar_lea.vmem [#allocation2], %s936
        %p938 = pneg %p72
        %p939 = pneg %p69
        %p940 = scmp.lt.s32.totalorder %s51, 1
        %s941 = scalar_select %p940, %s51, 1
        %s942 = smul.addr %s941, 2
        %s943 = smul.addr %s942, 8
        %s944 = scalar_lea.vmem %s1, %s943
        %p945 = pneg %p98
        %p946 = pneg %p95
        %s947 = sand.u32 %s51, 1
        %s948 = scalar_lea.sflag [#allocation6], %s947
        %s949 = sand.u32 %s111, 1
        %s950 = smul.addr %s949, 8
        %s951 = scalar_lea.vmem [#allocation5], %s950
        %p952 = pneg %p124
        %p953 = pneg %p121
        %s954 = sand.u32 %s51, 1
        %s955 = scalar_lea.sflag [#allocation6], %s954
        %s956 = sand.u32 %s137, 1
        %s957 = smul.addr %s956, 8
        %s958 = scalar_lea.vmem [#allocation7], %s957
        %p959 = pneg %p150
        %p960 = pneg %p147
        %p961 = pneg %p171
        %p962 = pneg %p168
        %p963 = pneg %p192
        %p964 = pneg %p189
        %p965 = pneg %p213
        %p966 = pneg %p210
        %p967 = pneg %p234
        %p968 = pneg %p231
        %p969 = pneg %p255
        %p970 = pneg %p252
        %p971 = pneg %p276
        %p972 = pneg %p273
        %p973 = pneg %p297
        %p974 = pneg %p294
        %p975 = pneg %p318
        %p976 = pneg %p315
        %p977 = pneg %p339
        %p978 = pneg %p336
        %p979 = pneg %p360
        %p980 = pneg %p357
        %p981 = pneg %p381
        %p982 = pneg %p378
        %p983 = pneg %p402
        %p984 = pneg %p399
        %p985 = pneg %p423
        %p986 = pneg %p420
        %p987 = pneg %p444
        %p988 = pneg %p441
        %p989 = pneg %p465
        %p990 = pneg %p462
        %p991 = pneg %p486
        %p992 = pneg %p483
        %p993 = pneg %p507
        %p994 = pneg %p504
        %p995 = pneg %p528
        %p996 = pneg %p525
        %p997 = pneg %p549
        %p998 = pneg %p546
        %p999 = pneg %p570
        %p1000 = pneg %p567
        %p1001 = pneg %p596
        %p1002 = pneg %p593
        %s1003 = sand.u32 %s583, 1
        %s1004 = scalar_lea.sflag [#allocation4], %s1003
        %s1005 = sand.u32 %s583, 1
        %s1006 = smul.addr %s1005, 8
        %s1007 = scalar_lea.vmem [#allocation28], %s1006
        %p1008 = scmp.lt.s32.totalorder %s51, 1
        %s1009 = scalar_select %p1008, %s51, 1
        %s1010 = smul.addr %s1009, 2
        %s1011 = smul.addr %s1010, 8
        %s1012 = scalar_lea.vmem %s1, %s1011
        %v1013 = vld [vmem:[%s858] sm:$0xff]
        %v1014 = vld [vmem:[%s1012] sm:$0xff]
        %v1015 = vld [vmem:[%s1012 + $0x8] sm:$0xff]
        %v1016 = vld [vmem:[#allocation8] sm:$0x1]
        %v1017 = vld [vmem:[#allocation10] sm:$0x1]
        %vm1018 = vcmask 261120
        %v1019 = vsel %vm1018, %v1013, 0.0
        %1020 = vadd.xlane.f32.xlu0 %v1019
        %v1021 = vpop.xlane.xlu0 %1020
        %v1022 = vrcp.pop 32.0
        %v1023 = vmul.f32 %v1021, %v1022
        %v1024 = vsub.f32 %v1013, %v1023
        %v1025 = vmul.f32 %v1024, %v1024
        %v1026 = vsel %vm1018, %v1025, 0.0
        %1027 = vadd.xlane.f32.xlu0 %v1026
        %v1028 = vpop.xlane.xlu0 %1027
        %v1029 = vmul.f32 %v1028, %v1022
        %v1030 = vrsqrt.pop %v1029
        %v1031 = vmul.f32 %v1029, %v1030
        %vm1032 = vcmp.eq.f32.partialorder %v1029, inf
        %v1033 = vsel %vm1032, %v1029, %v1031
        %vm1034 = vcmp.eq.f32.partialorder %v1029, 0.0
        %v1035 = vand.u32 %v1029, 2147483648
        %v1036 = vsel %vm1034, %v1035, %v1033
        %v1037 = vadd.f32 %v1036, 1e-06
        %v1038 = vrcp.pop %v1037
        %v1040 = vlaneseq
        %v1041 = vshrl.u32 %v1040, 7
        %v1042 = vsub.s32 0, %v1041
        %v1043 = vrot.slane %v1016, %v1042
        %v1045 = vmul.f32 %v1043, %v1024
        %v1046 = vmul.f32 %v1045, %v1038
        %v1048 = vlaneseq
        %v1049 = vshrl.u32 %v1048, 7
        %v1050 = vsub.s32 0, %v1049
        %v1051 = vrot.slane %v1017, %v1050
        %v1053 = vadd.f32 %v1046, %v1051
        %v1054 = vld [vmem:[%s6] sm:$0xff]
        %v1055 = vld [vmem:[%s6 + $0x8] sm:$0xff]
        %v1056 = vld [vmem:[%s6 + $0x10] sm:$0xff]
        %v1057 = vld [vmem:[%s6 + $0x18] sm:$0xff]
        %v1058 = vld [vmem:[#allocation11] sm:$0x1]
        %v1060 = vlaneseq
        %v1061 = vshrl.u32 %v1060, 7
        %v1062 = vsub.s32 0, %v1061
        %v1063 = vrot.slane %v1058, %v1062
        %v1066 = vsel %vm1018, %v1053, 0
        %1068 = vmatprep.subr.mxu0 0.0
        %1069 = vmatpush1.msra.mxu0 0.0
        %1070 = vmatprep.subr.mxu0 0.0
        %1071 = vmatpush1.msra.mxu0 0.0
        %1072 = vmatprep.subr.mxu0 0.0
        %1073 = vmatpush1.msra.mxu0 0.0
        %1074 = vmatprep.subr.mxu0 0.0
        %1075 = vmatpush1.msra.mxu0 0.0
        %1076 = vmatprep.subr.mxu0 0.0
        %1077 = vmatpush1.msra.mxu0 0.0
        %1078 = vmatprep.subr.mxu0 0.0
        %1079 = vmatpush1.msra.mxu0 0.0
        %1080 = vmatprep.subr.mxu0 0.0
        %1081 = vmatpush1.msra.mxu0 0.0
        %1082 = vmatprep.subr.mxu0 0.0
        %1083 = vmatpush1.msra.mxu0 0.0
        %1084 = vmatprep.subr.mxu0 0.0
        %1085 = vmatpush1.msra.mxu0 0.0
        %1086 = vmatprep.subr.mxu0 0.0
        %1087 = vmatpush1.msra.mxu0 0.0
        %1088 = vmatprep.subr.mxu0 0.0
        %1089 = vmatpush1.msra.mxu0 0.0
        %1090 = vmatprep.subr.mxu0 0.0
        %1091 = vmatpush1.msra.mxu0 0.0
        %1092 = vmatprep.subr.mxu0 0.0
        %1093 = vmatpush1.msra.mxu0 %v1057
        %1094 = vmatprep.subr.mxu0 0.0
        %1095 = vmatpush1.msra.mxu0 %v1056
        %1096 = vmatprep.subr.mxu0 0.0
        %1097 = vmatpush1.msra.mxu0 %v1055
        %1098 = vmatprep.subr.mxu0 0.0
        %1099 = vmatpush1.msra.mxu0 %v1054
        %1100 = vmatprep.subr.mxu0 0.0
        %1101 = vmatpush2.msra.mxu0 0.0
        %1102 = vmatprep.subr.mxu0 0.0
        %1103 = vmatpush2.msra.mxu0 0.0
        %1104 = vmatprep.subr.mxu0 0.0
        %1105 = vmatpush2.msra.mxu0 0.0
        %1106 = vmatprep.subr.mxu0 0.0
        %1107 = vmatpush2.msra.mxu0 0.0
        %1108 = vmatprep.subr.mxu0 0.0
        %1109 = vmatpush2.msra.mxu0 0.0
        %1110 = vmatprep.subr.mxu0 0.0
        %1111 = vmatpush2.msra.mxu0 0.0
        %1112 = vmatprep.subr.mxu0 0.0
        %1113 = vmatpush2.msra.mxu0 0.0
        %1114 = vmatprep.subr.mxu0 0.0
        %1115 = vmatpush2.msra.mxu0 0.0
        %1116 = vmatprep.subr.mxu0 0.0
        %1117 = vmatpush2.msra.mxu0 0.0
        %1118 = vmatprep.subr.mxu0 0.0
        %1119 = vmatpush2.msra.mxu0 0.0
        %1120 = vmatprep.subr.mxu0 0.0
        %1121 = vmatpush2.msra.mxu0 0.0
        %1122 = vmatprep.subr.mxu0 0.0
        %1123 = vmatpush2.msra.mxu0 0.0
        %1124 = vmatprep.subr.mxu0 0.0
        %1125 = vmatpush2.msra.mxu0 0.0
        %1126 = vmatprep.subr.mxu0 0.0
        %1127 = vmatpush2.msra.mxu0 0.0
        %1128 = vmatprep.subr.mxu0 0.0
        %1129 = vmatpush2.msra.mxu0 0.0
        %1130 = vmatprep.subr.mxu0 0.0
        %1131 = vmatpush2.msra.mxu0 0.0
        %1132 = vmatprep.mubr.f32.mxu0 0.0
        %1133 = vmatmul.mubr.f32.gmra.mxu0 %v1066
        %v1134 = vpop.f32.mrf.mxu0
        %v1135 = vadd.f32 %v1063, %v1134
        %v1136 = vpop.f32.mrf.mxu0
        %1137 = vdwg.mxu0
        %v1138 = vld [vmem:[%s867] sm:$0xff]
        %v1139 = vld [vmem:[%s8] sm:$0xff]
        %v1140 = vld [vmem:[%s8 + $0x8] sm:$0xff]
        %v1141 = vld [vmem:[%s8 + $0x10] sm:$0xff]
        %v1142 = vld [vmem:[%s8 + $0x18] sm:$0xff]
        %v1143 = vld [vmem:[#allocation13] sm:$0x1]
        %1145 = vrot.lane.b32.xlu0 %v1135, 120
        %v1146 = vpop.permute.xlu0 %1145
        %1147 = vrot.lane.b32.xlu0 %v1135, 112
        %v1148 = vpop.permute.xlu0 %1147
        %1149 = vrot.lane.b32.xlu0 %v1135, 104
        %v1150 = vpop.permute.xlu0 %1149
        %1151 = vrot.lane.b32.xlu0 %v1135, 96
        %v1152 = vpop.permute.xlu0 %1151
        %vm1153 = vcmask 64512
        %v1154 = vsel %vm1153, %v1135, 0
        %v1156 = vsel %vm1153, %v1152, 0
        %1158 = vmatprep.subr.mxu0 0.0
        %1159 = vmatpush1.xpose.msra.mxu0 0.0
        %1160 = vmatprep.subr.mxu0 0.0
        %1161 = vmatpush1.xpose.msra.mxu0 0.0
        %1162 = vmatprep.subr.mxu0 0.0
        %1163 = vmatpush1.xpose.msra.mxu0 0.0
        %1164 = vmatprep.subr.mxu0 0.0
        %1165 = vmatpush1.xpose.msra.mxu0 0.0
        %1166 = vmatprep.subr.mxu0 0.0
        %1167 = vmatpush1.xpose.msra.mxu0 0.0
        %1168 = vmatprep.subr.mxu0 0.0
        %1169 = vmatpush1.xpose.msra.mxu0 0.0
        %1170 = vmatprep.subr.mxu0 0.0
        %1171 = vmatpush1.xpose.msra.mxu0 0.0
        %1172 = vmatprep.subr.mxu0 0.0
        %1173 = vmatpush1.xpose.msra.mxu0 0.0
        %1174 = vmatprep.subr.mxu0 0.0
        %1175 = vmatpush1.xpose.msra.mxu0 0.0
        %1176 = vmatprep.subr.mxu0 0.0
        %1177 = vmatpush1.xpose.msra.mxu0 0.0
        %1178 = vmatprep.subr.mxu0 0.0
        %1179 = vmatpush1.xpose.msra.mxu0 0.0
        %1180 = vmatprep.subr.mxu0 0.0
        %1181 = vmatpush1.xpose.msra.mxu0 0.0
        %1182 = vmatprep.subr.mxu0 0.0
        %1183 = vmatpush1.xpose.msra.mxu0 0.0
        %1184 = vmatprep.subr.mxu0 0.0
        %1185 = vmatpush1.xpose.msra.mxu0 0.0
        %1186 = vmatprep.subr.mxu0 0.0
        %1187 = vmatpush1.xpose.msra.mxu0 0.0
        %1188 = vmatprep.subr.mxu0 0.0
        %1189 = vmatpush1.xpose.msra.mxu0 %v1156
        %1190 = vmatprep.subr.mxu0 0.0
        %1191 = vmatpush2.xpose.msra.mxu0 0.0
        %1192 = vmatprep.subr.mxu0 0.0
        %1193 = vmatpush2.xpose.msra.mxu0 0.0
        %1194 = vmatprep.subr.mxu0 0.0
        %1195 = vmatpush2.xpose.msra.mxu0 0.0
        %1196 = vmatprep.subr.mxu0 0.0
        %1197 = vmatpush2.xpose.msra.mxu0 0.0
        %1198 = vmatprep.subr.mxu0 0.0
        %1199 = vmatpush2.xpose.msra.mxu0 0.0
        %1200 = vmatprep.subr.mxu0 0.0
        %1201 = vmatpush2.xpose.msra.mxu0 0.0
        %1202 = vmatprep.subr.mxu0 0.0
        %1203 = vmatpush2.xpose.msra.mxu0 0.0
        %1204 = vmatprep.subr.mxu0 0.0
        %1205 = vmatpush2.xpose.msra.mxu0 0.0
        %1206 = vmatprep.subr.mxu0 0.0
        %1207 = vmatpush2.xpose.msra.mxu0 0.0
        %1208 = vmatprep.subr.mxu0 0.0
        %1209 = vmatpush2.xpose.msra.mxu0 0.0
        %1210 = vmatprep.subr.mxu0 0.0
        %1211 = vmatpush2.xpose.msra.mxu0 0.0
        %1212 = vmatprep.subr.mxu0 0.0
        %1213 = vmatpush2.xpose.msra.mxu0 0.0
        %1214 = vmatprep.subr.mxu0 0.0
        %1215 = vmatpush2.xpose.msra.mxu0 0.0
        %1216 = vmatprep.subr.mxu0 0.0
        %1217 = vmatpush2.xpose.msra.mxu0 0.0
        %1218 = vmatprep.subr.mxu0 0.0
        %1219 = vmatpush2.xpose.msra.mxu0 0.0
        %1220 = vmatprep.subr.mxu0 0.0
        %1221 = vmatpush2.xpose.msra.mxu0 0.0
        %1222 = vmatprep.mubr.f32.mxu0 0.0
        %1223 = vmatmul.mubr.f32.gmra.mxu0 %v1154
        %v1224 = vpop.f32.mrf.mxu0
        %v1225 = vadd.f32 %v1138, %v1224
        %v1226 = vpop.f32.mrf.mxu0
        %1227 = vdwg.mxu0
        %1228 = vrot.lane.b32.xlu0 %v1146, 96
        %v1229 = vpop.permute.xlu0 %1228
        %v1230 = vsel %vm1153, %v1146, 0
        %v1232 = vsel %vm1153, %v1229, 0
        %1234 = vmatprep.subr.mxu0 0.0
        %1235 = vmatpush1.xpose.msra.mxu0 0.0
        %1236 = vmatprep.subr.mxu0 0.0
        %1237 = vmatpush1.xpose.msra.mxu0 0.0
        %1238 = vmatprep.subr.mxu0 0.0
        %1239 = vmatpush1.xpose.msra.mxu0 0.0
        %1240 = vmatprep.subr.mxu0 0.0
        %1241 = vmatpush1.xpose.msra.mxu0 0.0
        %1242 = vmatprep.subr.mxu0 0.0
        %1243 = vmatpush1.xpose.msra.mxu0 0.0
        %1244 = vmatprep.subr.mxu0 0.0
        %1245 = vmatpush1.xpose.msra.mxu0 0.0
        %1246 = vmatprep.subr.mxu0 0.0
        %1247 = vmatpush1.xpose.msra.mxu0 0.0
        %1248 = vmatprep.subr.mxu0 0.0
        %1249 = vmatpush1.xpose.msra.mxu0 0.0
        %1250 = vmatprep.subr.mxu0 0.0
        %1251 = vmatpush1.xpose.msra.mxu0 0.0
        %1252 = vmatprep.subr.mxu0 0.0
        %1253 = vmatpush1.xpose.msra.mxu0 0.0
        %1254 = vmatprep.subr.mxu0 0.0
        %1255 = vmatpush1.xpose.msra.mxu0 0.0
        %1256 = vmatprep.subr.mxu0 0.0
        %1257 = vmatpush1.xpose.msra.mxu0 0.0
        %1258 = vmatprep.subr.mxu0 0.0
        %1259 = vmatpush1.xpose.msra.mxu0 0.0
        %1260 = vmatprep.subr.mxu0 0.0
        %1261 = vmatpush1.xpose.msra.mxu0 0.0
        %1262 = vmatprep.subr.mxu0 0.0
        %1263 = vmatpush1.xpose.msra.mxu0 0.0
        %1264 = vmatprep.subr.mxu0 0.0
        %1265 = vmatpush1.xpose.msra.mxu0 %v1232
        %1266 = vmatprep.subr.mxu0 0.0
        %1267 = vmatpush2.xpose.msra.mxu0 0.0
        %1268 = vmatprep.subr.mxu0 0.0
        %1269 = vmatpush2.xpose.msra.mxu0 0.0
        %1270 = vmatprep.subr.mxu0 0.0
        %1271 = vmatpush2.xpose.msra.mxu0 0.0
        %1272 = vmatprep.subr.mxu0 0.0
        %1273 = vmatpush2.xpose.msra.mxu0 0.0
        %1274 = vmatprep.subr.mxu0 0.0
        %1275 = vmatpush2.xpose.msra.mxu0 0.0
        %1276 = vmatprep.subr.mxu0 0.0
        %1277 = vmatpush2.xpose.msra.mxu0 0.0
        %1278 = vmatprep.subr.mxu0 0.0
        %1279 = vmatpush2.xpose.msra.mxu0 0.0
        %1280 = vmatprep.subr.mxu0 0.0
        %1281 = vmatpush2.xpose.msra.mxu0 0.0
        %1282 = vmatprep.subr.mxu0 0.0
        %1283 = vmatpush2.xpose.msra.mxu0 0.0
        %1284 = vmatprep.subr.mxu0 0.0
        %1285 = vmatpush2.xpose.msra.mxu0 0.0
        %1286 = vmatprep.subr.mxu0 0.0
        %1287 = vmatpush2.xpose.msra.mxu0 0.0
        %1288 = vmatprep.subr.mxu0 0.0
        %1289 = vmatpush2.xpose.msra.mxu0 0.0
        %1290 = vmatprep.subr.mxu0 0.0
        %1291 = vmatpush2.xpose.msra.mxu0 0.0
        %1292 = vmatprep.subr.mxu0 0.0
        %1293 = vmatpush2.xpose.msra.mxu0 0.0
        %1294 = vmatprep.subr.mxu0 0.0
        %1295 = vmatpush2.xpose.msra.mxu0 0.0
        %1296 = vmatprep.subr.mxu0 0.0
        %1297 = vmatpush2.xpose.msra.mxu0 0.0
        %1298 = vmatprep.mubr.f32.mxu0 0.0
        %1299 = vmatmul.mubr.f32.gmra.mxu0 %v1230
        %v1300 = vpop.f32.mrf.mxu0
        %v1301 = vadd.f32 %v1138, %v1300
        %v1302 = vpop.f32.mrf.mxu0
        %1303 = vdwg.mxu0
        %1304 = vrot.lane.b32.xlu0 %v1148, 96
        %v1305 = vpop.permute.xlu0 %1304
        %v1306 = vsel %vm1153, %v1148, 0
        %v1308 = vsel %vm1153, %v1305, 0
        %1310 = vmatprep.subr.mxu0 0.0
        %1311 = vmatpush1.xpose.msra.mxu0 0.0
        %1312 = vmatprep.subr.mxu0 0.0
        %1313 = vmatpush1.xpose.msra.mxu0 0.0
        %1314 = vmatprep.subr.mxu0 0.0
        %1315 = vmatpush1.xpose.msra.mxu0 0.0
        %1316 = vmatprep.subr.mxu0 0.0
        %1317 = vmatpush1.xpose.msra.mxu0 0.0
        %1318 = vmatprep.subr.mxu0 0.0
        %1319 = vmatpush1.xpose.msra.mxu0 0.0
        %1320 = vmatprep.subr.mxu0 0.0
        %1321 = vmatpush1.xpose.msra.mxu0 0.0
        %1322 = vmatprep.subr.mxu0 0.0
        %1323 = vmatpush1.xpose.msra.mxu0 0.0
        %1324 = vmatprep.subr.mxu0 0.0
        %1325 = vmatpush1.xpose.msra.mxu0 0.0
        %1326 = vmatprep.subr.mxu0 0.0
        %1327 = vmatpush1.xpose.msra.mxu0 0.0
        %1328 = vmatprep.subr.mxu0 0.0
        %1329 = vmatpush1.xpose.msra.mxu0 0.0
        %1330 = vmatprep.subr.mxu0 0.0
        %1331 = vmatpush1.xpose.msra.mxu0 0.0
        %1332 = vmatprep.subr.mxu0 0.0
        %1333 = vmatpush1.xpose.msra.mxu0 0.0
        %1334 = vmatprep.subr.mxu0 0.0
        %1335 = vmatpush1.xpose.msra.mxu0 0.0
        %1336 = vmatprep.subr.mxu0 0.0
        %1337 = vmatpush1.xpose.msra.mxu0 0.0
        %1338 = vmatprep.subr.mxu0 0.0
        %1339 = vmatpush1.xpose.msra.mxu0 0.0
        %1340 = vmatprep.subr.mxu0 0.0
        %1341 = vmatpush1.xpose.msra.mxu0 %v1308
        %1342 = vmatprep.subr.mxu0 0.0
        %1343 = vmatpush2.xpose.msra.mxu0 0.0
        %1344 = vmatprep.subr.mxu0 0.0
        %1345 = vmatpush2.xpose.msra.mxu0 0.0
        %1346 = vmatprep.subr.mxu0 0.0
        %1347 = vmatpush2.xpose.msra.mxu0 0.0
        %1348 = vmatprep.subr.mxu0 0.0
        %1349 = vmatpush2.xpose.msra.mxu0 0.0
        %1350 = vmatprep.subr.mxu0 0.0
        %1351 = vmatpush2.xpose.msra.mxu0 0.0
        %1352 = vmatprep.subr.mxu0 0.0
        %1353 = vmatpush2.xpose.msra.mxu0 0.0
        %1354 = vmatprep.subr.mxu0 0.0
        %1355 = vmatpush2.xpose.msra.mxu0 0.0
        %1356 = vmatprep.subr.mxu0 0.0
        %1357 = vmatpush2.xpose.msra.mxu0 0.0
        %1358 = vmatprep.subr.mxu0 0.0
        %1359 = vmatpush2.xpose.msra.mxu0 0.0
        %1360 = vmatprep.subr.mxu0 0.0
        %1361 = vmatpush2.xpose.msra.mxu0 0.0
        %1362 = vmatprep.subr.mxu0 0.0
        %1363 = vmatpush2.xpose.msra.mxu0 0.0
        %1364 = vmatprep.subr.mxu0 0.0
        %1365 = vmatpush2.xpose.msra.mxu0 0.0
        %1366 = vmatprep.subr.mxu0 0.0
        %1367 = vmatpush2.xpose.msra.mxu0 0.0
        %1368 = vmatprep.subr.mxu0 0.0
        %1369 = vmatpush2.xpose.msra.mxu0 0.0
        %1370 = vmatprep.subr.mxu0 0.0
        %1371 = vmatpush2.xpose.msra.mxu0 0.0
        %1372 = vmatprep.subr.mxu0 0.0
        %1373 = vmatpush2.xpose.msra.mxu0 0.0
        %1374 = vmatprep.mubr.f32.mxu0 0.0
        %1375 = vmatmul.mubr.f32.gmra.mxu0 %v1306
        %v1376 = vpop.f32.mrf.mxu0
        %v1377 = vadd.f32 %v1138, %v1376
        %v1378 = vpop.f32.mrf.mxu0
        %1379 = vdwg.mxu0
        %1380 = vrot.lane.b32.xlu0 %v1150, 96
        %v1381 = vpop.permute.xlu0 %1380
        %v1382 = vsel %vm1153, %v1150, 0
        %v1384 = vsel %vm1153, %v1381, 0
        %1386 = vmatprep.subr.mxu0 0.0
        %1387 = vmatpush1.xpose.msra.mxu0 0.0
        %1388 = vmatprep.subr.mxu0 0.0
        %1389 = vmatpush1.xpose.msra.mxu0 0.0
        %1390 = vmatprep.subr.mxu0 0.0
        %1391 = vmatpush1.xpose.msra.mxu0 0.0
        %1392 = vmatprep.subr.mxu0 0.0
        %1393 = vmatpush1.xpose.msra.mxu0 0.0
        %1394 = vmatprep.subr.mxu0 0.0
        %1395 = vmatpush1.xpose.msra.mxu0 0.0
        %1396 = vmatprep.subr.mxu0 0.0
        %1397 = vmatpush1.xpose.msra.mxu0 0.0
        %1398 = vmatprep.subr.mxu0 0.0
        %1399 = vmatpush1.xpose.msra.mxu0 0.0
        %1400 = vmatprep.subr.mxu0 0.0
        %1401 = vmatpush1.xpose.msra.mxu0 0.0
        %1402 = vmatprep.subr.mxu0 0.0
        %1403 = vmatpush1.xpose.msra.mxu0 0.0
        %1404 = vmatprep.subr.mxu0 0.0
        %1405 = vmatpush1.xpose.msra.mxu0 0.0
        %1406 = vmatprep.subr.mxu0 0.0
        %1407 = vmatpush1.xpose.msra.mxu0 0.0
        %1408 = vmatprep.subr.mxu0 0.0
        %1409 = vmatpush1.xpose.msra.mxu0 0.0
        %1410 = vmatprep.subr.mxu0 0.0
        %1411 = vmatpush1.xpose.msra.mxu0 0.0
        %1412 = vmatprep.subr.mxu0 0.0
        %1413 = vmatpush1.xpose.msra.mxu0 0.0
        %1414 = vmatprep.subr.mxu0 0.0
        %1415 = vmatpush1.xpose.msra.mxu0 0.0
        %1416 = vmatprep.subr.mxu0 0.0
        %1417 = vmatpush1.xpose.msra.mxu0 %v1384
        %1418 = vmatprep.subr.mxu0 0.0
        %1419 = vmatpush2.xpose.msra.mxu0 0.0
        %1420 = vmatprep.subr.mxu0 0.0
        %1421 = vmatpush2.xpose.msra.mxu0 0.0
        %1422 = vmatprep.subr.mxu0 0.0
        %1423 = vmatpush2.xpose.msra.mxu0 0.0
        %1424 = vmatprep.subr.mxu0 0.0
        %1425 = vmatpush2.xpose.msra.mxu0 0.0
        %1426 = vmatprep.subr.mxu0 0.0
        %1427 = vmatpush2.xpose.msra.mxu0 0.0
        %1428 = vmatprep.subr.mxu0 0.0
        %1429 = vmatpush2.xpose.msra.mxu0 0.0
        %1430 = vmatprep.subr.mxu0 0.0
        %1431 = vmatpush2.xpose.msra.mxu0 0.0
        %1432 = vmatprep.subr.mxu0 0.0
        %1433 = vmatpush2.xpose.msra.mxu0 0.0
        %1434 = vmatprep.subr.mxu0 0.0
        %1435 = vmatpush2.xpose.msra.mxu0 0.0
        %1436 = vmatprep.subr.mxu0 0.0
        %1437 = vmatpush2.xpose.msra.mxu0 0.0
        %1438 = vmatprep.subr.mxu0 0.0
        %1439 = vmatpush2.xpose.msra.mxu0 0.0
        %1440 = vmatprep.subr.mxu0 0.0
        %1441 = vmatpush2.xpose.msra.mxu0 0.0
        %1442 = vmatprep.subr.mxu0 0.0
        %1443 = vmatpush2.xpose.msra.mxu0 0.0
        %1444 = vmatprep.subr.mxu0 0.0
        %1445 = vmatpush2.xpose.msra.mxu0 0.0
        %1446 = vmatprep.subr.mxu0 0.0
        %1447 = vmatpush2.xpose.msra.mxu0 0.0
        %1448 = vmatprep.subr.mxu0 0.0
        %1449 = vmatpush2.xpose.msra.mxu0 0.0
        %1450 = vmatprep.mubr.f32.mxu0 0.0
        %1451 = vmatmul.mubr.f32.gmra.mxu0 %v1382
        %v1452 = vpop.f32.mrf.mxu0
        %v1453 = vadd.f32 %v1138, %v1452
        %v1454 = vpop.f32.mrf.mxu0
        %1455 = vdwg.mxu0
        %v1456 = vsel %vm1153, %v1225, -inf
        %1457 = vmax.xlane.f32.xlu0 %v1456
        %v1458 = vpop.xlane.xlu0 %1457
        %v1459 = vsel %vm1153, %v1301, -inf
        %1460 = vmax.xlane.f32.xlu0 %v1459
        %v1461 = vpop.xlane.xlu0 %1460
        %v1462 = vsel %vm1153, %v1377, -inf
        %1463 = vmax.xlane.f32.xlu0 %v1462
        %v1464 = vpop.xlane.xlu0 %1463
        %v1465 = vsel %vm1153, %v1453, -inf
        %1466 = vmax.xlane.f32.xlu0 %v1465
        %v1467 = vpop.xlane.xlu0 %1466
        %v1468 = vsub.f32 %v1225, %v1458
        %v1469 = vsub.f32 %v1301, %v1461
        %v1470 = vsub.f32 %v1377, %v1464
        %v1471 = vsub.f32 %v1453, %v1467
        %v1472 = vmul.f32 %v1468, 1.442695
        %v1473 = vpow.pop %v1472
        %v1474 = vmul.f32 %v1469, 1.442695
        %v1475 = vpow.pop %v1474
        %v1476 = vmul.f32 %v1470, 1.442695
        %v1477 = vpow.pop %v1476
        %v1478 = vmul.f32 %v1471, 1.442695
        %v1479 = vpow.pop %v1478
        %v1480 = vsel %vm1153, %v1473, 0.0
        %1481 = vadd.xlane.f32.xlu0 %v1480
        %v1482 = vpop.xlane.xlu0 %1481
        %v1483 = vsel %vm1153, %v1475, 0.0
        %1484 = vadd.xlane.f32.xlu0 %v1483
        %v1485 = vpop.xlane.xlu0 %1484
        %v1486 = vsel %vm1153, %v1477, 0.0
        %1487 = vadd.xlane.f32.xlu0 %v1486
        %v1488 = vpop.xlane.xlu0 %1487
        %v1489 = vsel %vm1153, %v1479, 0.0
        %1490 = vadd.xlane.f32.xlu0 %v1489
        %v1491 = vpop.xlane.xlu0 %1490
        %v1492 = vrcp.pop %v1482
        %v1493 = vrcp.pop %v1485
        %v1494 = vrcp.pop %v1488
        %v1495 = vrcp.pop %v1491
        %v1496 = vmul.f32 %v1473, %v1492
        %v1497 = vmul.f32 %v1475, %v1493
        %v1498 = vmul.f32 %v1477, %v1494
        %v1499 = vmul.f32 %v1479, %v1495
        %1500 = vrot.lane.b32.xlu0 %v1135, 64
        %v1501 = vpop.permute.xlu0 %1500
        %v1504 = vsel %vm1153, %v1496, 0
        %1506 = vmatprep.subr.mxu0 0.0
        %1507 = vmatpush1.msra.mxu0 0.0
        %1508 = vmatprep.subr.mxu0 0.0
        %1509 = vmatpush1.msra.mxu0 0.0
        %1510 = vmatprep.subr.mxu0 0.0
        %1511 = vmatpush1.msra.mxu0 0.0
        %1512 = vmatprep.subr.mxu0 0.0
        %1513 = vmatpush1.msra.mxu0 0.0
        %1514 = vmatprep.subr.mxu0 0.0
        %1515 = vmatpush1.msra.mxu0 0.0
        %1516 = vmatprep.subr.mxu0 0.0
        %1517 = vmatpush1.msra.mxu0 0.0
        %1518 = vmatprep.subr.mxu0 0.0
        %1519 = vmatpush1.msra.mxu0 0.0
        %1520 = vmatprep.subr.mxu0 0.0
        %1521 = vmatpush1.msra.mxu0 0.0
        %1522 = vmatprep.subr.mxu0 0.0
        %1523 = vmatpush1.msra.mxu0 0.0
        %1524 = vmatprep.subr.mxu0 0.0
        %1525 = vmatpush1.msra.mxu0 0.0
        %1526 = vmatprep.subr.mxu0 0.0
        %1527 = vmatpush1.msra.mxu0 0.0
        %1528 = vmatprep.subr.mxu0 0.0
        %1529 = vmatpush1.msra.mxu0 0.0
        %1530 = vmatprep.subr.mxu0 0.0
        %1531 = vmatpush1.msra.mxu0 0.0
        %1532 = vmatprep.subr.mxu0 0.0
        %1533 = vmatpush1.msra.mxu0 0.0
        %1534 = vmatprep.subr.mxu0 0.0
        %1535 = vmatpush1.msra.mxu0 0.0
        %1536 = vmatprep.subr.mxu0 0.0
        %1537 = vmatpush1.msra.mxu0 %v1501
        %1538 = vmatprep.subr.mxu0 0.0
        %1539 = vmatpush2.msra.mxu0 0.0
        %1540 = vmatprep.subr.mxu0 0.0
        %1541 = vmatpush2.msra.mxu0 0.0
        %1542 = vmatprep.subr.mxu0 0.0
        %1543 = vmatpush2.msra.mxu0 0.0
        %1544 = vmatprep.subr.mxu0 0.0
        %1545 = vmatpush2.msra.mxu0 0.0
        %1546 = vmatprep.subr.mxu0 0.0
        %1547 = vmatpush2.msra.mxu0 0.0
        %1548 = vmatprep.subr.mxu0 0.0
        %1549 = vmatpush2.msra.mxu0 0.0
        %1550 = vmatprep.subr.mxu0 0.0
        %1551 = vmatpush2.msra.mxu0 0.0
        %1552 = vmatprep.subr.mxu0 0.0
        %1553 = vmatpush2.msra.mxu0 0.0
        %1554 = vmatprep.subr.mxu0 0.0
        %1555 = vmatpush2.msra.mxu0 0.0
        %1556 = vmatprep.subr.mxu0 0.0
        %1557 = vmatpush2.msra.mxu0 0.0
        %1558 = vmatprep.subr.mxu0 0.0
        %1559 = vmatpush2.msra.mxu0 0.0
        %1560 = vmatprep.subr.mxu0 0.0
        %1561 = vmatpush2.msra.mxu0 0.0
        %1562 = vmatprep.subr.mxu0 0.0
        %1563 = vmatpush2.msra.mxu0 0.0
        %1564 = vmatprep.subr.mxu0 0.0
        %1565 = vmatpush2.msra.mxu0 0.0
        %1566 = vmatprep.subr.mxu0 0.0
        %1567 = vmatpush2.msra.mxu0 0.0
        %1568 = vmatprep.subr.mxu0 0.0
        %1569 = vmatpush2.msra.mxu0 0.0
        %1570 = vmatprep.mubr.f32.mxu0 0.0
        %1571 = vmatmul.mubr.f32.gmra.mxu0 %v1504
        %v1572 = vpop.f32.mrf.mxu0
        %v1573 = vadd.f32 0.0, %v1572
        %v1574 = vpop.f32.mrf.mxu0
        %1575 = vdwg.mxu0
        %1576 = vrot.lane.b32.xlu0 %v1146, 64
        %v1577 = vpop.permute.xlu0 %1576
        %v1580 = vsel %vm1153, %v1497, 0
        %1582 = vmatprep.subr.mxu0 0.0
        %1583 = vmatpush1.msra.mxu0 0.0
        %1584 = vmatprep.subr.mxu0 0.0
        %1585 = vmatpush1.msra.mxu0 0.0
        %1586 = vmatprep.subr.mxu0 0.0
        %1587 = vmatpush1.msra.mxu0 0.0
        %1588 = vmatprep.subr.mxu0 0.0
        %1589 = vmatpush1.msra.mxu0 0.0
        %1590 = vmatprep.subr.mxu0 0.0
        %1591 = vmatpush1.msra.mxu0 0.0
        %1592 = vmatprep.subr.mxu0 0.0
        %1593 = vmatpush1.msra.mxu0 0.0
        %1594 = vmatprep.subr.mxu0 0.0
        %1595 = vmatpush1.msra.mxu0 0.0
        %1596 = vmatprep.subr.mxu0 0.0
        %1597 = vmatpush1.msra.mxu0 0.0
        %1598 = vmatprep.subr.mxu0 0.0
        %1599 = vmatpush1.msra.mxu0 0.0
        %1600 = vmatprep.subr.mxu0 0.0
        %1601 = vmatpush1.msra.mxu0 0.0
        %1602 = vmatprep.subr.mxu0 0.0
        %1603 = vmatpush1.msra.mxu0 0.0
        %1604 = vmatprep.subr.mxu0 0.0
        %1605 = vmatpush1.msra.mxu0 0.0
        %1606 = vmatprep.subr.mxu0 0.0
        %1607 = vmatpush1.msra.mxu0 0.0
        %1608 = vmatprep.subr.mxu0 0.0
        %1609 = vmatpush1.msra.mxu0 0.0
        %1610 = vmatprep.subr.mxu0 0.0
        %1611 = vmatpush1.msra.mxu0 0.0
        %1612 = vmatprep.subr.mxu0 0.0
        %1613 = vmatpush1.msra.mxu0 %v1577
        %1614 = vmatprep.subr.mxu0 0.0
        %1615 = vmatpush2.msra.mxu0 0.0
        %1616 = vmatprep.subr.mxu0 0.0
        %1617 = vmatpush2.msra.mxu0 0.0
        %1618 = vmatprep.subr.mxu0 0.0
        %1619 = vmatpush2.msra.mxu0 0.0
        %1620 = vmatprep.subr.mxu0 0.0
        %1621 = vmatpush2.msra.mxu0 0.0
        %1622 = vmatprep.subr.mxu0 0.0
        %1623 = vmatpush2.msra.mxu0 0.0
        %1624 = vmatprep.subr.mxu0 0.0
        %1625 = vmatpush2.msra.mxu0 0.0
        %1626 = vmatprep.subr.mxu0 0.0
        %1627 = vmatpush2.msra.mxu0 0.0
        %1628 = vmatprep.subr.mxu0 0.0
        %1629 = vmatpush2.msra.mxu0 0.0
        %1630 = vmatprep.subr.mxu0 0.0
        %1631 = vmatpush2.msra.mxu0 0.0
        %1632 = vmatprep.subr.mxu0 0.0
        %1633 = vmatpush2.msra.mxu0 0.0
        %1634 = vmatprep.subr.mxu0 0.0
        %1635 = vmatpush2.msra.mxu0 0.0
        %1636 = vmatprep.subr.mxu0 0.0
        %1637 = vmatpush2.msra.mxu0 0.0
        %1638 = vmatprep.subr.mxu0 0.0
        %1639 = vmatpush2.msra.mxu0 0.0
        %1640 = vmatprep.subr.mxu0 0.0
        %1641 = vmatpush2.msra.mxu0 0.0
        %1642 = vmatprep.subr.mxu0 0.0
        %1643 = vmatpush2.msra.mxu0 0.0
        %1644 = vmatprep.subr.mxu0 0.0
        %1645 = vmatpush2.msra.mxu0 0.0
        %1646 = vmatprep.mubr.f32.mxu0 0.0
        %1647 = vmatmul.mubr.f32.gmra.mxu0 %v1580
        %v1648 = vpop.f32.mrf.mxu0
        %v1649 = vadd.f32 0.0, %v1648
        %v1650 = vpop.f32.mrf.mxu0
        %1651 = vdwg.mxu0
        %1652 = vrot.lane.b32.xlu0 %v1148, 64
        %v1653 = vpop.permute.xlu0 %1652
        %v1656 = vsel %vm1153, %v1498, 0
        %1658 = vmatprep.subr.mxu0 0.0
        %1659 = vmatpush1.msra.mxu0 0.0
        %1660 = vmatprep.subr.mxu0 0.0
        %1661 = vmatpush1.msra.mxu0 0.0
        %1662 = vmatprep.subr.mxu0 0.0
        %1663 = vmatpush1.msra.mxu0 0.0
        %1664 = vmatprep.subr.mxu0 0.0
        %1665 = vmatpush1.msra.mxu0 0.0
        %1666 = vmatprep.subr.mxu0 0.0
        %1667 = vmatpush1.msra.mxu0 0.0
        %1668 = vmatprep.subr.mxu0 0.0
        %1669 = vmatpush1.msra.mxu0 0.0
        %1670 = vmatprep.subr.mxu0 0.0
        %1671 = vmatpush1.msra.mxu0 0.0
        %1672 = vmatprep.subr.mxu0 0.0
        %1673 = vmatpush1.msra.mxu0 0.0
        %1674 = vmatprep.subr.mxu0 0.0
        %1675 = vmatpush1.msra.mxu0 0.0
        %1676 = vmatprep.subr.mxu0 0.0
        %1677 = vmatpush1.msra.mxu0 0.0
        %1678 = vmatprep.subr.mxu0 0.0
        %1679 = vmatpush1.msra.mxu0 0.0
        %1680 = vmatprep.subr.mxu0 0.0
        %1681 = vmatpush1.msra.mxu0 0.0
        %1682 = vmatprep.subr.mxu0 0.0
        %1683 = vmatpush1.msra.mxu0 0.0
        %1684 = vmatprep.subr.mxu0 0.0
        %1685 = vmatpush1.msra.mxu0 0.0
        %1686 = vmatprep.subr.mxu0 0.0
        %1687 = vmatpush1.msra.mxu0 0.0
        %1688 = vmatprep.subr.mxu0 0.0
        %1689 = vmatpush1.msra.mxu0 %v1653
        %1690 = vmatprep.subr.mxu0 0.0
        %1691 = vmatpush2.msra.mxu0 0.0
        %1692 = vmatprep.subr.mxu0 0.0
        %1693 = vmatpush2.msra.mxu0 0.0
        %1694 = vmatprep.subr.mxu0 0.0
        %1695 = vmatpush2.msra.mxu0 0.0
        %1696 = vmatprep.subr.mxu0 0.0
        %1697 = vmatpush2.msra.mxu0 0.0
        %1698 = vmatprep.subr.mxu0 0.0
        %1699 = vmatpush2.msra.mxu0 0.0
        %1700 = vmatprep.subr.mxu0 0.0
        %1701 = vmatpush2.msra.mxu0 0.0
        %1702 = vmatprep.subr.mxu0 0.0
        %1703 = vmatpush2.msra.mxu0 0.0
        %1704 = vmatprep.subr.mxu0 0.0
        %1705 = vmatpush2.msra.mxu0 0.0
        %1706 = vmatprep.subr.mxu0 0.0
        %1707 = vmatpush2.msra.mxu0 0.0
        %1708 = vmatprep.subr.mxu0 0.0
        %1709 = vmatpush2.msra.mxu0 0.0
        %1710 = vmatprep.subr.mxu0 0.0
        %1711 = vmatpush2.msra.mxu0 0.0
        %1712 = vmatprep.subr.mxu0 0.0
        %1713 = vmatpush2.msra.mxu0 0.0
        %1714 = vmatprep.subr.mxu0 0.0
        %1715 = vmatpush2.msra.mxu0 0.0
        %1716 = vmatprep.subr.mxu0 0.0
        %1717 = vmatpush2.msra.mxu0 0.0
        %1718 = vmatprep.subr.mxu0 0.0
        %1719 = vmatpush2.msra.mxu0 0.0
        %1720 = vmatprep.subr.mxu0 0.0
        %1721 = vmatpush2.msra.mxu0 0.0
        %1722 = vmatprep.mubr.f32.mxu0 0.0
        %1723 = vmatmul.mubr.f32.gmra.mxu0 %v1656
        %v1724 = vpop.f32.mrf.mxu0
        %v1725 = vadd.f32 0.0, %v1724
        %v1726 = vpop.f32.mrf.mxu0
        %1727 = vdwg.mxu0
        %1728 = vrot.lane.b32.xlu0 %v1150, 64
        %v1729 = vpop.permute.xlu0 %1728
        %v1732 = vsel %vm1153, %v1499, 0
        %1734 = vmatprep.subr.mxu0 0.0
        %1735 = vmatpush1.msra.mxu0 0.0
        %1736 = vmatprep.subr.mxu0 0.0
        %1737 = vmatpush1.msra.mxu0 0.0
        %1738 = vmatprep.subr.mxu0 0.0
        %1739 = vmatpush1.msra.mxu0 0.0
        %1740 = vmatprep.subr.mxu0 0.0
        %1741 = vmatpush1.msra.mxu0 0.0
        %1742 = vmatprep.subr.mxu0 0.0
        %1743 = vmatpush1.msra.mxu0 0.0
        %1744 = vmatprep.subr.mxu0 0.0
        %1745 = vmatpush1.msra.mxu0 0.0
        %1746 = vmatprep.subr.mxu0 0.0
        %1747 = vmatpush1.msra.mxu0 0.0
        %1748 = vmatprep.subr.mxu0 0.0
        %1749 = vmatpush1.msra.mxu0 0.0
        %1750 = vmatprep.subr.mxu0 0.0
        %1751 = vmatpush1.msra.mxu0 0.0
        %1752 = vmatprep.subr.mxu0 0.0
        %1753 = vmatpush1.msra.mxu0 0.0
        %1754 = vmatprep.subr.mxu0 0.0
        %1755 = vmatpush1.msra.mxu0 0.0
        %1756 = vmatprep.subr.mxu0 0.0
        %1757 = vmatpush1.msra.mxu0 0.0
        %1758 = vmatprep.subr.mxu0 0.0
        %1759 = vmatpush1.msra.mxu0 0.0
        %1760 = vmatprep.subr.mxu0 0.0
        %1761 = vmatpush1.msra.mxu0 0.0
        %1762 = vmatprep.subr.mxu0 0.0
        %1763 = vmatpush1.msra.mxu0 0.0
        %1764 = vmatprep.subr.mxu0 0.0
        %1765 = vmatpush1.msra.mxu0 %v1729
        %1766 = vmatprep.subr.mxu0 0.0
        %1767 = vmatpush2.msra.mxu0 0.0
        %1768 = vmatprep.subr.mxu0 0.0
        %1769 = vmatpush2.msra.mxu0 0.0
        %1770 = vmatprep.subr.mxu0 0.0
        %1771 = vmatpush2.msra.mxu0 0.0
        %1772 = vmatprep.subr.mxu0 0.0
        %1773 = vmatpush2.msra.mxu0 0.0
        %1774 = vmatprep.subr.mxu0 0.0
        %1775 = vmatpush2.msra.mxu0 0.0
        %1776 = vmatprep.subr.mxu0 0.0
        %1777 = vmatpush2.msra.mxu0 0.0
        %1778 = vmatprep.subr.mxu0 0.0
        %1779 = vmatpush2.msra.mxu0 0.0
        %1780 = vmatprep.subr.mxu0 0.0
        %1781 = vmatpush2.msra.mxu0 0.0
        %1782 = vmatprep.subr.mxu0 0.0
        %1783 = vmatpush2.msra.mxu0 0.0
        %1784 = vmatprep.subr.mxu0 0.0
        %1785 = vmatpush2.msra.mxu0 0.0
        %1786 = vmatprep.subr.mxu0 0.0
        %1787 = vmatpush2.msra.mxu0 0.0
        %1788 = vmatprep.subr.mxu0 0.0
        %1789 = vmatpush2.msra.mxu0 0.0
        %1790 = vmatprep.subr.mxu0 0.0
        %1791 = vmatpush2.msra.mxu0 0.0
        %1792 = vmatprep.subr.mxu0 0.0
        %1793 = vmatpush2.msra.mxu0 0.0
        %1794 = vmatprep.subr.mxu0 0.0
        %1795 = vmatpush2.msra.mxu0 0.0
        %1796 = vmatprep.subr.mxu0 0.0
        %1797 = vmatpush2.msra.mxu0 0.0
        %1798 = vmatprep.mubr.f32.mxu0 0.0
        %1799 = vmatmul.mubr.f32.gmra.mxu0 %v1732
        %v1800 = vpop.f32.mrf.mxu0
        %v1801 = vadd.f32 0.0, %v1800
        %v1802 = vpop.f32.mrf.mxu0
        %1803 = vdwg.mxu0
        %1805 = vrot.lane.b32.xlu0 %v1649, 8
        %v1806 = vpop.permute.xlu0 %1805
        %1809 = vrot.lane.b32.xlu0 %v1725, 16
        %v1810 = vpop.permute.xlu0 %1809
        %1813 = vrot.lane.b32.xlu0 %v1801, 24
        %v1814 = vpop.permute.xlu0 %1813
        %v1816 = vsel %vm1153, %v1573, %v1806
        %vm1817 = vcmask 130048
        %v1818 = vsel %vm1817, %v1816, %v1810
        %vm1819 = vcmask 195584
        %v1820 = vsel %vm1819, %v1818, %v1814
        %v1822 = vlaneseq
        %v1823 = vshrl.u32 %v1822, 7
        %v1824 = vsub.s32 0, %v1823
        %v1825 = vrot.slane %v1143, %v1824
        %v1828 = vsel %vm1018, %v1820, 0
        %1830 = vmatprep.subr.mxu0 0.0
        %1831 = vmatpush1.msra.mxu0 0.0
        %1832 = vmatprep.subr.mxu0 0.0
        %1833 = vmatpush1.msra.mxu0 0.0
        %1834 = vmatprep.subr.mxu0 0.0
        %1835 = vmatpush1.msra.mxu0 0.0
        %1836 = vmatprep.subr.mxu0 0.0
        %1837 = vmatpush1.msra.mxu0 0.0
        %1838 = vmatprep.subr.mxu0 0.0
        %1839 = vmatpush1.msra.mxu0 0.0
        %1840 = vmatprep.subr.mxu0 0.0
        %1841 = vmatpush1.msra.mxu0 0.0
        %1842 = vmatprep.subr.mxu0 0.0
        %1843 = vmatpush1.msra.mxu0 0.0
        %1844 = vmatprep.subr.mxu0 0.0
        %1845 = vmatpush1.msra.mxu0 0.0
        %1846 = vmatprep.subr.mxu0 0.0
        %1847 = vmatpush1.msra.mxu0 0.0
        %1848 = vmatprep.subr.mxu0 0.0
        %1849 = vmatpush1.msra.mxu0 0.0
        %1850 = vmatprep.subr.mxu0 0.0
        %1851 = vmatpush1.msra.mxu0 0.0
        %1852 = vmatprep.subr.mxu0 0.0
        %1853 = vmatpush1.msra.mxu0 0.0
        %1854 = vmatprep.subr.mxu0 0.0
        %1855 = vmatpush1.msra.mxu0 %v1142
        %1856 = vmatprep.subr.mxu0 0.0
        %1857 = vmatpush1.msra.mxu0 %v1141
        %1858 = vmatprep.subr.mxu0 0.0
        %1859 = vmatpush1.msra.mxu0 %v1140
        %1860 = vmatprep.subr.mxu0 0.0
        %1861 = vmatpush1.msra.mxu0 %v1139
        %1862 = vmatprep.subr.mxu0 0.0
        %1863 = vmatpush2.msra.mxu0 0.0
        %1864 = vmatprep.subr.mxu0 0.0
        %1865 = vmatpush2.msra.mxu0 0.0
        %1866 = vmatprep.subr.mxu0 0.0
        %1867 = vmatpush2.msra.mxu0 0.0
        %1868 = vmatprep.subr.mxu0 0.0
        %1869 = vmatpush2.msra.mxu0 0.0
        %1870 = vmatprep.subr.mxu0 0.0
        %1871 = vmatpush2.msra.mxu0 0.0
        %1872 = vmatprep.subr.mxu0 0.0
        %1873 = vmatpush2.msra.mxu0 0.0
        %1874 = vmatprep.subr.mxu0 0.0
        %1875 = vmatpush2.msra.mxu0 0.0
        %1876 = vmatprep.subr.mxu0 0.0
        %1877 = vmatpush2.msra.mxu0 0.0
        %1878 = vmatprep.subr.mxu0 0.0
        %1879 = vmatpush2.msra.mxu0 0.0
        %1880 = vmatprep.subr.mxu0 0.0
        %1881 = vmatpush2.msra.mxu0 0.0
        %1882 = vmatprep.subr.mxu0 0.0
        %1883 = vmatpush2.msra.mxu0 0.0
        %1884 = vmatprep.subr.mxu0 0.0
        %1885 = vmatpush2.msra.mxu0 0.0
        %1886 = vmatprep.subr.mxu0 0.0
        %1887 = vmatpush2.msra.mxu0 0.0
        %1888 = vmatprep.subr.mxu0 0.0
        %1889 = vmatpush2.msra.mxu0 0.0
        %1890 = vmatprep.subr.mxu0 0.0
        %1891 = vmatpush2.msra.mxu0 0.0
        %1892 = vmatprep.subr.mxu0 0.0
        %1893 = vmatpush2.msra.mxu0 0.0
        %1894 = vmatprep.mubr.f32.mxu0 0.0
        %1895 = vmatmul.mubr.f32.gmra.mxu0 %v1828
        %v1896 = vpop.f32.mrf.mxu0
        %v1897 = vadd.f32 %v1825, %v1896
        %v1898 = vpop.f32.mrf.mxu0
        %1899 = vdwg.mxu0
        %v1900 = vadd.f32 %v1013, %v1897
        %v1901 = vld [vmem:[#allocation14] sm:$0x1]
        %v1902 = vld [vmem:[#allocation16] sm:$0x1]
        %v1903 = vsel %vm1018, %v1900, 0.0
        %1904 = vadd.xlane.f32.xlu0 %v1903
        %v1905 = vpop.xlane.xlu0 %1904
        %v1906 = vmul.f32 %v1905, %v1022
        %v1907 = vsub.f32 %v1900, %v1906
        %v1908 = vmul.f32 %v1907, %v1907
        %v1909 = vsel %vm1018, %v1908, 0.0
        %1910 = vadd.xlane.f32.xlu0 %v1909
        %v1911 = vpop.xlane.xlu0 %1910
        %v1912 = vmul.f32 %v1911, %v1022
        %v1913 = vrsqrt.pop %v1912
        %v1914 = vmul.f32 %v1912, %v1913
        %vm1915 = vcmp.eq.f32.partialorder %v1912, inf
        %v1916 = vsel %vm1915, %v1912, %v1914
        %vm1917 = vcmp.eq.f32.partialorder %v1912, 0.0
        %v1918 = vand.u32 %v1912, 2147483648
        %v1919 = vsel %vm1917, %v1918, %v1916
        %v1920 = vadd.f32 %v1919, 1e-06
        %v1921 = vrcp.pop %v1920
        %v1923 = vlaneseq
        %v1924 = vshrl.u32 %v1923, 7
        %v1925 = vsub.s32 0, %v1924
        %v1926 = vrot.slane %v1901, %v1925
        %v1928 = vmul.f32 %v1926, %v1907
        %v1929 = vmul.f32 %v1928, %v1921
        %v1931 = vlaneseq
        %v1932 = vshrl.u32 %v1931, 7
        %v1933 = vsub.s32 0, %v1932
        %v1934 = vrot.slane %v1902, %v1933
        %v1936 = vadd.f32 %v1929, %v1934
        %v1937 = vld [vmem:[#allocation17] sm:$0xff]
        %v1938 = vld [vmem:[#allocation17 + $0x8] sm:$0xff]
        %v1939 = vld [vmem:[#allocation17 + $0x10] sm:$0xff]
        %v1940 = vld [vmem:[#allocation17 + $0x18] sm:$0xff]
        %v1941 = vld [vmem:[#allocation19] sm:$0x1]
        %v1943 = vlaneseq
        %v1944 = vshrl.u32 %v1943, 7
        %v1945 = vsub.s32 0, %v1944
        %v1946 = vrot.slane %v1941, %v1945
        %v1949 = vsel %vm1018, %v1936, 0
        %1951 = vmatprep.subr.mxu0 0.0
        %1952 = vmatpush1.msra.mxu0 0.0
        %1953 = vmatprep.subr.mxu0 0.0
        %1954 = vmatpush1.msra.mxu0 0.0
        %1955 = vmatprep.subr.mxu0 0.0
        %1956 = vmatpush1.msra.mxu0 0.0
        %1957 = vmatprep.subr.mxu0 0.0
        %1958 = vmatpush1.msra.mxu0 0.0
        %1959 = vmatprep.subr.mxu0 0.0
        %1960 = vmatpush1.msra.mxu0 0.0
        %1961 = vmatprep.subr.mxu0 0.0
        %1962 = vmatpush1.msra.mxu0 0.0
        %1963 = vmatprep.subr.mxu0 0.0
        %1964 = vmatpush1.msra.mxu0 0.0
        %1965 = vmatprep.subr.mxu0 0.0
        %1966 = vmatpush1.msra.mxu0 0.0
        %1967 = vmatprep.subr.mxu0 0.0
        %1968 = vmatpush1.msra.mxu0 0.0
        %1969 = vmatprep.subr.mxu0 0.0
        %1970 = vmatpush1.msra.mxu0 0.0
        %1971 = vmatprep.subr.mxu0 0.0
        %1972 = vmatpush1.msra.mxu0 0.0
        %1973 = vmatprep.subr.mxu0 0.0
        %1974 = vmatpush1.msra.mxu0 0.0
        %1975 = vmatprep.subr.mxu0 0.0
        %1976 = vmatpush1.msra.mxu0 %v1940
        %1977 = vmatprep.subr.mxu0 0.0
        %1978 = vmatpush1.msra.mxu0 %v1939
        %1979 = vmatprep.subr.mxu0 0.0
        %1980 = vmatpush1.msra.mxu0 %v1938
        %1981 = vmatprep.subr.mxu0 0.0
        %1982 = vmatpush1.msra.mxu0 %v1937
        %1983 = vmatprep.subr.mxu0 0.0
        %1984 = vmatpush2.msra.mxu0 0.0
        %1985 = vmatprep.subr.mxu0 0.0
        %1986 = vmatpush2.msra.mxu0 0.0
        %1987 = vmatprep.subr.mxu0 0.0
        %1988 = vmatpush2.msra.mxu0 0.0
        %1989 = vmatprep.subr.mxu0 0.0
        %1990 = vmatpush2.msra.mxu0 0.0
        %1991 = vmatprep.subr.mxu0 0.0
        %1992 = vmatpush2.msra.mxu0 0.0
        %1993 = vmatprep.subr.mxu0 0.0
        %1994 = vmatpush2.msra.mxu0 0.0
        %1995 = vmatprep.subr.mxu0 0.0
        %1996 = vmatpush2.msra.mxu0 0.0
        %1997 = vmatprep.subr.mxu0 0.0
        %1998 = vmatpush2.msra.mxu0 0.0
        %1999 = vmatprep.subr.mxu0 0.0
        %2000 = vmatpush2.msra.mxu0 0.0
        %2001 = vmatprep.subr.mxu0 0.0
        %2002 = vmatpush2.msra.mxu0 0.0
        %2003 = vmatprep.subr.mxu0 0.0
        %2004 = vmatpush2.msra.mxu0 0.0
        %2005 = vmatprep.subr.mxu0 0.0
        %2006 = vmatpush2.msra.mxu0 0.0
        %2007 = vmatprep.subr.mxu0 0.0
        %2008 = vmatpush2.msra.mxu0 0.0
        %2009 = vmatprep.subr.mxu0 0.0
        %2010 = vmatpush2.msra.mxu0 0.0
        %2011 = vmatprep.subr.mxu0 0.0
        %2012 = vmatpush2.msra.mxu0 0.0
        %2013 = vmatprep.subr.mxu0 0.0
        %2014 = vmatpush2.msra.mxu0 0.0
        %2015 = vmatprep.mubr.f32.mxu0 0.0
        %2016 = vmatmul.mubr.f32.gmra.mxu0 %v1949
        %v2017 = vpop.f32.mrf.mxu0
        %v2018 = vadd.f32 %v1946, %v2017
        %v2019 = vpop.f32.mrf.mxu0
        %2020 = vdwg.mxu0
        %v2021 = vld [vmem:[#allocation20] sm:$0xff]
        %v2022 = vld [vmem:[#allocation20 + $0x8] sm:$0xff]
        %v2023 = vld [vmem:[#allocation20 + $0x10] sm:$0xff]
        %v2024 = vld [vmem:[#allocation20 + $0x18] sm:$0xff]
        %v2025 = vld [vmem:[#allocation22] sm:$0x1]
        %v2027 = vlaneseq
        %v2028 = vshrl.u32 %v2027, 7
        %v2029 = vsub.s32 0, %v2028
        %v2030 = vrot.slane %v2025, %v2029
        %v2033 = vsel %vm1018, %v1014, 0
        %v2036 = vsel %vm1018, %v1015, 0
        %2038 = vmatprep.subr.mxu0 0.0
        %2039 = vmatpush1.msra.mxu0 0.0
        %2040 = vmatprep.subr.mxu0 0.0
        %2041 = vmatpush1.msra.mxu0 0.0
        %2042 = vmatprep.subr.mxu0 0.0
        %2043 = vmatpush1.msra.mxu0 0.0
        %2044 = vmatprep.subr.mxu0 0.0
        %2045 = vmatpush1.msra.mxu0 0.0
        %2046 = vmatprep.subr.mxu0 0.0
        %2047 = vmatpush1.msra.mxu0 0.0
        %2048 = vmatprep.subr.mxu0 0.0
        %2049 = vmatpush1.msra.mxu0 0.0
        %2050 = vmatprep.subr.mxu0 0.0
        %2051 = vmatpush1.msra.mxu0 0.0
        %2052 = vmatprep.subr.mxu0 0.0
        %2053 = vmatpush1.msra.mxu0 0.0
        %2054 = vmatprep.subr.mxu0 0.0
        %2055 = vmatpush1.msra.mxu0 0.0
        %2056 = vmatprep.subr.mxu0 0.0
        %2057 = vmatpush1.msra.mxu0 0.0
        %2058 = vmatprep.subr.mxu0 0.0
        %2059 = vmatpush1.msra.mxu0 0.0
        %2060 = vmatprep.subr.mxu0 0.0
        %2061 = vmatpush1.msra.mxu0 0.0
        %2062 = vmatprep.subr.mxu0 0.0
        %2063 = vmatpush1.msra.mxu0 %v2024
        %2064 = vmatprep.subr.mxu0 0.0
        %2065 = vmatpush1.msra.mxu0 %v2023
        %2066 = vmatprep.subr.mxu0 0.0
        %2067 = vmatpush1.msra.mxu0 %v2022
        %2068 = vmatprep.subr.mxu0 0.0
        %2069 = vmatpush1.msra.mxu0 %v2021
        %2070 = vmatprep.subr.mxu0 0.0
        %2071 = vmatpush2.msra.mxu0 0.0
        %2072 = vmatprep.subr.mxu0 0.0
        %2073 = vmatpush2.msra.mxu0 0.0
        %2074 = vmatprep.subr.mxu0 0.0
        %2075 = vmatpush2.msra.mxu0 0.0
        %2076 = vmatprep.subr.mxu0 0.0
        %2077 = vmatpush2.msra.mxu0 0.0
        %2078 = vmatprep.subr.mxu0 0.0
        %2079 = vmatpush2.msra.mxu0 0.0
        %2080 = vmatprep.subr.mxu0 0.0
        %2081 = vmatpush2.msra.mxu0 0.0
        %2082 = vmatprep.subr.mxu0 0.0
        %2083 = vmatpush2.msra.mxu0 0.0
        %2084 = vmatprep.subr.mxu0 0.0
        %2085 = vmatpush2.msra.mxu0 0.0
        %2086 = vmatprep.subr.mxu0 0.0
        %2087 = vmatpush2.msra.mxu0 0.0
        %2088 = vmatprep.subr.mxu0 0.0
        %2089 = vmatpush2.msra.mxu0 0.0
        %2090 = vmatprep.subr.mxu0 0.0
        %2091 = vmatpush2.msra.mxu0 0.0
        %2092 = vmatprep.subr.mxu0 0.0
        %2093 = vmatpush2.msra.mxu0 0.0
        %2094 = vmatprep.subr.mxu0 0.0
        %2095 = vmatpush2.msra.mxu0 0.0
        %2096 = vmatprep.subr.mxu0 0.0
        %2097 = vmatpush2.msra.mxu0 0.0
        %2098 = vmatprep.subr.mxu0 0.0
        %2099 = vmatpush2.msra.mxu0 0.0
        %2100 = vmatprep.subr.mxu0 0.0
        %2101 = vmatpush2.msra.mxu0 0.0
        %2102 = vmatprep.mubr.f32.mxu0 0.0
        %2103 = vmatmul.mubr.f32.gmra.mxu0 %v2033
        %v2104 = vpop.f32.mrf.mxu0
        %v2105 = vadd.f32 %v2030, %v2104
        %v2106 = vpop.f32.mrf.mxu0
        %2107 = vmatprep.mubr.f32.mxu0 0.0
        %2108 = vmatmul.mubr.f32.gmra.mxu0 %v2036
        %v2109 = vpop.f32.mrf.mxu0
        %v2110 = vadd.f32 %v2030, %v2109
        %v2111 = vpop.f32.mrf.mxu0
        %2112 = vdwg.mxu0
        %v2113 = vld [vmem:[%s876] sm:$0xff]
        %v2114 = vld [vmem:[#allocation23] sm:$0xff]
        %v2115 = vld [vmem:[#allocation23 + $0x8] sm:$0xff]
        %v2116 = vld [vmem:[#allocation23 + $0x10] sm:$0xff]
        %v2117 = vld [vmem:[#allocation23 + $0x18] sm:$0xff]
        %v2118 = vld [vmem:[#allocation25] sm:$0x1]
        %2120 = vrot.lane.b32.xlu0 %v2018, 120
        %v2121 = vpop.permute.xlu0 %2120
        %2122 = vrot.lane.b32.xlu0 %v2018, 112
        %v2123 = vpop.permute.xlu0 %2122
        %2124 = vrot.lane.b32.xlu0 %v2018, 104
        %v2125 = vpop.permute.xlu0 %2124
        %2128 = vrot.lane.b32.xlu0 %v2105, 120
        %v2129 = vpop.permute.xlu0 %2128
        %2130 = vrot.lane.b32.xlu0 %v2110, 120
        %v2131 = vpop.permute.xlu0 %2130
        %2132 = vrot.lane.b32.xlu0 %v2105, 112
        %v2133 = vpop.permute.xlu0 %2132
        %2134 = vrot.lane.b32.xlu0 %v2110, 112
        %v2135 = vpop.permute.xlu0 %2134
        %2136 = vrot.lane.b32.xlu0 %v2105, 104
        %v2137 = vpop.permute.xlu0 %2136
        %2138 = vrot.lane.b32.xlu0 %v2110, 104
        %v2139 = vpop.permute.xlu0 %2138
        %v2140 = vsel %vm1153, %v2018, 0
        %v2142 = vsel %vm1153, %v2105, 0
        %v2144 = vsel %vm1153, %v2110, 0
        %2146 = vmatprep.subr.mxu0 0.0
        %2147 = vmatpush1.xpose.msra.mxu0 0.0
        %2148 = vmatprep.subr.mxu0 0.0
        %2149 = vmatpush1.xpose.msra.mxu0 0.0
        %2150 = vmatprep.subr.mxu0 0.0
        %2151 = vmatpush1.xpose.msra.mxu0 0.0
        %2152 = vmatprep.subr.mxu0 0.0
        %2153 = vmatpush1.xpose.msra.mxu0 0.0
        %2154 = vmatprep.subr.mxu0 0.0
        %2155 = vmatpush1.xpose.msra.mxu0 0.0
        %2156 = vmatprep.subr.mxu0 0.0
        %2157 = vmatpush1.xpose.msra.mxu0 0.0
        %2158 = vmatprep.subr.mxu0 0.0
        %2159 = vmatpush1.xpose.msra.mxu0 0.0
        %2160 = vmatprep.subr.mxu0 0.0
        %2161 = vmatpush1.xpose.msra.mxu0 0.0
        %2162 = vmatprep.subr.mxu0 0.0
        %2163 = vmatpush1.xpose.msra.mxu0 0.0
        %2164 = vmatprep.subr.mxu0 0.0
        %2165 = vmatpush1.xpose.msra.mxu0 0.0
        %2166 = vmatprep.subr.mxu0 0.0
        %2167 = vmatpush1.xpose.msra.mxu0 0.0
        %2168 = vmatprep.subr.mxu0 0.0
        %2169 = vmatpush1.xpose.msra.mxu0 0.0
        %2170 = vmatprep.subr.mxu0 0.0
        %2171 = vmatpush1.xpose.msra.mxu0 0.0
        %2172 = vmatprep.subr.mxu0 0.0
        %2173 = vmatpush1.xpose.msra.mxu0 0.0
        %2174 = vmatprep.subr.mxu0 0.0
        %2175 = vmatpush1.xpose.msra.mxu0 %v2144
        %2176 = vmatprep.subr.mxu0 0.0
        %2177 = vmatpush1.xpose.msra.mxu0 %v2142
        %2178 = vmatprep.subr.mxu0 0.0
        %2179 = vmatpush2.xpose.msra.mxu0 0.0
        %2180 = vmatprep.subr.mxu0 0.0
        %2181 = vmatpush2.xpose.msra.mxu0 0.0
        %2182 = vmatprep.subr.mxu0 0.0
        %2183 = vmatpush2.xpose.msra.mxu0 0.0
        %2184 = vmatprep.subr.mxu0 0.0
        %2185 = vmatpush2.xpose.msra.mxu0 0.0
        %2186 = vmatprep.subr.mxu0 0.0
        %2187 = vmatpush2.xpose.msra.mxu0 0.0
        %2188 = vmatprep.subr.mxu0 0.0
        %2189 = vmatpush2.xpose.msra.mxu0 0.0
        %2190 = vmatprep.subr.mxu0 0.0
        %2191 = vmatpush2.xpose.msra.mxu0 0.0
        %2192 = vmatprep.subr.mxu0 0.0
        %2193 = vmatpush2.xpose.msra.mxu0 0.0
        %2194 = vmatprep.subr.mxu0 0.0
        %2195 = vmatpush2.xpose.msra.mxu0 0.0
        %2196 = vmatprep.subr.mxu0 0.0
        %2197 = vmatpush2.xpose.msra.mxu0 0.0
        %2198 = vmatprep.subr.mxu0 0.0
        %2199 = vmatpush2.xpose.msra.mxu0 0.0
        %2200 = vmatprep.subr.mxu0 0.0
        %2201 = vmatpush2.xpose.msra.mxu0 0.0
        %2202 = vmatprep.subr.mxu0 0.0
        %2203 = vmatpush2.xpose.msra.mxu0 0.0
        %2204 = vmatprep.subr.mxu0 0.0
        %2205 = vmatpush2.xpose.msra.mxu0 0.0
        %2206 = vmatprep.subr.mxu0 0.0
        %2207 = vmatpush2.xpose.msra.mxu0 0.0
        %2208 = vmatprep.subr.mxu0 0.0
        %2209 = vmatpush2.xpose.msra.mxu0 0.0
        %2210 = vmatprep.mubr.f32.mxu0 0.0
        %2211 = vmatmul.mubr.f32.gmra.mxu0 %v2140
        %v2212 = vpop.f32.mrf.mxu0
        %v2213 = vadd.f32 %v2113, %v2212
        %v2214 = vpop.f32.mrf.mxu0
        %2215 = vdwg.mxu0
        %v2216 = vsel %vm1153, %v2121, 0
        %v2218 = vsel %vm1153, %v2129, 0
        %v2220 = vsel %vm1153, %v2131, 0
        %2222 = vmatprep.subr.mxu0 0.0
        %2223 = vmatpush1.xpose.msra.mxu0 0.0
        %2224 = vmatprep.subr.mxu0 0.0
        %2225 = vmatpush1.xpose.msra.mxu0 0.0
        %2226 = vmatprep.subr.mxu0 0.0
        %2227 = vmatpush1.xpose.msra.mxu0 0.0
        %2228 = vmatprep.subr.mxu0 0.0
        %2229 = vmatpush1.xpose.msra.mxu0 0.0
        %2230 = vmatprep.subr.mxu0 0.0
        %2231 = vmatpush1.xpose.msra.mxu0 0.0
        %2232 = vmatprep.subr.mxu0 0.0
        %2233 = vmatpush1.xpose.msra.mxu0 0.0
        %2234 = vmatprep.subr.mxu0 0.0
        %2235 = vmatpush1.xpose.msra.mxu0 0.0
        %2236 = vmatprep.subr.mxu0 0.0
        %2237 = vmatpush1.xpose.msra.mxu0 0.0
        %2238 = vmatprep.subr.mxu0 0.0
        %2239 = vmatpush1.xpose.msra.mxu0 0.0
        %2240 = vmatprep.subr.mxu0 0.0
        %2241 = vmatpush1.xpose.msra.mxu0 0.0
        %2242 = vmatprep.subr.mxu0 0.0
        %2243 = vmatpush1.xpose.msra.mxu0 0.0
        %2244 = vmatprep.subr.mxu0 0.0
        %2245 = vmatpush1.xpose.msra.mxu0 0.0
        %2246 = vmatprep.subr.mxu0 0.0
        %2247 = vmatpush1.xpose.msra.mxu0 0.0
        %2248 = vmatprep.subr.mxu0 0.0
        %2249 = vmatpush1.xpose.msra.mxu0 0.0
        %2250 = vmatprep.subr.mxu0 0.0
        %2251 = vmatpush1.xpose.msra.mxu0 %v2220
        %2252 = vmatprep.subr.mxu0 0.0
        %2253 = vmatpush1.xpose.msra.mxu0 %v2218
        %2254 = vmatprep.subr.mxu0 0.0
        %2255 = vmatpush2.xpose.msra.mxu0 0.0
        %2256 = vmatprep.subr.mxu0 0.0
        %2257 = vmatpush2.xpose.msra.mxu0 0.0
        %2258 = vmatprep.subr.mxu0 0.0
        %2259 = vmatpush2.xpose.msra.mxu0 0.0
        %2260 = vmatprep.subr.mxu0 0.0
        %2261 = vmatpush2.xpose.msra.mxu0 0.0
        %2262 = vmatprep.subr.mxu0 0.0
        %2263 = vmatpush2.xpose.msra.mxu0 0.0
        %2264 = vmatprep.subr.mxu0 0.0
        %2265 = vmatpush2.xpose.msra.mxu0 0.0
        %2266 = vmatprep.subr.mxu0 0.0
        %2267 = vmatpush2.xpose.msra.mxu0 0.0
        %2268 = vmatprep.subr.mxu0 0.0
        %2269 = vmatpush2.xpose.msra.mxu0 0.0
        %2270 = vmatprep.subr.mxu0 0.0
        %2271 = vmatpush2.xpose.msra.mxu0 0.0
        %2272 = vmatprep.subr.mxu0 0.0
        %2273 = vmatpush2.xpose.msra.mxu0 0.0
        %2274 = vmatprep.subr.mxu0 0.0
        %2275 = vmatpush2.xpose.msra.mxu0 0.0
        %2276 = vmatprep.subr.mxu0 0.0
        %2277 = vmatpush2.xpose.msra.mxu0 0.0
        %2278 = vmatprep.subr.mxu0 0.0
        %2279 = vmatpush2.xpose.msra.mxu0 0.0
        %2280 = vmatprep.subr.mxu0 0.0
        %2281 = vmatpush2.xpose.msra.mxu0 0.0
        %2282 = vmatprep.subr.mxu0 0.0
        %2283 = vmatpush2.xpose.msra.mxu0 0.0
        %2284 = vmatprep.subr.mxu0 0.0
        %2285 = vmatpush2.xpose.msra.mxu0 0.0
        %2286 = vmatprep.mubr.f32.mxu0 0.0
        %2287 = vmatmul.mubr.f32.gmra.mxu0 %v2216
        %v2288 = vpop.f32.mrf.mxu0
        %v2289 = vadd.f32 %v2113, %v2288
        %v2290 = vpop.f32.mrf.mxu0
        %2291 = vdwg.mxu0
        %v2292 = vsel %vm1153, %v2123, 0
        %v2294 = vsel %vm1153, %v2133, 0
        %v2296 = vsel %vm1153, %v2135, 0
        %2298 = vmatprep.subr.mxu0 0.0
        %2299 = vmatpush1.xpose.msra.mxu0 0.0
        %2300 = vmatprep.subr.mxu0 0.0
        %2301 = vmatpush1.xpose.msra.mxu0 0.0
        %2302 = vmatprep.subr.mxu0 0.0
        %2303 = vmatpush1.xpose.msra.mxu0 0.0
        %2304 = vmatprep.subr.mxu0 0.0
        %2305 = vmatpush1.xpose.msra.mxu0 0.0
        %2306 = vmatprep.subr.mxu0 0.0
        %2307 = vmatpush1.xpose.msra.mxu0 0.0
        %2308 = vmatprep.subr.mxu0 0.0
        %2309 = vmatpush1.xpose.msra.mxu0 0.0
        %2310 = vmatprep.subr.mxu0 0.0
        %2311 = vmatpush1.xpose.msra.mxu0 0.0
        %2312 = vmatprep.subr.mxu0 0.0
        %2313 = vmatpush1.xpose.msra.mxu0 0.0
        %2314 = vmatprep.subr.mxu0 0.0
        %2315 = vmatpush1.xpose.msra.mxu0 0.0
        %2316 = vmatprep.subr.mxu0 0.0
        %2317 = vmatpush1.xpose.msra.mxu0 0.0
        %2318 = vmatprep.subr.mxu0 0.0
        %2319 = vmatpush1.xpose.msra.mxu0 0.0
        %2320 = vmatprep.subr.mxu0 0.0
        %2321 = vmatpush1.xpose.msra.mxu0 0.0
        %2322 = vmatprep.subr.mxu0 0.0
        %2323 = vmatpush1.xpose.msra.mxu0 0.0
        %2324 = vmatprep.subr.mxu0 0.0
        %2325 = vmatpush1.xpose.msra.mxu0 0.0
        %2326 = vmatprep.subr.mxu0 0.0
        %2327 = vmatpush1.xpose.msra.mxu0 %v2296
        %2328 = vmatprep.subr.mxu0 0.0
        %2329 = vmatpush1.xpose.msra.mxu0 %v2294
        %2330 = vmatprep.subr.mxu0 0.0
        %2331 = vmatpush2.xpose.msra.mxu0 0.0
        %2332 = vmatprep.subr.mxu0 0.0
        %2333 = vmatpush2.xpose.msra.mxu0 0.0
        %2334 = vmatprep.subr.mxu0 0.0
        %2335 = vmatpush2.xpose.msra.mxu0 0.0
        %2336 = vmatprep.subr.mxu0 0.0
        %2337 = vmatpush2.xpose.msra.mxu0 0.0
        %2338 = vmatprep.subr.mxu0 0.0
        %2339 = vmatpush2.xpose.msra.mxu0 0.0
        %2340 = vmatprep.subr.mxu0 0.0
        %2341 = vmatpush2.xpose.msra.mxu0 0.0
        %2342 = vmatprep.subr.mxu0 0.0
        %2343 = vmatpush2.xpose.msra.mxu0 0.0
        %2344 = vmatprep.subr.mxu0 0.0
        %2345 = vmatpush2.xpose.msra.mxu0 0.0
        %2346 = vmatprep.subr.mxu0 0.0
        %2347 = vmatpush2.xpose.msra.mxu0 0.0
        %2348 = vmatprep.subr.mxu0 0.0
        %2349 = vmatpush2.xpose.msra.mxu0 0.0
        %2350 = vmatprep.subr.mxu0 0.0
        %2351 = vmatpush2.xpose.msra.mxu0 0.0
        %2352 = vmatprep.subr.mxu0 0.0
        %2353 = vmatpush2.xpose.msra.mxu0 0.0
        %2354 = vmatprep.subr.mxu0 0.0
        %2355 = vmatpush2.xpose.msra.mxu0 0.0
        %2356 = vmatprep.subr.mxu0 0.0
        %2357 = vmatpush2.xpose.msra.mxu0 0.0
        %2358 = vmatprep.subr.mxu0 0.0
        %2359 = vmatpush2.xpose.msra.mxu0 0.0
        %2360 = vmatprep.subr.mxu0 0.0
        %2361 = vmatpush2.xpose.msra.mxu0 0.0
        %2362 = vmatprep.mubr.f32.mxu0 0.0
        %2363 = vmatmul.mubr.f32.gmra.mxu0 %v2292
        %v2364 = vpop.f32.mrf.mxu0
        %v2365 = vadd.f32 %v2113, %v2364
        %v2366 = vpop.f32.mrf.mxu0
        %2367 = vdwg.mxu0
        %v2368 = vsel %vm1153, %v2125, 0
        %v2370 = vsel %vm1153, %v2137, 0
        %v2372 = vsel %vm1153, %v2139, 0
        %2374 = vmatprep.subr.mxu0 0.0
        %2375 = vmatpush1.xpose.msra.mxu0 0.0
        %2376 = vmatprep.subr.mxu0 0.0
        %2377 = vmatpush1.xpose.msra.mxu0 0.0
        %2378 = vmatprep.subr.mxu0 0.0
        %2379 = vmatpush1.xpose.msra.mxu0 0.0
        %2380 = vmatprep.subr.mxu0 0.0
        %2381 = vmatpush1.xpose.msra.mxu0 0.0
        %2382 = vmatprep.subr.mxu0 0.0
        %2383 = vmatpush1.xpose.msra.mxu0 0.0
        %2384 = vmatprep.subr.mxu0 0.0
        %2385 = vmatpush1.xpose.msra.mxu0 0.0
        %2386 = vmatprep.subr.mxu0 0.0
        %2387 = vmatpush1.xpose.msra.mxu0 0.0
        %2388 = vmatprep.subr.mxu0 0.0
        %2389 = vmatpush1.xpose.msra.mxu0 0.0
        %2390 = vmatprep.subr.mxu0 0.0
        %2391 = vmatpush1.xpose.msra.mxu0 0.0
        %2392 = vmatprep.subr.mxu0 0.0
        %2393 = vmatpush1.xpose.msra.mxu0 0.0
        %2394 = vmatprep.subr.mxu0 0.0
        %2395 = vmatpush1.xpose.msra.mxu0 0.0
        %2396 = vmatprep.subr.mxu0 0.0
        %2397 = vmatpush1.xpose.msra.mxu0 0.0
        %2398 = vmatprep.subr.mxu0 0.0
        %2399 = vmatpush1.xpose.msra.mxu0 0.0
        %2400 = vmatprep.subr.mxu0 0.0
        %2401 = vmatpush1.xpose.msra.mxu0 0.0
        %2402 = vmatprep.subr.mxu0 0.0
        %2403 = vmatpush1.xpose.msra.mxu0 %v2372
        %2404 = vmatprep.subr.mxu0 0.0
        %2405 = vmatpush1.xpose.msra.mxu0 %v2370
        %2406 = vmatprep.subr.mxu0 0.0
        %2407 = vmatpush2.xpose.msra.mxu0 0.0
        %2408 = vmatprep.subr.mxu0 0.0
        %2409 = vmatpush2.xpose.msra.mxu0 0.0
        %2410 = vmatprep.subr.mxu0 0.0
        %2411 = vmatpush2.xpose.msra.mxu0 0.0
        %2412 = vmatprep.subr.mxu0 0.0
        %2413 = vmatpush2.xpose.msra.mxu0 0.0
        %2414 = vmatprep.subr.mxu0 0.0
        %2415 = vmatpush2.xpose.msra.mxu0 0.0
        %2416 = vmatprep.subr.mxu0 0.0
        %2417 = vmatpush2.xpose.msra.mxu0 0.0
        %2418 = vmatprep.subr.mxu0 0.0
        %2419 = vmatpush2.xpose.msra.mxu0 0.0
        %2420 = vmatprep.subr.mxu0 0.0
        %2421 = vmatpush2.xpose.msra.mxu0 0.0
        %2422 = vmatprep.subr.mxu0 0.0
        %2423 = vmatpush2.xpose.msra.mxu0 0.0
        %2424 = vmatprep.subr.mxu0 0.0
        %2425 = vmatpush2.xpose.msra.mxu0 0.0
        %2426 = vmatprep.subr.mxu0 0.0
        %2427 = vmatpush2.xpose.msra.mxu0 0.0
        %2428 = vmatprep.subr.mxu0 0.0
        %2429 = vmatpush2.xpose.msra.mxu0 0.0
        %2430 = vmatprep.subr.mxu0 0.0
        %2431 = vmatpush2.xpose.msra.mxu0 0.0
        %2432 = vmatprep.subr.mxu0 0.0
        %2433 = vmatpush2.xpose.msra.mxu0 0.0
        %2434 = vmatprep.subr.mxu0 0.0
        %2435 = vmatpush2.xpose.msra.mxu0 0.0
        %2436 = vmatprep.subr.mxu0 0.0
        %2437 = vmatpush2.xpose.msra.mxu0 0.0
        %2438 = vmatprep.mubr.f32.mxu0 0.0
        %2439 = vmatmul.mubr.f32.gmra.mxu0 %v2368
        %v2440 = vpop.f32.mrf.mxu0
        %v2441 = vadd.f32 %v2113, %v2440
        %v2442 = vpop.f32.mrf.mxu0
        %2443 = vdwg.mxu0
        %v2444 = vsel %vm1817, %v2213, -inf
        %2445 = vmax.xlane.f32.xlu0 %v2444
        %v2446 = vpop.xlane.xlu0 %2445
        %v2447 = vsel %vm1817, %v2289, -inf
        %2448 = vmax.xlane.f32.xlu0 %v2447
        %v2449 = vpop.xlane.xlu0 %2448
        %v2450 = vsel %vm1817, %v2365, -inf
        %2451 = vmax.xlane.f32.xlu0 %v2450
        %v2452 = vpop.xlane.xlu0 %2451
        %v2453 = vsel %vm1817, %v2441, -inf
        %2454 = vmax.xlane.f32.xlu0 %v2453
        %v2455 = vpop.xlane.xlu0 %2454
        %v2456 = vsub.f32 %v2213, %v2446
        %v2457 = vsub.f32 %v2289, %v2449
        %v2458 = vsub.f32 %v2365, %v2452
        %v2459 = vsub.f32 %v2441, %v2455
        %v2460 = vmul.f32 %v2456, 1.442695
        %v2461 = vpow.pop %v2460
        %v2462 = vmul.f32 %v2457, 1.442695
        %v2463 = vpow.pop %v2462
        %v2464 = vmul.f32 %v2458, 1.442695
        %v2465 = vpow.pop %v2464
        %v2466 = vmul.f32 %v2459, 1.442695
        %v2467 = vpow.pop %v2466
        %v2468 = vsel %vm1817, %v2461, 0.0
        %2469 = vadd.xlane.f32.xlu0 %v2468
        %v2470 = vpop.xlane.xlu0 %2469
        %v2471 = vsel %vm1817, %v2463, 0.0
        %2472 = vadd.xlane.f32.xlu0 %v2471
        %v2473 = vpop.xlane.xlu0 %2472
        %v2474 = vsel %vm1817, %v2465, 0.0
        %2475 = vadd.xlane.f32.xlu0 %v2474
        %v2476 = vpop.xlane.xlu0 %2475
        %v2477 = vsel %vm1817, %v2467, 0.0
        %2478 = vadd.xlane.f32.xlu0 %v2477
        %v2479 = vpop.xlane.xlu0 %2478
        %v2480 = vrcp.pop %v2470
        %v2481 = vrcp.pop %v2473
        %v2482 = vrcp.pop %v2476
        %v2483 = vrcp.pop %v2479
        %v2484 = vmul.f32 %v2461, %v2480
        %v2485 = vmul.f32 %v2463, %v2481
        %v2486 = vmul.f32 %v2465, %v2482
        %v2487 = vmul.f32 %v2467, %v2483
        %2488 = vrot.lane.b32.xlu0 %v2105, 96
        %v2489 = vpop.permute.xlu0 %2488
        %2490 = vrot.lane.b32.xlu0 %v2110, 96
        %v2491 = vpop.permute.xlu0 %2490
        %v2495 = vsel %vm1817, %v2484, 0
        %2497 = vmatprep.subr.mxu0 0.0
        %2498 = vmatpush1.msra.mxu0 0.0
        %2499 = vmatprep.subr.mxu0 0.0
        %2500 = vmatpush1.msra.mxu0 0.0
        %2501 = vmatprep.subr.mxu0 0.0
        %2502 = vmatpush1.msra.mxu0 0.0
        %2503 = vmatprep.subr.mxu0 0.0
        %2504 = vmatpush1.msra.mxu0 0.0
        %2505 = vmatprep.subr.mxu0 0.0
        %2506 = vmatpush1.msra.mxu0 0.0
        %2507 = vmatprep.subr.mxu0 0.0
        %2508 = vmatpush1.msra.mxu0 0.0
        %2509 = vmatprep.subr.mxu0 0.0
        %2510 = vmatpush1.msra.mxu0 0.0
        %2511 = vmatprep.subr.mxu0 0.0
        %2512 = vmatpush1.msra.mxu0 0.0
        %2513 = vmatprep.subr.mxu0 0.0
        %2514 = vmatpush1.msra.mxu0 0.0
        %2515 = vmatprep.subr.mxu0 0.0
        %2516 = vmatpush1.msra.mxu0 0.0
        %2517 = vmatprep.subr.mxu0 0.0
        %2518 = vmatpush1.msra.mxu0 0.0
        %2519 = vmatprep.subr.mxu0 0.0
        %2520 = vmatpush1.msra.mxu0 0.0
        %2521 = vmatprep.subr.mxu0 0.0
        %2522 = vmatpush1.msra.mxu0 0.0
        %2523 = vmatprep.subr.mxu0 0.0
        %2524 = vmatpush1.msra.mxu0 0.0
        %2525 = vmatprep.subr.mxu0 0.0
        %2526 = vmatpush1.msra.mxu0 %v2491
        %2527 = vmatprep.subr.mxu0 0.0
        %2528 = vmatpush1.msra.mxu0 %v2489
        %2529 = vmatprep.subr.mxu0 0.0
        %2530 = vmatpush2.msra.mxu0 0.0
        %2531 = vmatprep.subr.mxu0 0.0
        %2532 = vmatpush2.msra.mxu0 0.0
        %2533 = vmatprep.subr.mxu0 0.0
        %2534 = vmatpush2.msra.mxu0 0.0
        %2535 = vmatprep.subr.mxu0 0.0
        %2536 = vmatpush2.msra.mxu0 0.0
        %2537 = vmatprep.subr.mxu0 0.0
        %2538 = vmatpush2.msra.mxu0 0.0
        %2539 = vmatprep.subr.mxu0 0.0
        %2540 = vmatpush2.msra.mxu0 0.0
        %2541 = vmatprep.subr.mxu0 0.0
        %2542 = vmatpush2.msra.mxu0 0.0
        %2543 = vmatprep.subr.mxu0 0.0
        %2544 = vmatpush2.msra.mxu0 0.0
        %2545 = vmatprep.subr.mxu0 0.0
        %2546 = vmatpush2.msra.mxu0 0.0
        %2547 = vmatprep.subr.mxu0 0.0
        %2548 = vmatpush2.msra.mxu0 0.0
        %2549 = vmatprep.subr.mxu0 0.0
        %2550 = vmatpush2.msra.mxu0 0.0
        %2551 = vmatprep.subr.mxu0 0.0
        %2552 = vmatpush2.msra.mxu0 0.0
        %2553 = vmatprep.subr.mxu0 0.0
        %2554 = vmatpush2.msra.mxu0 0.0
        %2555 = vmatprep.subr.mxu0 0.0
        %2556 = vmatpush2.msra.mxu0 0.0
        %2557 = vmatprep.subr.mxu0 0.0
        %2558 = vmatpush2.msra.mxu0 0.0
        %2559 = vmatprep.subr.mxu0 0.0
        %2560 = vmatpush2.msra.mxu0 0.0
        %2561 = vmatprep.mubr.f32.mxu0 0.0
        %2562 = vmatmul.mubr.f32.gmra.mxu0 %v2495
        %v2563 = vpop.f32.mrf.mxu0
        %v2564 = vadd.f32 0.0, %v2563
        %v2565 = vpop.f32.mrf.mxu0
        %2566 = vdwg.mxu0
        %2567 = vrot.lane.b32.xlu0 %v2129, 96
        %v2568 = vpop.permute.xlu0 %2567
        %2569 = vrot.lane.b32.xlu0 %v2131, 96
        %v2570 = vpop.permute.xlu0 %2569
        %v2574 = vsel %vm1817, %v2485, 0
        %2576 = vmatprep.subr.mxu0 0.0
        %2577 = vmatpush1.msra.mxu0 0.0
        %2578 = vmatprep.subr.mxu0 0.0
        %2579 = vmatpush1.msra.mxu0 0.0
        %2580 = vmatprep.subr.mxu0 0.0
        %2581 = vmatpush1.msra.mxu0 0.0
        %2582 = vmatprep.subr.mxu0 0.0
        %2583 = vmatpush1.msra.mxu0 0.0
        %2584 = vmatprep.subr.mxu0 0.0
        %2585 = vmatpush1.msra.mxu0 0.0
        %2586 = vmatprep.subr.mxu0 0.0
        %2587 = vmatpush1.msra.mxu0 0.0
        %2588 = vmatprep.subr.mxu0 0.0
        %2589 = vmatpush1.msra.mxu0 0.0
        %2590 = vmatprep.subr.mxu0 0.0
        %2591 = vmatpush1.msra.mxu0 0.0
        %2592 = vmatprep.subr.mxu0 0.0
        %2593 = vmatpush1.msra.mxu0 0.0
        %2594 = vmatprep.subr.mxu0 0.0
        %2595 = vmatpush1.msra.mxu0 0.0
        %2596 = vmatprep.subr.mxu0 0.0
        %2597 = vmatpush1.msra.mxu0 0.0
        %2598 = vmatprep.subr.mxu0 0.0
        %2599 = vmatpush1.msra.mxu0 0.0
        %2600 = vmatprep.subr.mxu0 0.0
        %2601 = vmatpush1.msra.mxu0 0.0
        %2602 = vmatprep.subr.mxu0 0.0
        %2603 = vmatpush1.msra.mxu0 0.0
        %2604 = vmatprep.subr.mxu0 0.0
        %2605 = vmatpush1.msra.mxu0 %v2570
        %2606 = vmatprep.subr.mxu0 0.0
        %2607 = vmatpush1.msra.mxu0 %v2568
        %2608 = vmatprep.subr.mxu0 0.0
        %2609 = vmatpush2.msra.mxu0 0.0
        %2610 = vmatprep.subr.mxu0 0.0
        %2611 = vmatpush2.msra.mxu0 0.0
        %2612 = vmatprep.subr.mxu0 0.0
        %2613 = vmatpush2.msra.mxu0 0.0
        %2614 = vmatprep.subr.mxu0 0.0
        %2615 = vmatpush2.msra.mxu0 0.0
        %2616 = vmatprep.subr.mxu0 0.0
        %2617 = vmatpush2.msra.mxu0 0.0
        %2618 = vmatprep.subr.mxu0 0.0
        %2619 = vmatpush2.msra.mxu0 0.0
        %2620 = vmatprep.subr.mxu0 0.0
        %2621 = vmatpush2.msra.mxu0 0.0
        %2622 = vmatprep.subr.mxu0 0.0
        %2623 = vmatpush2.msra.mxu0 0.0
        %2624 = vmatprep.subr.mxu0 0.0
        %2625 = vmatpush2.msra.mxu0 0.0
        %2626 = vmatprep.subr.mxu0 0.0
        %2627 = vmatpush2.msra.mxu0 0.0
        %2628 = vmatprep.subr.mxu0 0.0
        %2629 = vmatpush2.msra.mxu0 0.0
        %2630 = vmatprep.subr.mxu0 0.0
        %2631 = vmatpush2.msra.mxu0 0.0
        %2632 = vmatprep.subr.mxu0 0.0
        %2633 = vmatpush2.msra.mxu0 0.0
        %2634 = vmatprep.subr.mxu0 0.0
        %2635 = vmatpush2.msra.mxu0 0.0
        %2636 = vmatprep.subr.mxu0 0.0
        %2637 = vmatpush2.msra.mxu0 0.0
        %2638 = vmatprep.subr.mxu0 0.0
        %2639 = vmatpush2.msra.mxu0 0.0
        %2640 = vmatprep.mubr.f32.mxu0 0.0
        %2641 = vmatmul.mubr.f32.gmra.mxu0 %v2574
        %v2642 = vpop.f32.mrf.mxu0
        %v2643 = vadd.f32 0.0, %v2642
        %v2644 = vpop.f32.mrf.mxu0
        %2645 = vdwg.mxu0
        %2646 = vrot.lane.b32.xlu0 %v2133, 96
        %v2647 = vpop.permute.xlu0 %2646
        %2648 = vrot.lane.b32.xlu0 %v2135, 96
        %v2649 = vpop.permute.xlu0 %2648
        %v2653 = vsel %vm1817, %v2486, 0
        %2655 = vmatprep.subr.mxu0 0.0
        %2656 = vmatpush1.msra.mxu0 0.0
        %2657 = vmatprep.subr.mxu0 0.0
        %2658 = vmatpush1.msra.mxu0 0.0
        %2659 = vmatprep.subr.mxu0 0.0
        %2660 = vmatpush1.msra.mxu0 0.0
        %2661 = vmatprep.subr.mxu0 0.0
        %2662 = vmatpush1.msra.mxu0 0.0
        %2663 = vmatprep.subr.mxu0 0.0
        %2664 = vmatpush1.msra.mxu0 0.0
        %2665 = vmatprep.subr.mxu0 0.0
        %2666 = vmatpush1.msra.mxu0 0.0
        %2667 = vmatprep.subr.mxu0 0.0
        %2668 = vmatpush1.msra.mxu0 0.0
        %2669 = vmatprep.subr.mxu0 0.0
        %2670 = vmatpush1.msra.mxu0 0.0
        %2671 = vmatprep.subr.mxu0 0.0
        %2672 = vmatpush1.msra.mxu0 0.0
        %2673 = vmatprep.subr.mxu0 0.0
        %2674 = vmatpush1.msra.mxu0 0.0
        %2675 = vmatprep.subr.mxu0 0.0
        %2676 = vmatpush1.msra.mxu0 0.0
        %2677 = vmatprep.subr.mxu0 0.0
        %2678 = vmatpush1.msra.mxu0 0.0
        %2679 = vmatprep.subr.mxu0 0.0
        %2680 = vmatpush1.msra.mxu0 0.0
        %2681 = vmatprep.subr.mxu0 0.0
        %2682 = vmatpush1.msra.mxu0 0.0
        %2683 = vmatprep.subr.mxu0 0.0
        %2684 = vmatpush1.msra.mxu0 %v2649
        %2685 = vmatprep.subr.mxu0 0.0
        %2686 = vmatpush1.msra.mxu0 %v2647
        %2687 = vmatprep.subr.mxu0 0.0
        %2688 = vmatpush2.msra.mxu0 0.0
        %2689 = vmatprep.subr.mxu0 0.0
        %2690 = vmatpush2.msra.mxu0 0.0
        %2691 = vmatprep.subr.mxu0 0.0
        %2692 = vmatpush2.msra.mxu0 0.0
        %2693 = vmatprep.subr.mxu0 0.0
        %2694 = vmatpush2.msra.mxu0 0.0
        %2695 = vmatprep.subr.mxu0 0.0
        %2696 = vmatpush2.msra.mxu0 0.0
        %2697 = vmatprep.subr.mxu0 0.0
        %2698 = vmatpush2.msra.mxu0 0.0
        %2699 = vmatprep.subr.mxu0 0.0
        %2700 = vmatpush2.msra.mxu0 0.0
        %2701 = vmatprep.subr.mxu0 0.0
        %2702 = vmatpush2.msra.mxu0 0.0
        %2703 = vmatprep.subr.mxu0 0.0
        %2704 = vmatpush2.msra.mxu0 0.0
        %2705 = vmatprep.subr.mxu0 0.0
        %2706 = vmatpush2.msra.mxu0 0.0
        %2707 = vmatprep.subr.mxu0 0.0
        %2708 = vmatpush2.msra.mxu0 0.0
        %2709 = vmatprep.subr.mxu0 0.0
        %2710 = vmatpush2.msra.mxu0 0.0
        %2711 = vmatprep.subr.mxu0 0.0
        %2712 = vmatpush2.msra.mxu0 0.0
        %2713 = vmatprep.subr.mxu0 0.0
        %2714 = vmatpush2.msra.mxu0 0.0
        %2715 = vmatprep.subr.mxu0 0.0
        %2716 = vmatpush2.msra.mxu0 0.0
        %2717 = vmatprep.subr.mxu0 0.0
        %2718 = vmatpush2.msra.mxu0 0.0
        %2719 = vmatprep.mubr.f32.mxu0 0.0
        %2720 = vmatmul.mubr.f32.gmra.mxu0 %v2653
        %v2721 = vpop.f32.mrf.mxu0
        %v2722 = vadd.f32 0.0, %v2721
        %v2723 = vpop.f32.mrf.mxu0
        %2724 = vdwg.mxu0
        %2725 = vrot.lane.b32.xlu0 %v2137, 96
        %v2726 = vpop.permute.xlu0 %2725
        %2727 = vrot.lane.b32.xlu0 %v2139, 96
        %v2728 = vpop.permute.xlu0 %2727
        %v2732 = vsel %vm1817, %v2487, 0
        %2734 = vmatprep.subr.mxu0 0.0
        %2735 = vmatpush1.msra.mxu0 0.0
        %2736 = vmatprep.subr.mxu0 0.0
        %2737 = vmatpush1.msra.mxu0 0.0
        %2738 = vmatprep.subr.mxu0 0.0
        %2739 = vmatpush1.msra.mxu0 0.0
        %2740 = vmatprep.subr.mxu0 0.0
        %2741 = vmatpush1.msra.mxu0 0.0
        %2742 = vmatprep.subr.mxu0 0.0
        %2743 = vmatpush1.msra.mxu0 0.0
        %2744 = vmatprep.subr.mxu0 0.0
        %2745 = vmatpush1.msra.mxu0 0.0
        %2746 = vmatprep.subr.mxu0 0.0
        %2747 = vmatpush1.msra.mxu0 0.0
        %2748 = vmatprep.subr.mxu0 0.0
        %2749 = vmatpush1.msra.mxu0 0.0
        %2750 = vmatprep.subr.mxu0 0.0
        %2751 = vmatpush1.msra.mxu0 0.0
        %2752 = vmatprep.subr.mxu0 0.0
        %2753 = vmatpush1.msra.mxu0 0.0
        %2754 = vmatprep.subr.mxu0 0.0
        %2755 = vmatpush1.msra.mxu0 0.0
        %2756 = vmatprep.subr.mxu0 0.0
        %2757 = vmatpush1.msra.mxu0 0.0
        %2758 = vmatprep.subr.mxu0 0.0
        %2759 = vmatpush1.msra.mxu0 0.0
        %2760 = vmatprep.subr.mxu0 0.0
        %2761 = vmatpush1.msra.mxu0 0.0
        %2762 = vmatprep.subr.mxu0 0.0
        %2763 = vmatpush1.msra.mxu0 %v2728
        %2764 = vmatprep.subr.mxu0 0.0
        %2765 = vmatpush1.msra.mxu0 %v2726
        %2766 = vmatprep.subr.mxu0 0.0
        %2767 = vmatpush2.msra.mxu0 0.0
        %2768 = vmatprep.subr.mxu0 0.0
        %2769 = vmatpush2.msra.mxu0 0.0
        %2770 = vmatprep.subr.mxu0 0.0
        %2771 = vmatpush2.msra.mxu0 0.0
        %2772 = vmatprep.subr.mxu0 0.0
        %2773 = vmatpush2.msra.mxu0 0.0
        %2774 = vmatprep.subr.mxu0 0.0
        %2775 = vmatpush2.msra.mxu0 0.0
        %2776 = vmatprep.subr.mxu0 0.0
        %2777 = vmatpush2.msra.mxu0 0.0
        %2778 = vmatprep.subr.mxu0 0.0
        %2779 = vmatpush2.msra.mxu0 0.0
        %2780 = vmatprep.subr.mxu0 0.0
        %2781 = vmatpush2.msra.mxu0 0.0
        %2782 = vmatprep.subr.mxu0 0.0
        %2783 = vmatpush2.msra.mxu0 0.0
        %2784 = vmatprep.subr.mxu0 0.0
        %2785 = vmatpush2.msra.mxu0 0.0
        %2786 = vmatprep.subr.mxu0 0.0
        %2787 = vmatpush2.msra.mxu0 0.0
        %2788 = vmatprep.subr.mxu0 0.0
        %2789 = vmatpush2.msra.mxu0 0.0
        %2790 = vmatprep.subr.mxu0 0.0
        %2791 = vmatpush2.msra.mxu0 0.0
        %2792 = vmatprep.subr.mxu0 0.0
        %2793 = vmatpush2.msra.mxu0 0.0
        %2794 = vmatprep.subr.mxu0 0.0
        %2795 = vmatpush2.msra.mxu0 0.0
        %2796 = vmatprep.subr.mxu0 0.0
        %2797 = vmatpush2.msra.mxu0 0.0
        %2798 = vmatprep.mubr.f32.mxu0 0.0
        %2799 = vmatmul.mubr.f32.gmra.mxu0 %v2732
        %v2800 = vpop.f32.mrf.mxu0
        %v2801 = vadd.f32 0.0, %v2800
        %v2802 = vpop.f32.mrf.mxu0
        %2803 = vdwg.mxu0
        %2805 = vrot.lane.b32.xlu0 %v2643, 8
        %v2806 = vpop.permute.xlu0 %2805
        %2809 = vrot.lane.b32.xlu0 %v2722, 16
        %v2810 = vpop.permute.xlu0 %2809
        %2813 = vrot.lane.b32.xlu0 %v2801, 24
        %v2814 = vpop.permute.xlu0 %2813
        %v2816 = vsel %vm1153, %v2564, %v2806
        %v2817 = vsel %vm1817, %v2816, %v2810
        %v2818 = vsel %vm1819, %v2817, %v2814
        %v2820 = vlaneseq
        %v2821 = vshrl.u32 %v2820, 7
        %v2822 = vsub.s32 0, %v2821
        %v2823 = vrot.slane %v2118, %v2822
        %v2826 = vsel %vm1018, %v2818, 0
        %2828 = vmatprep.subr.mxu0 0.0
        %2829 = vmatpush1.msra.mxu0 0.0
        %2830 = vmatprep.subr.mxu0 0.0
        %2831 = vmatpush1.msra.mxu0 0.0
        %2832 = vmatprep.subr.mxu0 0.0
        %2833 = vmatpush1.msra.mxu0 0.0
        %2834 = vmatprep.subr.mxu0 0.0
        %2835 = vmatpush1.msra.mxu0 0.0
        %2836 = vmatprep.subr.mxu0 0.0
        %2837 = vmatpush1.msra.mxu0 0.0
        %2838 = vmatprep.subr.mxu0 0.0
        %2839 = vmatpush1.msra.mxu0 0.0
        %2840 = vmatprep.subr.mxu0 0.0
        %2841 = vmatpush1.msra.mxu0 0.0
        %2842 = vmatprep.subr.mxu0 0.0
        %2843 = vmatpush1.msra.mxu0 0.0
        %2844 = vmatprep.subr.mxu0 0.0
        %2845 = vmatpush1.msra.mxu0 0.0
        %2846 = vmatprep.subr.mxu0 0.0
        %2847 = vmatpush1.msra.mxu0 0.0
        %2848 = vmatprep.subr.mxu0 0.0
        %2849 = vmatpush1.msra.mxu0 0.0
        %2850 = vmatprep.subr.mxu0 0.0
        %2851 = vmatpush1.msra.mxu0 0.0
        %2852 = vmatprep.subr.mxu0 0.0
        %2853 = vmatpush1.msra.mxu0 %v2117
        %2854 = vmatprep.subr.mxu0 0.0
        %2855 = vmatpush1.msra.mxu0 %v2116
        %2856 = vmatprep.subr.mxu0 0.0
        %2857 = vmatpush1.msra.mxu0 %v2115
        %2858 = vmatprep.subr.mxu0 0.0
        %2859 = vmatpush1.msra.mxu0 %v2114
        %2860 = vmatprep.subr.mxu0 0.0
        %2861 = vmatpush2.msra.mxu0 0.0
        %2862 = vmatprep.subr.mxu0 0.0
        %2863 = vmatpush2.msra.mxu0 0.0
        %2864 = vmatprep.subr.mxu0 0.0
        %2865 = vmatpush2.msra.mxu0 0.0
        %2866 = vmatprep.subr.mxu0 0.0
        %2867 = vmatpush2.msra.mxu0 0.0
        %2868 = vmatprep.subr.mxu0 0.0
        %2869 = vmatpush2.msra.mxu0 0.0
        %2870 = vmatprep.subr.mxu0 0.0
        %2871 = vmatpush2.msra.mxu0 0.0
        %2872 = vmatprep.subr.mxu0 0.0
        %2873 = vmatpush2.msra.mxu0 0.0
        %2874 = vmatprep.subr.mxu0 0.0
        %2875 = vmatpush2.msra.mxu0 0.0
        %2876 = vmatprep.subr.mxu0 0.0
        %2877 = vmatpush2.msra.mxu0 0.0
        %2878 = vmatprep.subr.mxu0 0.0
        %2879 = vmatpush2.msra.mxu0 0.0
        %2880 = vmatprep.subr.mxu0 0.0
        %2881 = vmatpush2.msra.mxu0 0.0
        %2882 = vmatprep.subr.mxu0 0.0
        %2883 = vmatpush2.msra.mxu0 0.0
        %2884 = vmatprep.subr.mxu0 0.0
        %2885 = vmatpush2.msra.mxu0 0.0
        %2886 = vmatprep.subr.mxu0 0.0
        %2887 = vmatpush2.msra.mxu0 0.0
        %2888 = vmatprep.subr.mxu0 0.0
        %2889 = vmatpush2.msra.mxu0 0.0
        %2890 = vmatprep.subr.mxu0 0.0
        %2891 = vmatpush2.msra.mxu0 0.0
        %2892 = vmatprep.mubr.f32.mxu0 0.0
        %2893 = vmatmul.mubr.f32.gmra.mxu0 %v2826
        %v2894 = vpop.f32.mrf.mxu0
        %v2895 = vadd.f32 %v2823, %v2894
        %v2896 = vpop.f32.mrf.mxu0
        %2897 = vdwg.mxu0
        %v2898 = vadd.f32 %v1900, %v2895
        %v2899 = vld [vmem:[#allocation26] sm:$0x1]
        %v2900 = vld [vmem:[%s19] sm:$0x1]
        %v2901 = vsel %vm1018, %v2898, 0.0
        %2902 = vadd.xlane.f32.xlu0 %v2901
        %v2903 = vpop.xlane.xlu0 %2902
        %v2904 = vmul.f32 %v2903, %v1022
        %v2905 = vsub.f32 %v2898, %v2904
        %v2906 = vmul.f32 %v2905, %v2905
        %v2907 = vsel %vm1018, %v2906, 0.0
        %2908 = vadd.xlane.f32.xlu0 %v2907
        %v2909 = vpop.xlane.xlu0 %2908
        %v2910 = vmul.f32 %v2909, %v1022
        %v2911 = vrsqrt.pop %v2910
        %v2912 = vmul.f32 %v2910, %v2911
        %vm2913 = vcmp.eq.f32.partialorder %v2910, inf
        %v2914 = vsel %vm2913, %v2910, %v2912
        %vm2915 = vcmp.eq.f32.partialorder %v2910, 0.0
        %v2916 = vand.u32 %v2910, 2147483648
        %v2917 = vsel %vm2915, %v2916, %v2914
        %v2918 = vadd.f32 %v2917, 1e-06
        %v2919 = vrcp.pop %v2918
        %v2921 = vlaneseq
        %v2922 = vshrl.u32 %v2921, 7
        %v2923 = vsub.s32 0, %v2922
        %v2924 = vrot.slane %v2899, %v2923
        %v2926 = vmul.f32 %v2924, %v2905
        %v2927 = vmul.f32 %v2926, %v2919
        %v2929 = vlaneseq
        %v2930 = vshrl.u32 %v2929, 7
        %v2931 = vsub.s32 0, %v2930
        %v2932 = vrot.slane %v2900, %v2931
        %v2934 = vadd.f32 %v2927, %v2932
        %v2935 = vld [vmem:[%s20] sm:$0xff]
        %v2936 = vld [vmem:[%s20 + $0x8] sm:$0xff]
        %v2937 = vld [vmem:[%s20 + $0x10] sm:$0xff]
        %v2938 = vld [vmem:[%s20 + $0x18] sm:$0xff]
        %v2939 = vld [vmem:[%s21] sm:$0x1]
        %v2941 = vlaneseq
        %v2942 = vshrl.u32 %v2941, 7
        %v2943 = vsub.s32 0, %v2942
        %v2944 = vrot.slane %v2939, %v2943
        %v2947 = vsel %vm1018, %v2934, 0
        %2949 = vmatprep.subr.mxu0 0.0
        %2950 = vmatpush1.msra.mxu0 0.0
        %2951 = vmatprep.subr.mxu0 0.0
        %2952 = vmatpush1.msra.mxu0 0.0
        %2953 = vmatprep.subr.mxu0 0.0
        %2954 = vmatpush1.msra.mxu0 0.0
        %2955 = vmatprep.subr.mxu0 0.0
        %2956 = vmatpush1.msra.mxu0 0.0
        %2957 = vmatprep.subr.mxu0 0.0
        %2958 = vmatpush1.msra.mxu0 0.0
        %2959 = vmatprep.subr.mxu0 0.0
        %2960 = vmatpush1.msra.mxu0 0.0
        %2961 = vmatprep.subr.mxu0 0.0
        %2962 = vmatpush1.msra.mxu0 0.0
        %2963 = vmatprep.subr.mxu0 0.0
        %2964 = vmatpush1.msra.mxu0 0.0
        %2965 = vmatprep.subr.mxu0 0.0
        %2966 = vmatpush1.msra.mxu0 0.0
        %2967 = vmatprep.subr.mxu0 0.0
        %2968 = vmatpush1.msra.mxu0 0.0
        %2969 = vmatprep.subr.mxu0 0.0
        %2970 = vmatpush1.msra.mxu0 0.0
        %2971 = vmatprep.subr.mxu0 0.0
        %2972 = vmatpush1.msra.mxu0 0.0
        %2973 = vmatprep.subr.mxu0 0.0
        %2974 = vmatpush1.msra.mxu0 %v2938
        %2975 = vmatprep.subr.mxu0 0.0
        %2976 = vmatpush1.msra.mxu0 %v2937
        %2977 = vmatprep.subr.mxu0 0.0
        %2978 = vmatpush1.msra.mxu0 %v2936
        %2979 = vmatprep.subr.mxu0 0.0
        %2980 = vmatpush1.msra.mxu0 %v2935
        %2981 = vmatprep.subr.mxu0 0.0
        %2982 = vmatpush2.msra.mxu0 0.0
        %2983 = vmatprep.subr.mxu0 0.0
        %2984 = vmatpush2.msra.mxu0 0.0
        %2985 = vmatprep.subr.mxu0 0.0
        %2986 = vmatpush2.msra.mxu0 0.0
        %2987 = vmatprep.subr.mxu0 0.0
        %2988 = vmatpush2.msra.mxu0 0.0
        %2989 = vmatprep.subr.mxu0 0.0
        %2990 = vmatpush2.msra.mxu0 0.0
        %2991 = vmatprep.subr.mxu0 0.0
        %2992 = vmatpush2.msra.mxu0 0.0
        %2993 = vmatprep.subr.mxu0 0.0
        %2994 = vmatpush2.msra.mxu0 0.0
        %2995 = vmatprep.subr.mxu0 0.0
        %2996 = vmatpush2.msra.mxu0 0.0
        %2997 = vmatprep.subr.mxu0 0.0
        %2998 = vmatpush2.msra.mxu0 0.0
        %2999 = vmatprep.subr.mxu0 0.0
        %3000 = vmatpush2.msra.mxu0 0.0
        %3001 = vmatprep.subr.mxu0 0.0
        %3002 = vmatpush2.msra.mxu0 0.0
        %3003 = vmatprep.subr.mxu0 0.0
        %3004 = vmatpush2.msra.mxu0 0.0
        %3005 = vmatprep.subr.mxu0 0.0
        %3006 = vmatpush2.msra.mxu0 0.0
        %3007 = vmatprep.subr.mxu0 0.0
        %3008 = vmatpush2.msra.mxu0 0.0
        %3009 = vmatprep.subr.mxu0 0.0
        %3010 = vmatpush2.msra.mxu0 0.0
        %3011 = vmatprep.subr.mxu0 0.0
        %3012 = vmatpush2.msra.mxu0 0.0
        %3013 = vmatprep.mubr.f32.mxu0 0.0
        %3014 = vmatmul.mubr.f32.gmra.mxu0 %v2947
        %v3015 = vpop.f32.mrf.mxu0
        %v3016 = vadd.f32 %v2944, %v3015
        %v3017 = vpop.f32.mrf.mxu0
        %3018 = vdwg.mxu0
        %v3019 = vmax.f32 %v3016, 0.0
        %v3020 = vld [vmem:[%s22] sm:$0xff]
        %v3021 = vld [vmem:[%s22 + $0x8] sm:$0xff]
        %v3022 = vld [vmem:[%s22 + $0x10] sm:$0xff]
        %v3023 = vld [vmem:[%s22 + $0x18] sm:$0xff]
        %v3024 = vld [vmem:[%s22 + $0x20] sm:$0xff]
        %v3025 = vld [vmem:[%s22 + $0x28] sm:$0xff]
        %v3026 = vld [vmem:[%s22 + $0x30] sm:$0xff]
        %v3027 = vld [vmem:[%s22 + $0x38] sm:$0xff]
        %v3028 = vld [vmem:[%s23] sm:$0x1]
        %v3030 = vlaneseq
        %v3031 = vshrl.u32 %v3030, 7
        %v3032 = vsub.s32 0, %v3031
        %v3033 = vrot.slane %v3028, %v3032
        %vm3035 = vcmask 523264
        %v3037 = vsel %vm3035, %v3019, 0
        %3039 = vmatprep.subr.mxu0 0.0
        %3040 = vmatpush1.msra.mxu0 0.0
        %3041 = vmatprep.subr.mxu0 0.0
        %3042 = vmatpush1.msra.mxu0 0.0
        %3043 = vmatprep.subr.mxu0 0.0
        %3044 = vmatpush1.msra.mxu0 0.0
        %3045 = vmatprep.subr.mxu0 0.0
        %3046 = vmatpush1.msra.mxu0 0.0
        %3047 = vmatprep.subr.mxu0 0.0
        %3048 = vmatpush1.msra.mxu0 0.0
        %3049 = vmatprep.subr.mxu0 0.0
        %3050 = vmatpush1.msra.mxu0 0.0
        %3051 = vmatprep.subr.mxu0 0.0
        %3052 = vmatpush1.msra.mxu0 0.0
        %3053 = vmatprep.subr.mxu0 0.0
        %3054 = vmatpush1.msra.mxu0 0.0
        %3055 = vmatprep.subr.mxu0 0.0
        %3056 = vmatpush1.msra.mxu0 %v3027
        %3057 = vmatprep.subr.mxu0 0.0
        %3058 = vmatpush1.msra.mxu0 %v3026
        %3059 = vmatprep.subr.mxu0 0.0
        %3060 = vmatpush1.msra.mxu0 %v3025
        %3061 = vmatprep.subr.mxu0 0.0
        %3062 = vmatpush1.msra.mxu0 %v3024
        %3063 = vmatprep.subr.mxu0 0.0
        %3064 = vmatpush1.msra.mxu0 %v3023
        %3065 = vmatprep.subr.mxu0 0.0
        %3066 = vmatpush1.msra.mxu0 %v3022
        %3067 = vmatprep.subr.mxu0 0.0
        %3068 = vmatpush1.msra.mxu0 %v3021
        %3069 = vmatprep.subr.mxu0 0.0
        %3070 = vmatpush1.msra.mxu0 %v3020
        %3071 = vmatprep.subr.mxu0 0.0
        %3072 = vmatpush2.msra.mxu0 0.0
        %3073 = vmatprep.subr.mxu0 0.0
        %3074 = vmatpush2.msra.mxu0 0.0
        %3075 = vmatprep.subr.mxu0 0.0
        %3076 = vmatpush2.msra.mxu0 0.0
        %3077 = vmatprep.subr.mxu0 0.0
        %3078 = vmatpush2.msra.mxu0 0.0
        %3079 = vmatprep.subr.mxu0 0.0
        %3080 = vmatpush2.msra.mxu0 0.0
        %3081 = vmatprep.subr.mxu0 0.0
        %3082 = vmatpush2.msra.mxu0 0.0
        %3083 = vmatprep.subr.mxu0 0.0
        %3084 = vmatpush2.msra.mxu0 0.0
        %3085 = vmatprep.subr.mxu0 0.0
        %3086 = vmatpush2.msra.mxu0 0.0
        %3087 = vmatprep.subr.mxu0 0.0
        %3088 = vmatpush2.msra.mxu0 0.0
        %3089 = vmatprep.subr.mxu0 0.0
        %3090 = vmatpush2.msra.mxu0 0.0
        %3091 = vmatprep.subr.mxu0 0.0
        %3092 = vmatpush2.msra.mxu0 0.0
        %3093 = vmatprep.subr.mxu0 0.0
        %3094 = vmatpush2.msra.mxu0 0.0
        %3095 = vmatprep.subr.mxu0 0.0
        %3096 = vmatpush2.msra.mxu0 0.0
        %3097 = vmatprep.subr.mxu0 0.0
        %3098 = vmatpush2.msra.mxu0 0.0
        %3099 = vmatprep.subr.mxu0 0.0
        %3100 = vmatpush2.msra.mxu0 0.0
        %3101 = vmatprep.subr.mxu0 0.0
        %3102 = vmatpush2.msra.mxu0 0.0
        %3103 = vmatprep.mubr.f32.mxu0 0.0
        %3104 = vmatmul.mubr.f32.gmra.mxu0 %v3037
        %v3105 = vpop.f32.mrf.mxu0
        %v3106 = vadd.f32 %v3033, %v3105
        %v3107 = vpop.f32.mrf.mxu0
        %3108 = vdwg.mxu0
        %v3109 = vadd.f32 %v2898, %v3106
        %3110 = vst.msk [vmem:[%s1007] sm:$0xff] %vm1018, %v3109
        %s3111 = sand.u32 %s583, 1
        %s3112 = scalar_lea.sflag [#allocation4], %s3111
        %s3113 = sand.u32 %s583, 1
        %s3114 = smul.addr %s3113, 8
        %s3115 = scalar_lea.vmem [#allocation28], %s3114
        // Predicated region
        $region181: #{tpu_custom_call.1} parent=115 // pred_check
          %p3116 = pneg %p593
        $region182: #{tpu_custom_call.1} parent=115 // pred_check_branch
          %3118 = sbr.rel (%p3116) target = $region184
        $region183: #{tpu_custom_call.1} parent=115 // pred_region
          %s3120 = ssub.s32 128, 128
          %3121 = vsyncadd %s3112, %s3120
          %s3122 = smul.addr %s51, 128
          %s3123 = scalar_lea.hbm %s24, %s3122
          %s3125 = sshll.u32 %s3115, 4
          %s3126 = int_to_ptr.vmem [resolvable:$true] %s3125
          %3128 = dma.vmem_to_hbm [thread:$0]  %s3126, 128, %s3123, %s3112
        $region184: #{tpu_custom_call.1} parent=115 // pred_fallthru
          _
      $region116: #{tpu_custom_call.1} parent=5 // pred_fallthru
        _
      %p3129 = scmp.le.s32.totalorder 2, %s46
      // Predicated region
      $region185: #{tpu_custom_call.1} parent=5 // pred_check
        %p3130 = pneg %p3129
      $region186: #{tpu_custom_call.1} parent=5 // pred_check_branch
        %3132 = sbr.rel (%p3130) target = $region188
      $region187: #{tpu_custom_call.1} parent=5 // pred_region
        %s3133 = ssub.s32 %s46, 2
        // Predicated region
        $region189: #{tpu_custom_call.1} parent=187 // pred_check
          %p3134 = pneg %p599
        $region190: #{tpu_custom_call.1} parent=187 // pred_check_branch
          %3136 = sbr.rel (%p3134) target = $region192
        $region191: #{tpu_custom_call.1} parent=187 // pred_region
          %s3137 = sand.u32 %s584, 1
          %s3138 = scalar_lea.sflag [#allocation4], %s3137
          %s3139 = sand.u32 %s584, 1
          %s3140 = smul.addr %s3139, 8
          %s3141 = scalar_lea.vmem [#allocation28], %s3140
          %3142 = dma.done %s3138, 128
        $region192: #{tpu_custom_call.1} parent=187 // pred_fallthru
          _
      $region188: #{tpu_custom_call.1} parent=5 // pred_fallthru
        _
    $region6: #{tpu_custom_call.1} parent=1 // loop_footer
      %s50 = sadd.s32 1, %s46
    $region7: #{tpu_custom_call.1} parent=1 // loop_footer_branch
      %45 = sbr.rel target = $region3
    $region8: #{tpu_custom_call.1} parent=1 // loop_exit
      _
    %3143 = vsyncpa [#allocation3], 1
    %s3144 = scalar_lea.sflag [#allocation3], 1
    %3145 = vsyncpa %s3144, 1
    %3146 = vsyncpa [#allocation6], 1
    %s3147 = scalar_lea.sflag [#allocation6], 1
    %3148 = vsyncpa %s3147, 1
    %3149 = vsyncpa [#allocation9], 1
    %3150 = vsyncpa [#allocation12], 1
    %3151 = vsyncpa [#allocation15], 1
    %3152 = vsyncpa [#allocation18], 1
    %3153 = vsyncpa [#allocation21], 1
    %3154 = vsyncpa [#allocation24], 1
    %3155 = vsyncpa [#allocation27], 1
    %3156 = vsyncpa [#allocation4], 1
    %s3157 = scalar_lea.sflag [#allocation4], 1
    %3158 = vsyncpa %s3157, 1

</llo_original>
